<compile_context>
chip_gen: v5e
topology: v5e:2x2
jax: 0.10.0
libtpu: 0.0.40
codegen_flags: <defaults>
</compile_context>

<pallas_src>
import functools
import math

import jax
import jax.numpy as jnp
from jax import lax
from jax.experimental import pallas as pl
from jax.experimental.pallas import tpu as pltpu

# ----------------------------- configuration --------------------------------
C = 64            # input_dim == output_dim
SCALE = 8
SW = C // SCALE   # scale_width = 8 (matches fp32 sublane tile)
K = 3             # kernel_size
DIL = 1           # dilation
H_SE = 16         # se_hidden_dim
T = 64            # sequence length
B = 16            # batch -> B*T = 1024 folded lanes -> two 512-lane grid steps

BLOCK_LANES = 512  # target lanes per grid step (multiple of 128 and of T)


# ------------------------------ Pallas kernel --------------------------------
def make_res2block_kernel(scale, sw, ksize, dil, t_len, nb_blk):
    width = nb_blk * t_len    # lanes per block (batch-major: [s0 t0..tT-1 | s1 ...])
    bf16 = jnp.bfloat16
    f32 = jnp.float32
    inv_t = 1.0 / float(t_len)

    def kernel(x_ref, w0_ref, wf_ref, w1s_ref, wse1_ref, wse2_ref,
               m_ref, mt_ref, cvecs_ref, svecs_ref, bse1_ref, o_ref):
        # packed per-channel vectors: [b0', be0, b1', be1, bse2]  (BN scales folded)
        cv = cvecs_ref[...]                              # (C, 5) f32
        b0, be0 = cv[:, 0:1], cv[:, 1:2]
        b1, be1 = cv[:, 2:3], cv[:, 3:4]
        bse2 = cv[:, 4:5]

        # lane bookkeeping for the folded batch axis (block is sample-aligned,
        # so lane % T is the true time index of each lane)
        lane = lax.broadcasted_iota(jnp.int32, (1, width), 1)
        pos = lane % t_len

        # conv1d_unit0 (1x1): w0' = g0*w0 pre-folded; Conv -> ReLU -> +beta
        xb = x_ref[...].astype(bf16)
        y = jnp.dot(w0_ref[...].astype(bf16), xb, preferred_element_type=f32) + b0
        y = jnp.maximum(y, 0.0) + be0                    # (C, width) f32

        # validity masks per nonzero tap offset ('same' zero padding AND kills
        # the batch-seam / roll wrap-around of the folded layout)
        shift_mask = {}
        for k in range(ksize):
            off = (k - ksize // 2) * dil
            if off != 0:
                shift_mask[k] = jnp.logical_and(pos + off >= 0, pos + off < t_len)

        # conv1d_unit1 partial product for the pass-through (last) split
        y_last = y[(scale - 1) * sw:scale * sw, :]
        z1 = jnp.dot(w1s_ref[scale - 1].astype(bf16), y_last.astype(bf16),
                     preferred_element_type=f32)         # (C, width) f32

        # hierarchical res2net chain (strictly sequential): one fused 3-tap MXU
        # pass per group; w1's per-group partial products interleaved so the
        # MXU has work during the roll/mask/epilogue phases.
        prev = None
        for i in range(scale - 1):
            grp = y[i * sw:(i + 1) * sw, :]              # sublane-aligned slice
            cur = grp if i == 0 else prev + grp
            taps = []
            for k in range(ksize):
                off = (k - ksize // 2) * dil
                if off == 0:
                    taps.append(cur)
                else:
                    sh = pltpu.roll(cur, (-off) % width, axis=1)   # XLU
                    taps.append(jnp.where(shift_mask[k], sh, 0.0))
            stacked = jnp.concatenate(taps, axis=0).astype(bf16)   # (K*SW, width)
            acc = jnp.dot(wf_ref[i].astype(bf16), stacked,
                          preferred_element_type=f32)    # (SW, width) f32
            sv = svecs_ref[i]                            # (SW, 2): [bs', bes]
            acc = jnp.maximum(acc + sv[:, 0:1], 0.0) + sv[:, 1:2]
            # fold conv1d_unit1's partial product for this group into the chain
            z1 = z1 + jnp.dot(w1s_ref[i].astype(bf16), acc.astype(bf16),
                              preferred_element_type=f32)
            prev = acc

        # conv1d_unit1 epilogue (w1' = g1*w1 pre-folded): +bias -> ReLU -> +beta
        z = jnp.maximum(z1 + b1, 0.0) + be1              # (C, width) f32

        # SE block, batched over the nb_blk samples in this lane block:
        # per-sample means via segment-mask matmul, both linears at once,
        # gates expanded back to (C, width) with the transposed mask.
        zb = z.astype(bf16)
        means = jnp.dot(zb, m_ref[...].astype(bf16),
                        preferred_element_type=f32) * inv_t           # (C, nb)
        h = jnp.dot(wse1_ref[...].astype(bf16), means.astype(bf16),
                    preferred_element_type=f32) + bse1_ref[...]       # (H, nb)
        h = jnp.maximum(h, 0.0)
        g = jax.nn.sigmoid(jnp.dot(wse2_ref[...].astype(bf16), h.astype(bf16),
                                   preferred_element_type=f32) + bse2)  # (C, nb)
        gate = jnp.dot(g.astype(bf16), mt_ref[...].astype(bf16),
                       preferred_element_type=f32)                      # (C, width)

        # residual
        o_ref[...] = x_ref[...] + z * gate

    return kernel


# ------------------------------ host wrapper ---------------------------------
def res2block_forward(x, kparams):
    """x: (B, C, T) float32.  kparams: packed kernel params (pack_kernel_params)."""
    b, c, t = x.shape
    width = b * t

    # Lane block must be sample-aligned (multiple of T) AND lane-aligned
    # (multiple of 128) so the roll/mask 'same' padding never needs a halo.
    base = t * 128 // math.gcd(t, 128)          # lcm(T, 128)
    assert width % base == 0, "B*T must be a multiple of lcm(T, 128)"
    bw = base
    while bw * 2 <= min(width, max(BLOCK_LANES, base)) and width % (bw * 2) == 0:
        bw *= 2
    nblk = width // bw
    nb_blk = bw // t

    # layout plumbing: (B, C, T) -> lane-dense (C, B*T), batch-major in lanes
    x_f = jnp.transpose(x, (1, 0, 2)).reshape(c, width)

    # per-block 0/1 segment masks for the SE mean / gate expansion (same for
    # every block because the sample layout repeats within each block)
    seg = jnp.arange(bw, dtype=jnp.int32) // t
    m = (seg[:, None] == jnp.arange(nb_blk, dtype=jnp.int32)[None, :]).astype(jnp.float32)
    mt = m.T

    kernel = make_res2block_kernel(SCALE, SW, K, DIL, t, nb_blk)

    def const_spec(a):
        nd = a.ndim
        # constant index map -> weights are not re-DMA'd across grid steps
        return pl.BlockSpec(a.shape, lambda i, _nd=nd: (0,) * _nd)

    ins = list(kparams[:5]) + [m, mt] + list(kparams[5:])
    in_specs = ([pl.BlockSpec((c, bw), lambda i: (0, i))]
                + [const_spec(a) for a in ins])
    out_spec = pl.BlockSpec((c, bw), lambda i: (0, i))

    # NOTE(perf): on v6e with large B*T, consider pipeline_mode=pl.Buffered(3)
    # on the x BlockSpec if the bigger input DMA becomes exposed.
    out_f = pl.pallas_call(
        kernel,
        grid=(nblk,),
        in_specs=in_specs,
        out_specs=out_spec,
        out_shape=jax.ShapeDtypeStruct((c, width), jnp.float32),
        compiler_params=pltpu.CompilerParams(
            dimension_semantics=("parallel",),
            vmem_limit_bytes=32 * 1024 * 1024,
        ),
    )(x_f, *ins)

    return jnp.transpose(out_f.reshape(c, b, t), (1, 0, 2))


# --------------------------- parameter construction --------------------------
def fold_bn(key, ch):
    """Eval-mode BatchNorm1d folded to per-channel (scale, bias), shape (ch, 1).
    gamma / var are drawn strictly positive so the BN scale commutes with ReLU."""
    k1, k2, k3, k4 = jax.random.split(key, 4)
    gamma = jax.random.uniform(k1, (ch, 1), jnp.float32, 0.9, 1.1)
    beta = 0.1 * jax.random.normal(k2, (ch, 1), jnp.float32)
    mean = 0.1 * jax.random.normal(k3, (ch, 1), jnp.float32)
    var = jax.random.uniform(k4, (ch, 1), jnp.float32, 0.9, 1.1)
    scale = gamma * jax.lax.rsqrt(var + 1e-5)
    bias = beta - mean * scale
    return scale, bias


def init_params(key):
    """'Natural' (PyTorch-like) parameters, used by the pure-JAX reference."""
    ks = jax.random.split(key, 12)
    w0 = jax.random.normal(ks[0], (C, C), jnp.float32) / jnp.sqrt(C)
    b0 = 0.1 * jax.random.normal(ks[1], (C, 1), jnp.float32)
    g0, be0 = fold_bn(ks[2], C)
    ws = jax.random.normal(ks[3], (SCALE - 1, K, SW, SW), jnp.float32) / jnp.sqrt(SW * K)
    bs = 0.1 * jax.random.normal(ks[4], (SCALE - 1, SW, 1), jnp.float32)
    gs_list, bes_list = [], []
    for i in range(SCALE - 1):
        g_i, be_i = fold_bn(jax.random.fold_in(ks[5], i), SW)
        gs_list.append(g_i)
        bes_list.append(be_i)
    gs = jnp.stack(gs_list)
    bes = jnp.stack(bes_list)
    w1 = jax.random.normal(ks[6], (C, C), jnp.float32) / jnp.sqrt(C)
    b1 = 0.1 * jax.random.normal(ks[7], (C, 1), jnp.float32)
    g1, be1 = fold_bn(ks[8], C)
    wse1 = jax.random.normal(ks[9], (H_SE, C), jnp.float32) / jnp.sqrt(C)
    bse1 = 0.1 * jax.random.normal(ks[10], (H_SE, 1), jnp.float32)
    wse2 = jax.random.normal(ks[11], (C, H_SE), jnp.float32) / jnp.sqrt(H_SE)
    bse2 = jnp.zeros((C, 1), jnp.float32)
    return (w0, b0, g0, be0, ws, bs, gs, bes, w1, b1, g1, be1, wse1, bse1, wse2, bse2)


def pack_kernel_params(p):
    """Kernel-side layout: BN scales folded into weights/biases, fused tap
    weights, w1 pre-split by group, packed per-channel vectors."""
    (w0, b0, g0, be0, ws, bs, gs, bes, w1, b1, g1, be1,
     wse1, bse1, wse2, bse2) = p
    # ReLU only commutes with strictly positive BN scales — guard the fold.
    assert float(jnp.min(g0)) > 0 and float(jnp.min(g1)) > 0 and float(jnp.min(gs)) > 0, \
        "BN-scale folding requires strictly positive scales"
    w0f = g0 * w0                                    # (C, C)
    b0f = g0 * b0
    # fuse the K taps along the contraction axis and fold gs (per output row)
    wfused = jnp.transpose(ws, (0, 2, 1, 3)).reshape(SCALE - 1, SW, K * SW)
    wfused = gs * wfused                             # (S-1, SW, K*SW)
    bsf = gs * bs
    w1f = g1 * w1                                    # (C, C)
    b1f = g1 * b1
    # pre-split w1 by input-channel group: w1s[i] == w1f[:, i*SW:(i+1)*SW]
    w1s = jnp.transpose(w1f.reshape(C, SCALE, SW), (1, 0, 2))   # (S, C, SW)
    cvecs = jnp.concatenate([b0f, be0, b1f, be1, bse2], axis=1)  # (C, 5)
    svecs = jnp.concatenate([bsf, bes], axis=2)                  # (S-1, SW, 2)
    return (w0f, wfused, w1s, wse1, wse2, cvecs, svecs, bse1)


# ------------------------------ pure-JAX reference ---------------------------
def ref_single(x, params):
    (w0, b0, g0, be0, ws, bs, gs, bes, w1, b1, g1, be1,
     wse1, bse1, wse2, bse2) = params
    t = x.shape[1]

    def cbr(v, w, b, g, be):
        y = jnp.maximum(w @ v + b, 0.0)
        return y * g + be

    y = cbr(x, w0, b0, g0, be0)
    pad = (K // 2) * DIL
    outs, prev = [], None
    for i in range(SCALE - 1):
        grp = y[i * SW:(i + 1) * SW]
        cur = grp if i == 0 else prev + grp
        xp = jnp.pad(cur, ((0, 0), (pad, pad)))
        acc = sum(ws[i, k] @ xp[:, k * DIL:k * DIL + t] for k in range(K))
        acc = jnp.maximum(acc + bs[i], 0.0) * gs[i] + bes[i]
        outs.append(acc)
        prev = acc
    outs.append(y[(SCALE - 1) * SW:])
    z = jnp.concatenate(outs, 0)
    z = cbr(z, w1, b1, g1, be1)
    s = z.mean(1, keepdims=True)
    h = jnp.maximum(wse1 @ s + bse1, 0.0)
    gate = jax.nn.sigmoid(wse2 @ h + bse2)
    return x + z * gate


# ----------------------------------- main ------------------------------------
if __name__ == "__main__":
    key = jax.random.PRNGKey(0)
    kx, kp = jax.random.split(key)
    x = jax.random.normal(kx, (B, C, T), jnp.float32)
    params = init_params(kp)
    kparams = pack_kernel_params(params)

    out = jax.block_until_ready(res2block_forward(x, kparams))

    ref = jax.vmap(functools.partial(ref_single, params=params))(x)
    assert out.shape == (B, C, T)
    max_err = float(jnp.max(jnp.abs(out - ref)))
    # bf16 MXU operands -> tolerance loosened vs. the all-fp32 version
    assert jnp.allclose(out, ref, atol=5e-2, rtol=5e-2), \
        f"mismatch vs. JAX reference (max abs err {max_err})"

    print("KERNEL_OK")
</pallas_src>

<mosaic_0001>
module attributes {stable_mosaic.version = 11 : i64} {
  func.func @kernel(%arg0: i32, %arg1: memref<64x512xf32, #tpu.memory_space<vmem>>, %arg2: memref<64x64xf32, #tpu.memory_space<vmem>>, %arg3: memref<7x8x24xf32, #tpu.memory_space<vmem>>, %arg4: memref<8x64x8xf32, #tpu.memory_space<vmem>>, %arg5: memref<16x64xf32, #tpu.memory_space<vmem>>, %arg6: memref<64x16xf32, #tpu.memory_space<vmem>>, %arg7: memref<512x8xf32, #tpu.memory_space<vmem>>, %arg8: memref<8x512xf32, #tpu.memory_space<vmem>>, %arg9: memref<64x5xf32, #tpu.memory_space<vmem>>, %arg10: memref<7x8x2xf32, #tpu.memory_space<vmem>>, %arg11: memref<16x1xf32, #tpu.memory_space<vmem>>, %arg12: memref<64x512xf32, #tpu.memory_space<vmem>>) attributes {dimension_semantics = [#tpu.dimension_semantics<parallel>], iteration_bounds = array<i64: 2>, scalar_prefetch = 0 : i64, scratch_operands = 0 : i64, tpu.core_type = #tpu.core_type<tc>, window_params = [{transform_indices = @transform_0, window_bounds = array<i64: 64, 512>}, {pipeline_mode = #tpu.pipeline_mode<synchronous>, transform_indices = @transform_1, window_bounds = array<i64: 64, 64>}, {pipeline_mode = #tpu.pipeline_mode<synchronous>, transform_indices = @transform_2, window_bounds = array<i64: 7, 8, 24>}, {pipeline_mode = #tpu.pipeline_mode<synchronous>, transform_indices = @transform_3, window_bounds = array<i64: 8, 64, 8>}, {pipeline_mode = #tpu.pipeline_mode<synchronous>, transform_indices = @transform_4, window_bounds = array<i64: 16, 64>}, {pipeline_mode = #tpu.pipeline_mode<synchronous>, transform_indices = @transform_5, window_bounds = array<i64: 64, 16>}, {pipeline_mode = #tpu.pipeline_mode<synchronous>, transform_indices = @transform_6, window_bounds = array<i64: 512, 8>}, {pipeline_mode = #tpu.pipeline_mode<synchronous>, transform_indices = @transform_7, window_bounds = array<i64: 8, 512>}, {pipeline_mode = #tpu.pipeline_mode<synchronous>, transform_indices = @transform_8, window_bounds = array<i64: 64, 5>}, {pipeline_mode = #tpu.pipeline_mode<synchronous>, transform_indices = @transform_9, window_bounds = array<i64: 7, 8, 2>}, {pipeline_mode = #tpu.pipeline_mode<synchronous>, transform_indices = @transform_10, window_bounds = array<i64: 16, 1>}, {transform_indices = @transform_11, window_bounds = array<i64: 64, 512>}]} {
    %c0 = arith.constant 0 : index
    %c0_0 = arith.constant 0 : index
    %0 = vector.load %arg9[%c0, %c0_0] : memref<64x5xf32, #tpu.memory_space<vmem>>, vector<64x5xf32>
    %1 = vector.extract_strided_slice %0 {offsets = [0, 0], sizes = [64, 1], strides = [1, 1]} : vector<64x5xf32> to vector<64x1xf32>
    %2 = vector.extract_strided_slice %0 {offsets = [0, 1], sizes = [64, 1], strides = [1, 1]} : vector<64x5xf32> to vector<64x1xf32>
    %3 = vector.extract_strided_slice %0 {offsets = [0, 2], sizes = [64, 1], strides = [1, 1]} : vector<64x5xf32> to vector<64x1xf32>
    %4 = vector.extract_strided_slice %0 {offsets = [0, 3], sizes = [64, 1], strides = [1, 1]} : vector<64x5xf32> to vector<64x1xf32>
    %5 = vector.extract_strided_slice %0 {offsets = [0, 4], sizes = [64, 1], strides = [1, 1]} : vector<64x5xf32> to vector<64x1xf32>
    %6 = tpu.iota {dimensions = array<i32: 1>} : vector<1x512xi32>
    %c64_i32 = arith.constant 64 : i32
    %c0_i32 = arith.constant 0 : i32
    %7 = arith.cmpi eq, %c64_i32, %c0_i32 : i32
    %c1_i32 = arith.constant 1 : i32
    %8 = arith.select %7, %c1_i32, %c64_i32 : i32
    %9 = vector.broadcast %8 : i32 to vector<1x512xi32>
    %10 = arith.remsi %6, %9 : vector<1x512xi32>
    %c0_i32_1 = arith.constant 0 : i32
    %11 = vector.broadcast %c0_i32_1 : i32 to vector<1x512xi32>
    %12 = arith.cmpi ne, %10, %11 : vector<1x512xi32>
    %c0_i32_2 = arith.constant 0 : i32
    %13 = vector.broadcast %c0_i32_2 : i32 to vector<1x512xi32>
    %14 = arith.cmpi slt, %10, %13 : vector<1x512xi32>
    %c0_i32_3 = arith.constant 0 : i32
    %15 = arith.cmpi slt, %8, %c0_i32_3 : i32
    %16 = vector.broadcast %15 : i1 to vector<1x512xi1>
    %17 = vector.broadcast %16 : vector<1x512xi1> to vector<1x512xi1>
    %18 = arith.xori %14, %17 : vector<1x512xi1>
    %19 = arith.andi %18, %12 : vector<1x512xi1>
    %20 = vector.broadcast %8 : i32 to vector<1x512xi32>
    %21 = arith.addi %10, %20 : vector<1x512xi32>
    %22 = arith.select %19, %21, %10 : vector<1x512xi1>, vector<1x512xi32>
    %c0_4 = arith.constant 0 : index
    %c0_5 = arith.constant 0 : index
    %23 = vector.load %arg1[%c0_4, %c0_5] : memref<64x512xf32, #tpu.memory_space<vmem>>, vector<64x512xf32>
    %24 = arith.truncf %23 : vector<64x512xf32> to vector<64x512xbf16>
    %c0_6 = arith.constant 0 : index
    %c0_7 = arith.constant 0 : index
    %25 = vector.load %arg2[%c0_6, %c0_7] : memref<64x64xf32, #tpu.memory_space<vmem>>, vector<64x64xf32>
    %26 = arith.truncf %25 : vector<64x64xf32> to vector<64x64xbf16>
    %cst = arith.constant dense<0.000000e+00> : vector<64x512xf32>
    %27 = tpu.matmul %26, %24, %cst {dimension_numbers = #tpu.dot_dimension_numbers<[1], [0], [0], [1], [0, 0, 1, 1], [], []>} : vector<64x64xbf16>, vector<64x512xbf16>, vector<64x512xf32> -> vector<64x512xf32>
    %28 = vector.broadcast %1 : vector<64x1xf32> to vector<64x512xf32>
    %29 = arith.addf %27, %28 : vector<64x512xf32>
    %cst_8 = arith.constant 0.000000e+00 : f32
    %30 = vector.broadcast %cst_8 : f32 to vector<64x512xf32>
    %31 = arith.maximumf %29, %30 : vector<64x512xf32>
    %32 = vector.broadcast %2 : vector<64x1xf32> to vector<64x512xf32>
    %33 = arith.addf %31, %32 : vector<64x512xf32>
    %c-1_i32 = arith.constant -1 : i32
    %34 = vector.broadcast %c-1_i32 : i32 to vector<1x512xi32>
    %35 = arith.addi %22, %34 : vector<1x512xi32>
    %c0_i32_9 = arith.constant 0 : i32
    %36 = vector.broadcast %c0_i32_9 : i32 to vector<1x512xi32>
    %37 = arith.cmpi sge, %35, %36 : vector<1x512xi32>
    %c-1_i32_10 = arith.constant -1 : i32
    %38 = vector.broadcast %c-1_i32_10 : i32 to vector<1x512xi32>
    %39 = arith.addi %22, %38 : vector<1x512xi32>
    %c64_i32_11 = arith.constant 64 : i32
    %40 = vector.broadcast %c64_i32_11 : i32 to vector<1x512xi32>
    %41 = arith.cmpi slt, %39, %40 : vector<1x512xi32>
    %42 = arith.andi %37, %41 : vector<1x512xi1>
    %c1_i32_12 = arith.constant 1 : i32
    %43 = vector.broadcast %c1_i32_12 : i32 to vector<1x512xi32>
    %44 = arith.addi %22, %43 : vector<1x512xi32>
    %c0_i32_13 = arith.constant 0 : i32
    %45 = vector.broadcast %c0_i32_13 : i32 to vector<1x512xi32>
    %46 = arith.cmpi sge, %44, %45 : vector<1x512xi32>
    %c1_i32_14 = arith.constant 1 : i32
    %47 = vector.broadcast %c1_i32_14 : i32 to vector<1x512xi32>
    %48 = arith.addi %22, %47 : vector<1x512xi32>
    %c64_i32_15 = arith.constant 64 : i32
    %49 = vector.broadcast %c64_i32_15 : i32 to vector<1x512xi32>
    %50 = arith.cmpi slt, %48, %49 : vector<1x512xi32>
    %51 = arith.andi %46, %50 : vector<1x512xi1>
    %52 = vector.extract_strided_slice %33 {offsets = [56, 0], sizes = [8, 512], strides = [1, 1]} : vector<64x512xf32> to vector<8x512xf32>
    %c7 = arith.constant 7 : index
    %c0_16 = arith.constant 0 : index
    %c0_17 = arith.constant 0 : index
    %53 = vector.load %arg4[%c7, %c0_16, %c0_17] : memref<8x64x8xf32, #tpu.memory_space<vmem>>, vector<1x64x8xf32>
    %54 = vector.shape_cast %53 : vector<1x64x8xf32> to vector<64x8xf32>
    %55 = arith.truncf %54 : vector<64x8xf32> to vector<64x8xbf16>
    %56 = arith.truncf %52 : vector<8x512xf32> to vector<8x512xbf16>
    %cst_18 = arith.constant dense<0.000000e+00> : vector<64x512xf32>
    %57 = tpu.matmul %55, %56, %cst_18 {dimension_numbers = #tpu.dot_dimension_numbers<[1], [0], [0], [1], [0, 0, 1, 1], [], []>} : vector<64x8xbf16>, vector<8x512xbf16>, vector<64x512xf32> -> vector<64x512xf32>
    %58 = vector.extract_strided_slice %33 {offsets = [0, 0], sizes = [8, 512], strides = [1, 1]} : vector<64x512xf32> to vector<8x512xf32>
    %c1_i32_19 = arith.constant 1 : i32
    %59 = tpu.dynamic_rotate %58 by %c1_i32_19 dim 1 : vector<8x512xf32>, i32 -> vector<8x512xf32>
    %cst_20 = arith.constant 0.000000e+00 : f32
    %60 = vector.shape_cast %42 : vector<1x512xi1> to vector<1x512xi1>
    %61 = vector.broadcast %60 : vector<1x512xi1> to vector<8x512xi1>
    %62 = vector.broadcast %cst_20 : f32 to vector<8x512xf32>
    %63 = arith.select %61, %59, %62 : vector<8x512xi1>, vector<8x512xf32>
    %c511_i32 = arith.constant 511 : i32
    %64 = tpu.dynamic_rotate %58 by %c511_i32 dim 1 : vector<8x512xf32>, i32 -> vector<8x512xf32>
    %cst_21 = arith.constant 0.000000e+00 : f32
    %65 = vector.shape_cast %51 : vector<1x512xi1> to vector<1x512xi1>
    %66 = vector.broadcast %65 : vector<1x512xi1> to vector<8x512xi1>
    %67 = vector.broadcast %cst_21 : f32 to vector<8x512xf32>
    %68 = arith.select %66, %64, %67 : vector<8x512xi1>, vector<8x512xf32>
    %69 = tpu.concatenate %63, %58, %68 in 0 : vector<8x512xf32>, vector<8x512xf32>, vector<8x512xf32> -> vector<24x512xf32>
    %70 = arith.truncf %69 : vector<24x512xf32> to vector<24x512xbf16>
    %c0_22 = arith.constant 0 : index
    %c0_23 = arith.constant 0 : index
    %c0_24 = arith.constant 0 : index
    %71 = vector.load %arg3[%c0_22, %c0_23, %c0_24] : memref<7x8x24xf32, #tpu.memory_space<vmem>>, vector<1x8x24xf32>
    %72 = vector.shape_cast %71 : vector<1x8x24xf32> to vector<8x24xf32>
    %73 = arith.truncf %72 : vector<8x24xf32> to vector<8x24xbf16>
    %cst_25 = arith.constant dense<0.000000e+00> : vector<8x512xf32>
    %74 = tpu.matmul %73, %70, %cst_25 {dimension_numbers = #tpu.dot_dimension_numbers<[1], [0], [0], [1], [0, 0, 1, 1], [], []>} : vector<8x24xbf16>, vector<24x512xbf16>, vector<8x512xf32> -> vector<8x512xf32>
    %c0_26 = arith.constant 0 : index
    %c0_27 = arith.constant 0 : index
    %c0_28 = arith.constant 0 : index
    %75 = vector.load %arg10[%c0_26, %c0_27, %c0_28] : memref<7x8x2xf32, #tpu.memory_space<vmem>>, vector<1x8x2xf32>
    %76 = vector.shape_cast %75 : vector<1x8x2xf32> to vector<8x2xf32>
    %77 = vector.extract_strided_slice %76 {offsets = [0, 0], sizes = [8, 1], strides = [1, 1]} : vector<8x2xf32> to vector<8x1xf32>
    %78 = vector.broadcast %77 : vector<8x1xf32> to vector<8x512xf32>
    %79 = arith.addf %74, %78 : vector<8x512xf32>
    %cst_29 = arith.constant 0.000000e+00 : f32
    %80 = vector.broadcast %cst_29 : f32 to vector<8x512xf32>
    %81 = arith.maximumf %79, %80 : vector<8x512xf32>
    %82 = vector.extract_strided_slice %76 {offsets = [0, 1], sizes = [8, 1], strides = [1, 1]} : vector<8x2xf32> to vector<8x1xf32>
    %83 = vector.broadcast %82 : vector<8x1xf32> to vector<8x512xf32>
    %84 = arith.addf %81, %83 : vector<8x512xf32>
    %c0_30 = arith.constant 0 : index
    %c0_31 = arith.constant 0 : index
    %c0_32 = arith.constant 0 : index
    %85 = vector.load %arg4[%c0_30, %c0_31, %c0_32] : memref<8x64x8xf32, #tpu.memory_space<vmem>>, vector<1x64x8xf32>
    %86 = vector.shape_cast %85 : vector<1x64x8xf32> to vector<64x8xf32>
    %87 = arith.truncf %86 : vector<64x8xf32> to vector<64x8xbf16>
    %88 = arith.truncf %84 : vector<8x512xf32> to vector<8x512xbf16>
    %cst_33 = arith.constant dense<0.000000e+00> : vector<64x512xf32>
    %89 = tpu.matmul %87, %88, %cst_33 {dimension_numbers = #tpu.dot_dimension_numbers<[1], [0], [0], [1], [0, 0, 1, 1], [], []>} : vector<64x8xbf16>, vector<8x512xbf16>, vector<64x512xf32> -> vector<64x512xf32>
    %90 = arith.addf %57, %89 : vector<64x512xf32>
    %91 = vector.extract_strided_slice %33 {offsets = [8, 0], sizes = [8, 512], strides = [1, 1]} : vector<64x512xf32> to vector<8x512xf32>
    %92 = arith.addf %84, %91 : vector<8x512xf32>
    %c1_i32_34 = arith.constant 1 : i32
    %93 = tpu.dynamic_rotate %92 by %c1_i32_34 dim 1 : vector<8x512xf32>, i32 -> vector<8x512xf32>
    %cst_35 = arith.constant 0.000000e+00 : f32
    %94 = vector.shape_cast %42 : vector<1x512xi1> to vector<1x512xi1>
    %95 = vector.broadcast %94 : vector<1x512xi1> to vector<8x512xi1>
    %96 = vector.broadcast %cst_35 : f32 to vector<8x512xf32>
    %97 = arith.select %95, %93, %96 : vector<8x512xi1>, vector<8x512xf32>
    %c511_i32_36 = arith.constant 511 : i32
    %98 = tpu.dynamic_rotate %92 by %c511_i32_36 dim 1 : vector<8x512xf32>, i32 -> vector<8x512xf32>
    %cst_37 = arith.constant 0.000000e+00 : f32
    %99 = vector.shape_cast %51 : vector<1x512xi1> to vector<1x512xi1>
    %100 = vector.broadcast %99 : vector<1x512xi1> to vector<8x512xi1>
    %101 = vector.broadcast %cst_37 : f32 to vector<8x512xf32>
    %102 = arith.select %100, %98, %101 : vector<8x512xi1>, vector<8x512xf32>
    %103 = tpu.concatenate %97, %92, %102 in 0 : vector<8x512xf32>, vector<8x512xf32>, vector<8x512xf32> -> vector<24x512xf32>
    %104 = arith.truncf %103 : vector<24x512xf32> to vector<24x512xbf16>
    %c1 = arith.constant 1 : index
    %c0_38 = arith.constant 0 : index
    %c0_39 = arith.constant 0 : index
    %105 = vector.load %arg3[%c1, %c0_38, %c0_39] : memref<7x8x24xf32, #tpu.memory_space<vmem>>, vector<1x8x24xf32>
    %106 = vector.shape_cast %105 : vector<1x8x24xf32> to vector<8x24xf32>
    %107 = arith.truncf %106 : vector<8x24xf32> to vector<8x24xbf16>
    %cst_40 = arith.constant dense<0.000000e+00> : vector<8x512xf32>
    %108 = tpu.matmul %107, %104, %cst_40 {dimension_numbers = #tpu.dot_dimension_numbers<[1], [0], [0], [1], [0, 0, 1, 1], [], []>} : vector<8x24xbf16>, vector<24x512xbf16>, vector<8x512xf32> -> vector<8x512xf32>
    %c1_41 = arith.constant 1 : index
    %c0_42 = arith.constant 0 : index
    %c0_43 = arith.constant 0 : index
    %109 = vector.load %arg10[%c1_41, %c0_42, %c0_43] : memref<7x8x2xf32, #tpu.memory_space<vmem>>, vector<1x8x2xf32>
    %110 = vector.shape_cast %109 : vector<1x8x2xf32> to vector<8x2xf32>
    %111 = vector.extract_strided_slice %110 {offsets = [0, 0], sizes = [8, 1], strides = [1, 1]} : vector<8x2xf32> to vector<8x1xf32>
    %112 = vector.broadcast %111 : vector<8x1xf32> to vector<8x512xf32>
    %113 = arith.addf %108, %112 : vector<8x512xf32>
    %cst_44 = arith.constant 0.000000e+00 : f32
    %114 = vector.broadcast %cst_44 : f32 to vector<8x512xf32>
    %115 = arith.maximumf %113, %114 : vector<8x512xf32>
    %116 = vector.extract_strided_slice %110 {offsets = [0, 1], sizes = [8, 1], strides = [1, 1]} : vector<8x2xf32> to vector<8x1xf32>
    %117 = vector.broadcast %116 : vector<8x1xf32> to vector<8x512xf32>
    %118 = arith.addf %115, %117 : vector<8x512xf32>
    %c1_45 = arith.constant 1 : index
    %c0_46 = arith.constant 0 : index
    %c0_47 = arith.constant 0 : index
    %119 = vector.load %arg4[%c1_45, %c0_46, %c0_47] : memref<8x64x8xf32, #tpu.memory_space<vmem>>, vector<1x64x8xf32>
    %120 = vector.shape_cast %119 : vector<1x64x8xf32> to vector<64x8xf32>
    %121 = arith.truncf %120 : vector<64x8xf32> to vector<64x8xbf16>
    %122 = arith.truncf %118 : vector<8x512xf32> to vector<8x512xbf16>
    %cst_48 = arith.constant dense<0.000000e+00> : vector<64x512xf32>
    %123 = tpu.matmul %121, %122, %cst_48 {dimension_numbers = #tpu.dot_dimension_numbers<[1], [0], [0], [1], [0, 0, 1, 1], [], []>} : vector<64x8xbf16>, vector<8x512xbf16>, vector<64x512xf32> -> vector<64x512xf32>
    %124 = arith.addf %90, %123 : vector<64x512xf32>
    %125 = vector.extract_strided_slice %33 {offsets = [16, 0], sizes = [8, 512], strides = [1, 1]} : vector<64x512xf32> to vector<8x512xf32>
    %126 = arith.addf %118, %125 : vector<8x512xf32>
    %c1_i32_49 = arith.constant 1 : i32
    %127 = tpu.dynamic_rotate %126 by %c1_i32_49 dim 1 : vector<8x512xf32>, i32 -> vector<8x512xf32>
    %cst_50 = arith.constant 0.000000e+00 : f32
    %128 = vector.shape_cast %42 : vector<1x512xi1> to vector<1x512xi1>
    %129 = vector.broadcast %128 : vector<1x512xi1> to vector<8x512xi1>
    %130 = vector.broadcast %cst_50 : f32 to vector<8x512xf32>
    %131 = arith.select %129, %127, %130 : vector<8x512xi1>, vector<8x512xf32>
    %c511_i32_51 = arith.constant 511 : i32
    %132 = tpu.dynamic_rotate %126 by %c511_i32_51 dim 1 : vector<8x512xf32>, i32 -> vector<8x512xf32>
    %cst_52 = arith.constant 0.000000e+00 : f32
    %133 = vector.shape_cast %51 : vector<1x512xi1> to vector<1x512xi1>
    %134 = vector.broadcast %133 : vector<1x512xi1> to vector<8x512xi1>
    %135 = vector.broadcast %cst_52 : f32 to vector<8x512xf32>
    %136 = arith.select %134, %132, %135 : vector<8x512xi1>, vector<8x512xf32>
    %137 = tpu.concatenate %131, %126, %136 in 0 : vector<8x512xf32>, vector<8x512xf32>, vector<8x512xf32> -> vector<24x512xf32>
    %138 = arith.truncf %137 : vector<24x512xf32> to vector<24x512xbf16>
    %c2 = arith.constant 2 : index
    %c0_53 = arith.constant 0 : index
    %c0_54 = arith.constant 0 : index
    %139 = vector.load %arg3[%c2, %c0_53, %c0_54] : memref<7x8x24xf32, #tpu.memory_space<vmem>>, vector<1x8x24xf32>
    %140 = vector.shape_cast %139 : vector<1x8x24xf32> to vector<8x24xf32>
    %141 = arith.truncf %140 : vector<8x24xf32> to vector<8x24xbf16>
    %cst_55 = arith.constant dense<0.000000e+00> : vector<8x512xf32>
    %142 = tpu.matmul %141, %138, %cst_55 {dimension_numbers = #tpu.dot_dimension_numbers<[1], [0], [0], [1], [0, 0, 1, 1], [], []>} : vector<8x24xbf16>, vector<24x512xbf16>, vector<8x512xf32> -> vector<8x512xf32>
    %c2_56 = arith.constant 2 : index
    %c0_57 = arith.constant 0 : index
    %c0_58 = arith.constant 0 : index
    %143 = vector.load %arg10[%c2_56, %c0_57, %c0_58] : memref<7x8x2xf32, #tpu.memory_space<vmem>>, vector<1x8x2xf32>
    %144 = vector.shape_cast %143 : vector<1x8x2xf32> to vector<8x2xf32>
    %145 = vector.extract_strided_slice %144 {offsets = [0, 0], sizes = [8, 1], strides = [1, 1]} : vector<8x2xf32> to vector<8x1xf32>
    %146 = vector.broadcast %145 : vector<8x1xf32> to vector<8x512xf32>
    %147 = arith.addf %142, %146 : vector<8x512xf32>
    %cst_59 = arith.constant 0.000000e+00 : f32
    %148 = vector.broadcast %cst_59 : f32 to vector<8x512xf32>
    %149 = arith.maximumf %147, %148 : vector<8x512xf32>
    %150 = vector.extract_strided_slice %144 {offsets = [0, 1], sizes = [8, 1], strides = [1, 1]} : vector<8x2xf32> to vector<8x1xf32>
    %151 = vector.broadcast %150 : vector<8x1xf32> to vector<8x512xf32>
    %152 = arith.addf %149, %151 : vector<8x512xf32>
    %c2_60 = arith.constant 2 : index
    %c0_61 = arith.constant 0 : index
    %c0_62 = arith.constant 0 : index
    %153 = vector.load %arg4[%c2_60, %c0_61, %c0_62] : memref<8x64x8xf32, #tpu.memory_space<vmem>>, vector<1x64x8xf32>
    %154 = vector.shape_cast %153 : vector<1x64x8xf32> to vector<64x8xf32>
    %155 = arith.truncf %154 : vector<64x8xf32> to vector<64x8xbf16>
    %156 = arith.truncf %152 : vector<8x512xf32> to vector<8x512xbf16>
    %cst_63 = arith.constant dense<0.000000e+00> : vector<64x512xf32>
    %157 = tpu.matmul %155, %156, %cst_63 {dimension_numbers = #tpu.dot_dimension_numbers<[1], [0], [0], [1], [0, 0, 1, 1], [], []>} : vector<64x8xbf16>, vector<8x512xbf16>, vector<64x512xf32> -> vector<64x512xf32>
    %158 = arith.addf %124, %157 : vector<64x512xf32>
    %159 = vector.extract_strided_slice %33 {offsets = [24, 0], sizes = [8, 512], strides = [1, 1]} : vector<64x512xf32> to vector<8x512xf32>
    %160 = arith.addf %152, %159 : vector<8x512xf32>
    %c1_i32_64 = arith.constant 1 : i32
    %161 = tpu.dynamic_rotate %160 by %c1_i32_64 dim 1 : vector<8x512xf32>, i32 -> vector<8x512xf32>
    %cst_65 = arith.constant 0.000000e+00 : f32
    %162 = vector.shape_cast %42 : vector<1x512xi1> to vector<1x512xi1>
    %163 = vector.broadcast %162 : vector<1x512xi1> to vector<8x512xi1>
    %164 = vector.broadcast %cst_65 : f32 to vector<8x512xf32>
    %165 = arith.select %163, %161, %164 : vector<8x512xi1>, vector<8x512xf32>
    %c511_i32_66 = arith.constant 511 : i32
    %166 = tpu.dynamic_rotate %160 by %c511_i32_66 dim 1 : vector<8x512xf32>, i32 -> vector<8x512xf32>
    %cst_67 = arith.constant 0.000000e+00 : f32
    %167 = vector.shape_cast %51 : vector<1x512xi1> to vector<1x512xi1>
    %168 = vector.broadcast %167 : vector<1x512xi1> to vector<8x512xi1>
    %169 = vector.broadcast %cst_67 : f32 to vector<8x512xf32>
    %170 = arith.select %168, %166, %169 : vector<8x512xi1>, vector<8x512xf32>
    %171 = tpu.concatenate %165, %160, %170 in 0 : vector<8x512xf32>, vector<8x512xf32>, vector<8x512xf32> -> vector<24x512xf32>
    %172 = arith.truncf %171 : vector<24x512xf32> to vector<24x512xbf16>
    %c3 = arith.constant 3 : index
    %c0_68 = arith.constant 0 : index
    %c0_69 = arith.constant 0 : index
    %173 = vector.load %arg3[%c3, %c0_68, %c0_69] : memref<7x8x24xf32, #tpu.memory_space<vmem>>, vector<1x8x24xf32>
    %174 = vector.shape_cast %173 : vector<1x8x24xf32> to vector<8x24xf32>
    %175 = arith.truncf %174 : vector<8x24xf32> to vector<8x24xbf16>
    %cst_70 = arith.constant dense<0.000000e+00> : vector<8x512xf32>
    %176 = tpu.matmul %175, %172, %cst_70 {dimension_numbers = #tpu.dot_dimension_numbers<[1], [0], [0], [1], [0, 0, 1, 1], [], []>} : vector<8x24xbf16>, vector<24x512xbf16>, vector<8x512xf32> -> vector<8x512xf32>
    %c3_71 = arith.constant 3 : index
    %c0_72 = arith.constant 0 : index
    %c0_73 = arith.constant 0 : index
    %177 = vector.load %arg10[%c3_71, %c0_72, %c0_73] : memref<7x8x2xf32, #tpu.memory_space<vmem>>, vector<1x8x2xf32>
    %178 = vector.shape_cast %177 : vector<1x8x2xf32> to vector<8x2xf32>
    %179 = vector.extract_strided_slice %178 {offsets = [0, 0], sizes = [8, 1], strides = [1, 1]} : vector<8x2xf32> to vector<8x1xf32>
    %180 = vector.broadcast %179 : vector<8x1xf32> to vector<8x512xf32>
    %181 = arith.addf %176, %180 : vector<8x512xf32>
    %cst_74 = arith.constant 0.000000e+00 : f32
    %182 = vector.broadcast %cst_74 : f32 to vector<8x512xf32>
    %183 = arith.maximumf %181, %182 : vector<8x512xf32>
    %184 = vector.extract_strided_slice %178 {offsets = [0, 1], sizes = [8, 1], strides = [1, 1]} : vector<8x2xf32> to vector<8x1xf32>
    %185 = vector.broadcast %184 : vector<8x1xf32> to vector<8x512xf32>
    %186 = arith.addf %183, %185 : vector<8x512xf32>
    %c3_75 = arith.constant 3 : index
    %c0_76 = arith.constant 0 : index
    %c0_77 = arith.constant 0 : index
    %187 = vector.load %arg4[%c3_75, %c0_76, %c0_77] : memref<8x64x8xf32, #tpu.memory_space<vmem>>, vector<1x64x8xf32>
    %188 = vector.shape_cast %187 : vector<1x64x8xf32> to vector<64x8xf32>
    %189 = arith.truncf %188 : vector<64x8xf32> to vector<64x8xbf16>
    %190 = arith.truncf %186 : vector<8x512xf32> to vector<8x512xbf16>
    %cst_78 = arith.constant dense<0.000000e+00> : vector<64x512xf32>
    %191 = tpu.matmul %189, %190, %cst_78 {dimension_numbers = #tpu.dot_dimension_numbers<[1], [0], [0], [1], [0, 0, 1, 1], [], []>} : vector<64x8xbf16>, vector<8x512xbf16>, vector<64x512xf32> -> vector<64x512xf32>
    %192 = arith.addf %158, %191 : vector<64x512xf32>
    %193 = vector.extract_strided_slice %33 {offsets = [32, 0], sizes = [8, 512], strides = [1, 1]} : vector<64x512xf32> to vector<8x512xf32>
    %194 = arith.addf %186, %193 : vector<8x512xf32>
    %c1_i32_79 = arith.constant 1 : i32
    %195 = tpu.dynamic_rotate %194 by %c1_i32_79 dim 1 : vector<8x512xf32>, i32 -> vector<8x512xf32>
    %cst_80 = arith.constant 0.000000e+00 : f32
    %196 = vector.shape_cast %42 : vector<1x512xi1> to vector<1x512xi1>
    %197 = vector.broadcast %196 : vector<1x512xi1> to vector<8x512xi1>
    %198 = vector.broadcast %cst_80 : f32 to vector<8x512xf32>
    %199 = arith.select %197, %195, %198 : vector<8x512xi1>, vector<8x512xf32>
    %c511_i32_81 = arith.constant 511 : i32
    %200 = tpu.dynamic_rotate %194 by %c511_i32_81 dim 1 : vector<8x512xf32>, i32 -> vector<8x512xf32>
    %cst_82 = arith.constant 0.000000e+00 : f32
    %201 = vector.shape_cast %51 : vector<1x512xi1> to vector<1x512xi1>
    %202 = vector.broadcast %201 : vector<1x512xi1> to vector<8x512xi1>
    %203 = vector.broadcast %cst_82 : f32 to vector<8x512xf32>
    %204 = arith.select %202, %200, %203 : vector<8x512xi1>, vector<8x512xf32>
    %205 = tpu.concatenate %199, %194, %204 in 0 : vector<8x512xf32>, vector<8x512xf32>, vector<8x512xf32> -> vector<24x512xf32>
    %206 = arith.truncf %205 : vector<24x512xf32> to vector<24x512xbf16>
    %c4 = arith.constant 4 : index
    %c0_83 = arith.constant 0 : index
    %c0_84 = arith.constant 0 : index
    %207 = vector.load %arg3[%c4, %c0_83, %c0_84] : memref<7x8x24xf32, #tpu.memory_space<vmem>>, vector<1x8x24xf32>
    %208 = vector.shape_cast %207 : vector<1x8x24xf32> to vector<8x24xf32>
    %209 = arith.truncf %208 : vector<8x24xf32> to vector<8x24xbf16>
    %cst_85 = arith.constant dense<0.000000e+00> : vector<8x512xf32>
    %210 = tpu.matmul %209, %206, %cst_85 {dimension_numbers = #tpu.dot_dimension_numbers<[1], [0], [0], [1], [0, 0, 1, 1], [], []>} : vector<8x24xbf16>, vector<24x512xbf16>, vector<8x512xf32> -> vector<8x512xf32>
    %c4_86 = arith.constant 4 : index
    %c0_87 = arith.constant 0 : index
    %c0_88 = arith.constant 0 : index
    %211 = vector.load %arg10[%c4_86, %c0_87, %c0_88] : memref<7x8x2xf32, #tpu.memory_space<vmem>>, vector<1x8x2xf32>
    %212 = vector.shape_cast %211 : vector<1x8x2xf32> to vector<8x2xf32>
    %213 = vector.extract_strided_slice %212 {offsets = [0, 0], sizes = [8, 1], strides = [1, 1]} : vector<8x2xf32> to vector<8x1xf32>
    %214 = vector.broadcast %213 : vector<8x1xf32> to vector<8x512xf32>
    %215 = arith.addf %210, %214 : vector<8x512xf32>
    %cst_89 = arith.constant 0.000000e+00 : f32
    %216 = vector.broadcast %cst_89 : f32 to vector<8x512xf32>
    %217 = arith.maximumf %215, %216 : vector<8x512xf32>
    %218 = vector.extract_strided_slice %212 {offsets = [0, 1], sizes = [8, 1], strides = [1, 1]} : vector<8x2xf32> to vector<8x1xf32>
    %219 = vector.broadcast %218 : vector<8x1xf32> to vector<8x512xf32>
    %220 = arith.addf %217, %219 : vector<8x512xf32>
    %c4_90 = arith.constant 4 : index
    %c0_91 = arith.constant 0 : index
    %c0_92 = arith.constant 0 : index
    %221 = vector.load %arg4[%c4_90, %c0_91, %c0_92] : memref<8x64x8xf32, #tpu.memory_space<vmem>>, vector<1x64x8xf32>
    %222 = vector.shape_cast %221 : vector<1x64x8xf32> to vector<64x8xf32>
    %223 = arith.truncf %222 : vector<64x8xf32> to vector<64x8xbf16>
    %224 = arith.truncf %220 : vector<8x512xf32> to vector<8x512xbf16>
    %cst_93 = arith.constant dense<0.000000e+00> : vector<64x512xf32>
    %225 = tpu.matmul %223, %224, %cst_93 {dimension_numbers = #tpu.dot_dimension_numbers<[1], [0], [0], [1], [0, 0, 1, 1], [], []>} : vector<64x8xbf16>, vector<8x512xbf16>, vector<64x512xf32> -> vector<64x512xf32>
    %226 = arith.addf %192, %225 : vector<64x512xf32>
    %227 = vector.extract_strided_slice %33 {offsets = [40, 0], sizes = [8, 512], strides = [1, 1]} : vector<64x512xf32> to vector<8x512xf32>
    %228 = arith.addf %220, %227 : vector<8x512xf32>
    %c1_i32_94 = arith.constant 1 : i32
    %229 = tpu.dynamic_rotate %228 by %c1_i32_94 dim 1 : vector<8x512xf32>, i32 -> vector<8x512xf32>
    %cst_95 = arith.constant 0.000000e+00 : f32
    %230 = vector.shape_cast %42 : vector<1x512xi1> to vector<1x512xi1>
    %231 = vector.broadcast %230 : vector<1x512xi1> to vector<8x512xi1>
    %232 = vector.broadcast %cst_95 : f32 to vector<8x512xf32>
    %233 = arith.select %231, %229, %232 : vector<8x512xi1>, vector<8x512xf32>
    %c511_i32_96 = arith.constant 511 : i32
    %234 = tpu.dynamic_rotate %228 by %c511_i32_96 dim 1 : vector<8x512xf32>, i32 -> vector<8x512xf32>
    %cst_97 = arith.constant 0.000000e+00 : f32
    %235 = vector.shape_cast %51 : vector<1x512xi1> to vector<1x512xi1>
    %236 = vector.broadcast %235 : vector<1x512xi1> to vector<8x512xi1>
    %237 = vector.broadcast %cst_97 : f32 to vector<8x512xf32>
    %238 = arith.select %236, %234, %237 : vector<8x512xi1>, vector<8x512xf32>
    %239 = tpu.concatenate %233, %228, %238 in 0 : vector<8x512xf32>, vector<8x512xf32>, vector<8x512xf32> -> vector<24x512xf32>
    %240 = arith.truncf %239 : vector<24x512xf32> to vector<24x512xbf16>
    %c5 = arith.constant 5 : index
    %c0_98 = arith.constant 0 : index
    %c0_99 = arith.constant 0 : index
    %241 = vector.load %arg3[%c5, %c0_98, %c0_99] : memref<7x8x24xf32, #tpu.memory_space<vmem>>, vector<1x8x24xf32>
    %242 = vector.shape_cast %241 : vector<1x8x24xf32> to vector<8x24xf32>
    %243 = arith.truncf %242 : vector<8x24xf32> to vector<8x24xbf16>
    %cst_100 = arith.constant dense<0.000000e+00> : vector<8x512xf32>
    %244 = tpu.matmul %243, %240, %cst_100 {dimension_numbers = #tpu.dot_dimension_numbers<[1], [0], [0], [1], [0, 0, 1, 1], [], []>} : vector<8x24xbf16>, vector<24x512xbf16>, vector<8x512xf32> -> vector<8x512xf32>
    %c5_101 = arith.constant 5 : index
    %c0_102 = arith.constant 0 : index
    %c0_103 = arith.constant 0 : index
    %245 = vector.load %arg10[%c5_101, %c0_102, %c0_103] : memref<7x8x2xf32, #tpu.memory_space<vmem>>, vector<1x8x2xf32>
    %246 = vector.shape_cast %245 : vector<1x8x2xf32> to vector<8x2xf32>
    %247 = vector.extract_strided_slice %246 {offsets = [0, 0], sizes = [8, 1], strides = [1, 1]} : vector<8x2xf32> to vector<8x1xf32>
    %248 = vector.broadcast %247 : vector<8x1xf32> to vector<8x512xf32>
    %249 = arith.addf %244, %248 : vector<8x512xf32>
    %cst_104 = arith.constant 0.000000e+00 : f32
    %250 = vector.broadcast %cst_104 : f32 to vector<8x512xf32>
    %251 = arith.maximumf %249, %250 : vector<8x512xf32>
    %252 = vector.extract_strided_slice %246 {offsets = [0, 1], sizes = [8, 1], strides = [1, 1]} : vector<8x2xf32> to vector<8x1xf32>
    %253 = vector.broadcast %252 : vector<8x1xf32> to vector<8x512xf32>
    %254 = arith.addf %251, %253 : vector<8x512xf32>
    %c5_105 = arith.constant 5 : index
    %c0_106 = arith.constant 0 : index
    %c0_107 = arith.constant 0 : index
    %255 = vector.load %arg4[%c5_105, %c0_106, %c0_107] : memref<8x64x8xf32, #tpu.memory_space<vmem>>, vector<1x64x8xf32>
    %256 = vector.shape_cast %255 : vector<1x64x8xf32> to vector<64x8xf32>
    %257 = arith.truncf %256 : vector<64x8xf32> to vector<64x8xbf16>
    %258 = arith.truncf %254 : vector<8x512xf32> to vector<8x512xbf16>
    %cst_108 = arith.constant dense<0.000000e+00> : vector<64x512xf32>
    %259 = tpu.matmul %257, %258, %cst_108 {dimension_numbers = #tpu.dot_dimension_numbers<[1], [0], [0], [1], [0, 0, 1, 1], [], []>} : vector<64x8xbf16>, vector<8x512xbf16>, vector<64x512xf32> -> vector<64x512xf32>
    %260 = arith.addf %226, %259 : vector<64x512xf32>
    %261 = vector.extract_strided_slice %33 {offsets = [48, 0], sizes = [8, 512], strides = [1, 1]} : vector<64x512xf32> to vector<8x512xf32>
    %262 = arith.addf %254, %261 : vector<8x512xf32>
    %c1_i32_109 = arith.constant 1 : i32
    %263 = tpu.dynamic_rotate %262 by %c1_i32_109 dim 1 : vector<8x512xf32>, i32 -> vector<8x512xf32>
    %cst_110 = arith.constant 0.000000e+00 : f32
    %264 = vector.shape_cast %42 : vector<1x512xi1> to vector<1x512xi1>
    %265 = vector.broadcast %264 : vector<1x512xi1> to vector<8x512xi1>
    %266 = vector.broadcast %cst_110 : f32 to vector<8x512xf32>
    %267 = arith.select %265, %263, %266 : vector<8x512xi1>, vector<8x512xf32>
    %c511_i32_111 = arith.constant 511 : i32
    %268 = tpu.dynamic_rotate %262 by %c511_i32_111 dim 1 : vector<8x512xf32>, i32 -> vector<8x512xf32>
    %cst_112 = arith.constant 0.000000e+00 : f32
    %269 = vector.shape_cast %51 : vector<1x512xi1> to vector<1x512xi1>
    %270 = vector.broadcast %269 : vector<1x512xi1> to vector<8x512xi1>
    %271 = vector.broadcast %cst_112 : f32 to vector<8x512xf32>
    %272 = arith.select %270, %268, %271 : vector<8x512xi1>, vector<8x512xf32>
    %273 = tpu.concatenate %267, %262, %272 in 0 : vector<8x512xf32>, vector<8x512xf32>, vector<8x512xf32> -> vector<24x512xf32>
    %274 = arith.truncf %273 : vector<24x512xf32> to vector<24x512xbf16>
    %c6 = arith.constant 6 : index
    %c0_113 = arith.constant 0 : index
    %c0_114 = arith.constant 0 : index
    %275 = vector.load %arg3[%c6, %c0_113, %c0_114] : memref<7x8x24xf32, #tpu.memory_space<vmem>>, vector<1x8x24xf32>
    %276 = vector.shape_cast %275 : vector<1x8x24xf32> to vector<8x24xf32>
    %277 = arith.truncf %276 : vector<8x24xf32> to vector<8x24xbf16>
    %cst_115 = arith.constant dense<0.000000e+00> : vector<8x512xf32>
    %278 = tpu.matmul %277, %274, %cst_115 {dimension_numbers = #tpu.dot_dimension_numbers<[1], [0], [0], [1], [0, 0, 1, 1], [], []>} : vector<8x24xbf16>, vector<24x512xbf16>, vector<8x512xf32> -> vector<8x512xf32>
    %c6_116 = arith.constant 6 : index
    %c0_117 = arith.constant 0 : index
    %c0_118 = arith.constant 0 : index
    %279 = vector.load %arg10[%c6_116, %c0_117, %c0_118] : memref<7x8x2xf32, #tpu.memory_space<vmem>>, vector<1x8x2xf32>
    %280 = vector.shape_cast %279 : vector<1x8x2xf32> to vector<8x2xf32>
    %281 = vector.extract_strided_slice %280 {offsets = [0, 0], sizes = [8, 1], strides = [1, 1]} : vector<8x2xf32> to vector<8x1xf32>
    %282 = vector.broadcast %281 : vector<8x1xf32> to vector<8x512xf32>
    %283 = arith.addf %278, %282 : vector<8x512xf32>
    %cst_119 = arith.constant 0.000000e+00 : f32
    %284 = vector.broadcast %cst_119 : f32 to vector<8x512xf32>
    %285 = arith.maximumf %283, %284 : vector<8x512xf32>
    %286 = vector.extract_strided_slice %280 {offsets = [0, 1], sizes = [8, 1], strides = [1, 1]} : vector<8x2xf32> to vector<8x1xf32>
    %287 = vector.broadcast %286 : vector<8x1xf32> to vector<8x512xf32>
    %288 = arith.addf %285, %287 : vector<8x512xf32>
    %c6_120 = arith.constant 6 : index
    %c0_121 = arith.constant 0 : index
    %c0_122 = arith.constant 0 : index
    %289 = vector.load %arg4[%c6_120, %c0_121, %c0_122] : memref<8x64x8xf32, #tpu.memory_space<vmem>>, vector<1x64x8xf32>
    %290 = vector.shape_cast %289 : vector<1x64x8xf32> to vector<64x8xf32>
    %291 = arith.truncf %290 : vector<64x8xf32> to vector<64x8xbf16>
    %292 = arith.truncf %288 : vector<8x512xf32> to vector<8x512xbf16>
    %cst_123 = arith.constant dense<0.000000e+00> : vector<64x512xf32>
    %293 = tpu.matmul %291, %292, %cst_123 {dimension_numbers = #tpu.dot_dimension_numbers<[1], [0], [0], [1], [0, 0, 1, 1], [], []>} : vector<64x8xbf16>, vector<8x512xbf16>, vector<64x512xf32> -> vector<64x512xf32>
    %294 = arith.addf %260, %293 : vector<64x512xf32>
    %295 = vector.broadcast %3 : vector<64x1xf32> to vector<64x512xf32>
    %296 = arith.addf %294, %295 : vector<64x512xf32>
    %cst_124 = arith.constant 0.000000e+00 : f32
    %297 = vector.broadcast %cst_124 : f32 to vector<64x512xf32>
    %298 = arith.maximumf %296, %297 : vector<64x512xf32>
    %299 = vector.broadcast %4 : vector<64x1xf32> to vector<64x512xf32>
    %300 = arith.addf %298, %299 : vector<64x512xf32>
    %301 = arith.truncf %300 : vector<64x512xf32> to vector<64x512xbf16>
    %c0_125 = arith.constant 0 : index
    %c0_126 = arith.constant 0 : index
    %302 = vector.load %arg7[%c0_125, %c0_126] : memref<512x8xf32, #tpu.memory_space<vmem>>, vector<512x8xf32>
    %303 = arith.truncf %302 : vector<512x8xf32> to vector<512x8xbf16>
    %cst_127 = arith.constant dense<0.000000e+00> : vector<64x8xf32>
    %304 = tpu.matmul %301, %303, %cst_127 {dimension_numbers = #tpu.dot_dimension_numbers<[1], [0], [0], [1], [0, 0, 1, 1], [], []>} : vector<64x512xbf16>, vector<512x8xbf16>, vector<64x8xf32> -> vector<64x8xf32>
    %cst_128 = arith.constant 1.562500e-02 : f32
    %305 = vector.broadcast %cst_128 : f32 to vector<64x8xf32>
    %306 = arith.mulf %304, %305 : vector<64x8xf32>
    %c0_129 = arith.constant 0 : index
    %c0_130 = arith.constant 0 : index
    %307 = vector.load %arg5[%c0_129, %c0_130] : memref<16x64xf32, #tpu.memory_space<vmem>>, vector<16x64xf32>
    %308 = arith.truncf %307 : vector<16x64xf32> to vector<16x64xbf16>
    %309 = arith.truncf %306 : vector<64x8xf32> to vector<64x8xbf16>
    %cst_131 = arith.constant dense<0.000000e+00> : vector<16x8xf32>
    %310 = tpu.matmul %308, %309, %cst_131 {dimension_numbers = #tpu.dot_dimension_numbers<[1], [0], [0], [1], [0, 0, 1, 1], [], []>} : vector<16x64xbf16>, vector<64x8xbf16>, vector<16x8xf32> -> vector<16x8xf32>
    %c0_132 = arith.constant 0 : index
    %c0_133 = arith.constant 0 : index
    %311 = vector.load %arg11[%c0_132, %c0_133] : memref<16x1xf32, #tpu.memory_space<vmem>>, vector<16x1xf32>
    %312 = vector.broadcast %311 : vector<16x1xf32> to vector<16x8xf32>
    %313 = arith.addf %310, %312 : vector<16x8xf32>
    %cst_134 = arith.constant 0.000000e+00 : f32
    %314 = vector.broadcast %cst_134 : f32 to vector<16x8xf32>
    %315 = arith.maximumf %313, %314 : vector<16x8xf32>
    %c0_135 = arith.constant 0 : index
    %c0_136 = arith.constant 0 : index
    %316 = vector.load %arg6[%c0_135, %c0_136] : memref<64x16xf32, #tpu.memory_space<vmem>>, vector<64x16xf32>
    %317 = arith.truncf %316 : vector<64x16xf32> to vector<64x16xbf16>
    %318 = arith.truncf %315 : vector<16x8xf32> to vector<16x8xbf16>
    %cst_137 = arith.constant dense<0.000000e+00> : vector<64x8xf32>
    %319 = tpu.matmul %317, %318, %cst_137 {dimension_numbers = #tpu.dot_dimension_numbers<[1], [0], [0], [1], [0, 0, 1, 1], [], []>} : vector<64x16xbf16>, vector<16x8xbf16>, vector<64x8xf32> -> vector<64x8xf32>
    %320 = vector.broadcast %5 : vector<64x1xf32> to vector<64x8xf32>
    %321 = arith.addf %319, %320 : vector<64x8xf32>
    %322 = arith.negf %321 : vector<64x8xf32>
    %323 = math.exp %322 : vector<64x8xf32>
    %cst_138 = arith.constant 1.000000e+00 : f32
    %324 = vector.broadcast %cst_138 : f32 to vector<64x8xf32>
    %325 = arith.addf %324, %323 : vector<64x8xf32>
    %326 = arith.divf %324, %325 : vector<64x8xf32>
    %327 = arith.truncf %326 : vector<64x8xf32> to vector<64x8xbf16>
    %c0_139 = arith.constant 0 : index
    %c0_140 = arith.constant 0 : index
    %328 = vector.load %arg8[%c0_139, %c0_140] : memref<8x512xf32, #tpu.memory_space<vmem>>, vector<8x512xf32>
    %329 = arith.truncf %328 : vector<8x512xf32> to vector<8x512xbf16>
    %cst_141 = arith.constant dense<0.000000e+00> : vector<64x512xf32>
    %330 = tpu.matmul %327, %329, %cst_141 {dimension_numbers = #tpu.dot_dimension_numbers<[1], [0], [0], [1], [0, 0, 1, 1], [], []>} : vector<64x8xbf16>, vector<8x512xbf16>, vector<64x512xf32> -> vector<64x512xf32>
    %c0_142 = arith.constant 0 : index
    %c0_143 = arith.constant 0 : index
    %331 = vector.load %arg1[%c0_142, %c0_143] : memref<64x512xf32, #tpu.memory_space<vmem>>, vector<64x512xf32>
    %332 = arith.mulf %300, %330 : vector<64x512xf32>
    %333 = arith.addf %331, %332 : vector<64x512xf32>
    %c0_144 = arith.constant 0 : index
    %c0_145 = arith.constant 0 : index
    %334 = vector.load %arg12[%c0_144, %c0_145] : memref<64x512xf32, #tpu.memory_space<vmem>>, vector<64x512xf32>
    tpu.vector_store %arg12[%c0_144, %c0_145], %333 {strides = array<i32>} : memref<64x512xf32, #tpu.memory_space<vmem>>, vector<64x512xf32>,
    return
  }
  func.func @transform_0(%arg0: i32) -> (i32, i32) {
    %c0_i32 = arith.constant 0 : i32
    %c0_i32_0 = arith.constant 0 : i32
    return %c0_i32, %arg0 : i32, i32
  }
  func.func @transform_1(%arg0: i32) -> (i32, i32) {
    %c0_i32 = arith.constant 0 : i32
    %c0_i32_0 = arith.constant 0 : i32
    %c0_i32_1 = arith.constant 0 : i32
    return %c0_i32, %c0_i32_0 : i32, i32
  }
  func.func @transform_2(%arg0: i32) -> (i32, i32, i32) {
    %c0_i32 = arith.constant 0 : i32
    %c0_i32_0 = arith.constant 0 : i32
    %c0_i32_1 = arith.constant 0 : i32
    %c0_i32_2 = arith.constant 0 : i32
    return %c0_i32, %c0_i32_0, %c0_i32_1 : i32, i32, i32
  }
  func.func @transform_3(%arg0: i32) -> (i32, i32, i32) {
    %c0_i32 = arith.constant 0 : i32
    %c0_i32_0 = arith.constant 0 : i32
    %c0_i32_1 = arith.constant 0 : i32
    %c0_i32_2 = arith.constant 0 : i32
    return %c0_i32, %c0_i32_0, %c0_i32_1 : i32, i32, i32
  }
  func.func @transform_4(%arg0: i32) -> (i32, i32) {
    %c0_i32 = arith.constant 0 : i32
    %c0_i32_0 = arith.constant 0 : i32
    %c0_i32_1 = arith.constant 0 : i32
    return %c0_i32, %c0_i32_0 : i32, i32
  }
  func.func @transform_5(%arg0: i32) -> (i32, i32) {
    %c0_i32 = arith.constant 0 : i32
    %c0_i32_0 = arith.constant 0 : i32
    %c0_i32_1 = arith.constant 0 : i32
    return %c0_i32, %c0_i32_0 : i32, i32
  }
  func.func @transform_6(%arg0: i32) -> (i32, i32) {
    %c0_i32 = arith.constant 0 : i32
    %c0_i32_0 = arith.constant 0 : i32
    %c0_i32_1 = arith.constant 0 : i32
    return %c0_i32, %c0_i32_0 : i32, i32
  }
  func.func @transform_7(%arg0: i32) -> (i32, i32) {
    %c0_i32 = arith.constant 0 : i32
    %c0_i32_0 = arith.constant 0 : i32
    %c0_i32_1 = arith.constant 0 : i32
    return %c0_i32, %c0_i32_0 : i32, i32
  }
  func.func @transform_8(%arg0: i32) -> (i32, i32) {
    %c0_i32 = arith.constant 0 : i32
    %c0_i32_0 = arith.constant 0 : i32
    %c0_i32_1 = arith.constant 0 : i32
    return %c0_i32, %c0_i32_0 : i32, i32
  }
  func.func @transform_9(%arg0: i32) -> (i32, i32, i32) {
    %c0_i32 = arith.constant 0 : i32
    %c0_i32_0 = arith.constant 0 : i32
    %c0_i32_1 = arith.constant 0 : i32
    %c0_i32_2 = arith.constant 0 : i32
    return %c0_i32, %c0_i32_0, %c0_i32_1 : i32, i32, i32
  }
  func.func @transform_10(%arg0: i32) -> (i32, i32) {
    %c0_i32 = arith.constant 0 : i32
    %c0_i32_0 = arith.constant 0 : i32
    %c0_i32_1 = arith.constant 0 : i32
    return %c0_i32, %c0_i32_0 : i32, i32
  }
  func.func @transform_11(%arg0: i32) -> (i32, i32) {
    %c0_i32 = arith.constant 0 : i32
    %c0_i32_0 = arith.constant 0 : i32
    return %c0_i32, %arg0 : i32, i32
  }
}

</mosaic_0001>

<llo_original>
// kernel: tpu_custom_call.1
$region0: #{tpu_custom_call.1}
  #allocation0 [shape = 'u32[]', space=smem, size = 0x4, offset = 0x4, fixed_abs, tag = 'smem constant byte address 0x4 - core index']
  #allocation1 [shape = 'u32[72,128]{1,0:T(1,128)}', space=vmem, size = 0x9000, scoped, tag = 'internal scratch']
  %s0 = inlined_call_operand.vmem [shape: f32[64,1024], index: 0, kind: input, shape index: {}]
  %s1 = inlined_call_operand.vmem [shape: f32[64,64], index: 1, kind: input, shape index: {}]
  %s2 = inlined_call_operand.vmem [shape: f32[7,8,24], index: 2, kind: input, shape index: {}]
  %s3 = inlined_call_operand.vmem [shape: f32[8,64,8], index: 3, kind: input, shape index: {}]
  %s4 = inlined_call_operand.vmem [shape: f32[16,64], index: 4, kind: input, shape index: {}]
  %s5 = inlined_call_operand.vmem [shape: f32[64,16], index: 5, kind: input, shape index: {}]
  %s6 = inlined_call_operand.vmem [shape: f32[512,8], index: 6, kind: input, shape index: {}]
  %s7 = inlined_call_operand.vmem [shape: f32[8,512], index: 7, kind: input, shape index: {}]
  %s8 = inlined_call_operand.vmem [shape: f32[64,5], index: 8, kind: input, shape index: {}]
  %s9 = inlined_call_operand.vmem [shape: f32[7,8,2], index: 9, kind: input, shape index: {}]
  %s10 = inlined_call_operand.vmem [shape: f32[16,1], index: 10, kind: input, shape index: {}]
  %s11 = inlined_call_operand.hbm [shape: f32[64,1024], index: 11, kind: output, shape index: {}]
  %s12 = sld [smem:[#allocation0]]
  $region100: #{tpu_custom_call.1} parent=0
    _
  %s14 = ssub.s32 1, %s12
  %s15 = scalar_select 0, %s14, %s12
  $region1: #{tpu_custom_call.1} parent=0
    #allocation2 [shape = 'u8[262144]{0}', space=vmem, size = 0x40000, scoped, tag = 'input window, operand 0']
    #allocation3 [shape = 'u8[262144]{0}', space=vmem, size = 0x40000, scoped, tag = 'output window, operand 0']
    #allocation4 [shape = 's32[2]{0}', space=sflag, size = 0x8, scoped, tag = 'scoped memory for tpu_custom_call.1']
    %16 = vsyncpa [#allocation4], 0
    %s17 = scalar_lea.sflag [#allocation4], 1
    %18 = vsyncpa %s17, 0
    loop: start=0, step=1, limit=4
    $region2: #{tpu_custom_call.1} parent=1 // loop_pre_header
      _
    $region3: #{tpu_custom_call.1} parent=1 // loop_header
      %s20 = sphi 0, %s24
      %p21 = scmp.ge.s32.totalorder %s20, 4
      %s30 = sphi 0, %s32
      %s33 = sphi 0, %s30
      %s34 = sphi 0, %s33
      %s50 = sphi 0, %s34
      %s54 = sphi 0, %s54
      %s56 = sphi 0, %s54
      %s57 = sphi 0, %s56
      %s71 = sphi 0, %s57
      %s75 = sphi 0, %s75
      %s77 = sphi 0, %s75
      %s78 = sphi 0, %s77
      %s92 = sphi 0, %s78
      %s96 = sphi 0, %s96
      %s98 = sphi 0, %s96
      %s99 = sphi 0, %s98
      %s113 = sphi 0, %s99
      %s117 = sphi 0, %s117
      %s119 = sphi 0, %s117
      %s120 = sphi 0, %s119
      %s134 = sphi 0, %s120
      %s138 = sphi 0, %s138
      %s140 = sphi 0, %s138
      %s141 = sphi 0, %s140
      %s155 = sphi 0, %s141
      %s159 = sphi 0, %s159
      %s161 = sphi 0, %s159
      %s162 = sphi 0, %s161
      %s176 = sphi 0, %s162
      %s180 = sphi 0, %s180
      %s182 = sphi 0, %s180
      %s183 = sphi 0, %s182
      %s197 = sphi 0, %s183
      %s201 = sphi 0, %s201
      %s203 = sphi 0, %s201
      %s204 = sphi 0, %s203
      %s218 = sphi 0, %s204
      %s222 = sphi 0, %s222
      %s224 = sphi 0, %s222
      %s225 = sphi 0, %s224
      %s239 = sphi 0, %s225
      %s243 = sphi 0, %s243
      %s245 = sphi 0, %s243
      %s246 = sphi 0, %s245
      %s260 = sphi 0, %s246
      %s266 = sphi 0, %s268
      %s269 = sphi 0, %s266
      %s270 = sphi 0, %s269
      %s286 = sphi 0, %s270
    $region4: #{tpu_custom_call.1} parent=1 // loop_header_branch
      %23 = sbr.rel (%p21) target = $region8
    $region5: #{tpu_custom_call.1} parent=1 // loop_body
      %s25 = ssub.s32 %s20, 1
      %s26 = ssub.s32 %s20, 2
      %s27 = sadd.s32 %s20, 1
      %s28 = ssub.s32 %s20, %s27
      %p29 = scmp.eq.s32.totalorder %s28, 0
      %s31 = sadd.s32 %s30, 1
      %s32 = scalar_select %p29, %s30, %s31
      %p35 = pneg %p29
      %p36 = scmp.eq.s32.totalorder %s20, 1
      %p37 = por %p35, %p36
      %p38 = scmp.ne.s32.totalorder %s30, %s33
      %p39 = scmp.eq.s32.totalorder %s20, 0
      %p40 = por %p38, %p39
      %p41 = scmp.ne.s32.totalorder %s30, %s33
      %p42 = scmp.eq.s32.totalorder %s25, 1
      %p43 = por %p41, %p42
      %p44 = scmp.ne.s32.totalorder %s33, %s34
      %p45 = scmp.eq.s32.totalorder %s25, 0
      %p46 = por %p44, %p45
      %p47 = scmp.ne.s32.totalorder %s33, %s34
      %p48 = scmp.eq.s32.totalorder %s26, 1
      %p49 = por %p47, %p48
      %p51 = scmp.ne.s32.totalorder %s34, %s50
      %p52 = scmp.eq.s32.totalorder %s26, 0
      %p53 = por %p51, %p52
      %s55 = sadd.s32 %s54, 1
      %p58 = scmp.eq.s32.totalorder %s20, 1
      %p59 = scmp.ne.s32.totalorder %s54, %s56
      %p60 = scmp.eq.s32.totalorder %s20, 0
      %p61 = por %p59, %p60
      %p62 = scmp.ne.s32.totalorder %s54, %s56
      %p63 = scmp.eq.s32.totalorder %s25, 1
      %p64 = por %p62, %p63
      %p65 = scmp.ne.s32.totalorder %s56, %s57
      %p66 = scmp.eq.s32.totalorder %s25, 0
      %p67 = por %p65, %p66
      %p68 = scmp.ne.s32.totalorder %s56, %s57
      %p69 = scmp.eq.s32.totalorder %s26, 1
      %p70 = por %p68, %p69
      %p72 = scmp.ne.s32.totalorder %s57, %s71
      %p73 = scmp.eq.s32.totalorder %s26, 0
      %p74 = por %p72, %p73
      %s76 = sadd.s32 %s75, 1
      %p79 = scmp.eq.s32.totalorder %s20, 1
      %p80 = scmp.ne.s32.totalorder %s75, %s77
      %p81 = scmp.eq.s32.totalorder %s20, 0
      %p82 = por %p80, %p81
      %p83 = scmp.ne.s32.totalorder %s75, %s77
      %p84 = scmp.eq.s32.totalorder %s25, 1
      %p85 = por %p83, %p84
      %p86 = scmp.ne.s32.totalorder %s77, %s78
      %p87 = scmp.eq.s32.totalorder %s25, 0
      %p88 = por %p86, %p87
      %p89 = scmp.ne.s32.totalorder %s77, %s78
      %p90 = scmp.eq.s32.totalorder %s26, 1
      %p91 = por %p89, %p90
      %p93 = scmp.ne.s32.totalorder %s78, %s92
      %p94 = scmp.eq.s32.totalorder %s26, 0
      %p95 = por %p93, %p94
      %s97 = sadd.s32 %s96, 1
      %p100 = scmp.eq.s32.totalorder %s20, 1
      %p101 = scmp.ne.s32.totalorder %s96, %s98
      %p102 = scmp.eq.s32.totalorder %s20, 0
      %p103 = por %p101, %p102
      %p104 = scmp.ne.s32.totalorder %s96, %s98
      %p105 = scmp.eq.s32.totalorder %s25, 1
      %p106 = por %p104, %p105
      %p107 = scmp.ne.s32.totalorder %s98, %s99
      %p108 = scmp.eq.s32.totalorder %s25, 0
      %p109 = por %p107, %p108
      %p110 = scmp.ne.s32.totalorder %s98, %s99
      %p111 = scmp.eq.s32.totalorder %s26, 1
      %p112 = por %p110, %p111
      %p114 = scmp.ne.s32.totalorder %s99, %s113
      %p115 = scmp.eq.s32.totalorder %s26, 0
      %p116 = por %p114, %p115
      %s118 = sadd.s32 %s117, 1
      %p121 = scmp.eq.s32.totalorder %s20, 1
      %p122 = scmp.ne.s32.totalorder %s117, %s119
      %p123 = scmp.eq.s32.totalorder %s20, 0
      %p124 = por %p122, %p123
      %p125 = scmp.ne.s32.totalorder %s117, %s119
      %p126 = scmp.eq.s32.totalorder %s25, 1
      %p127 = por %p125, %p126
      %p128 = scmp.ne.s32.totalorder %s119, %s120
      %p129 = scmp.eq.s32.totalorder %s25, 0
      %p130 = por %p128, %p129
      %p131 = scmp.ne.s32.totalorder %s119, %s120
      %p132 = scmp.eq.s32.totalorder %s26, 1
      %p133 = por %p131, %p132
      %p135 = scmp.ne.s32.totalorder %s120, %s134
      %p136 = scmp.eq.s32.totalorder %s26, 0
      %p137 = por %p135, %p136
      %s139 = sadd.s32 %s138, 1
      %p142 = scmp.eq.s32.totalorder %s20, 1
      %p143 = scmp.ne.s32.totalorder %s138, %s140
      %p144 = scmp.eq.s32.totalorder %s20, 0
      %p145 = por %p143, %p144
      %p146 = scmp.ne.s32.totalorder %s138, %s140
      %p147 = scmp.eq.s32.totalorder %s25, 1
      %p148 = por %p146, %p147
      %p149 = scmp.ne.s32.totalorder %s140, %s141
      %p150 = scmp.eq.s32.totalorder %s25, 0
      %p151 = por %p149, %p150
      %p152 = scmp.ne.s32.totalorder %s140, %s141
      %p153 = scmp.eq.s32.totalorder %s26, 1
      %p154 = por %p152, %p153
      %p156 = scmp.ne.s32.totalorder %s141, %s155
      %p157 = scmp.eq.s32.totalorder %s26, 0
      %p158 = por %p156, %p157
      %s160 = sadd.s32 %s159, 1
      %p163 = scmp.eq.s32.totalorder %s20, 1
      %p164 = scmp.ne.s32.totalorder %s159, %s161
      %p165 = scmp.eq.s32.totalorder %s20, 0
      %p166 = por %p164, %p165
      %p167 = scmp.ne.s32.totalorder %s159, %s161
      %p168 = scmp.eq.s32.totalorder %s25, 1
      %p169 = por %p167, %p168
      %p170 = scmp.ne.s32.totalorder %s161, %s162
      %p171 = scmp.eq.s32.totalorder %s25, 0
      %p172 = por %p170, %p171
      %p173 = scmp.ne.s32.totalorder %s161, %s162
      %p174 = scmp.eq.s32.totalorder %s26, 1
      %p175 = por %p173, %p174
      %p177 = scmp.ne.s32.totalorder %s162, %s176
      %p178 = scmp.eq.s32.totalorder %s26, 0
      %p179 = por %p177, %p178
      %s181 = sadd.s32 %s180, 1
      %p184 = scmp.eq.s32.totalorder %s20, 1
      %p185 = scmp.ne.s32.totalorder %s180, %s182
      %p186 = scmp.eq.s32.totalorder %s20, 0
      %p187 = por %p185, %p186
      %p188 = scmp.ne.s32.totalorder %s180, %s182
      %p189 = scmp.eq.s32.totalorder %s25, 1
      %p190 = por %p188, %p189
      %p191 = scmp.ne.s32.totalorder %s182, %s183
      %p192 = scmp.eq.s32.totalorder %s25, 0
      %p193 = por %p191, %p192
      %p194 = scmp.ne.s32.totalorder %s182, %s183
      %p195 = scmp.eq.s32.totalorder %s26, 1
      %p196 = por %p194, %p195
      %p198 = scmp.ne.s32.totalorder %s183, %s197
      %p199 = scmp.eq.s32.totalorder %s26, 0
      %p200 = por %p198, %p199
      %s202 = sadd.s32 %s201, 1
      %p205 = scmp.eq.s32.totalorder %s20, 1
      %p206 = scmp.ne.s32.totalorder %s201, %s203
      %p207 = scmp.eq.s32.totalorder %s20, 0
      %p208 = por %p206, %p207
      %p209 = scmp.ne.s32.totalorder %s201, %s203
      %p210 = scmp.eq.s32.totalorder %s25, 1
      %p211 = por %p209, %p210
      %p212 = scmp.ne.s32.totalorder %s203, %s204
      %p213 = scmp.eq.s32.totalorder %s25, 0
      %p214 = por %p212, %p213
      %p215 = scmp.ne.s32.totalorder %s203, %s204
      %p216 = scmp.eq.s32.totalorder %s26, 1
      %p217 = por %p215, %p216
      %p219 = scmp.ne.s32.totalorder %s204, %s218
      %p220 = scmp.eq.s32.totalorder %s26, 0
      %p221 = por %p219, %p220
      %s223 = sadd.s32 %s222, 1
      %p226 = scmp.eq.s32.totalorder %s20, 1
      %p227 = scmp.ne.s32.totalorder %s222, %s224
      %p228 = scmp.eq.s32.totalorder %s20, 0
      %p229 = por %p227, %p228
      %p230 = scmp.ne.s32.totalorder %s222, %s224
      %p231 = scmp.eq.s32.totalorder %s25, 1
      %p232 = por %p230, %p231
      %p233 = scmp.ne.s32.totalorder %s224, %s225
      %p234 = scmp.eq.s32.totalorder %s25, 0
      %p235 = por %p233, %p234
      %p236 = scmp.ne.s32.totalorder %s224, %s225
      %p237 = scmp.eq.s32.totalorder %s26, 1
      %p238 = por %p236, %p237
      %p240 = scmp.ne.s32.totalorder %s225, %s239
      %p241 = scmp.eq.s32.totalorder %s26, 0
      %p242 = por %p240, %p241
      %s244 = sadd.s32 %s243, 1
      %p247 = scmp.eq.s32.totalorder %s20, 1
      %p248 = scmp.ne.s32.totalorder %s243, %s245
      %p249 = scmp.eq.s32.totalorder %s20, 0
      %p250 = por %p248, %p249
      %p251 = scmp.ne.s32.totalorder %s243, %s245
      %p252 = scmp.eq.s32.totalorder %s25, 1
      %p253 = por %p251, %p252
      %p254 = scmp.ne.s32.totalorder %s245, %s246
      %p255 = scmp.eq.s32.totalorder %s25, 0
      %p256 = por %p254, %p255
      %p257 = scmp.ne.s32.totalorder %s245, %s246
      %p258 = scmp.eq.s32.totalorder %s26, 1
      %p259 = por %p257, %p258
      %p261 = scmp.ne.s32.totalorder %s246, %s260
      %p262 = scmp.eq.s32.totalorder %s26, 0
      %p263 = por %p261, %p262
      %s264 = ssub.s32 %s20, %s27
      %p265 = scmp.eq.s32.totalorder %s264, 0
      %s267 = sadd.s32 %s266, 1
      %s268 = scalar_select %p265, %s266, %s267
      %p271 = pneg %p265
      %p272 = scmp.eq.s32.totalorder %s20, 1
      %p273 = por %p271, %p272
      %p274 = scmp.ne.s32.totalorder %s266, %s269
      %p275 = scmp.eq.s32.totalorder %s20, 0
      %p276 = por %p274, %p275
      %p277 = scmp.ne.s32.totalorder %s266, %s269
      %p278 = scmp.eq.s32.totalorder %s25, 1
      %p279 = por %p277, %p278
      %p280 = scmp.ne.s32.totalorder %s269, %s270
      %p281 = scmp.eq.s32.totalorder %s25, 0
      %p282 = por %p280, %p281
      %p283 = scmp.ne.s32.totalorder %s269, %s270
      %p284 = scmp.eq.s32.totalorder %s26, 1
      %p285 = por %p283, %p284
      %p287 = scmp.ne.s32.totalorder %s270, %s286
      %p288 = scmp.eq.s32.totalorder %s26, 0
      %p289 = por %p287, %p288
      %p290 = scmp.le.s32.totalorder 1, %s20
      %p291 = scmp.lt.s32.totalorder %s20, 3
      %p292 = pnand %p290, %p291
      %p293 = pneg %p292
      // Predicated region
      $region9: #{tpu_custom_call.1} parent=5 // pred_check
        _
      $region10: #{tpu_custom_call.1} parent=5 // pred_check_branch
        %295 = sbr.rel (%p292) target = $region12
      $region11: #{tpu_custom_call.1} parent=5 // pred_region
        %s296 = ssub.s32 %s20, 1
        // Predicated region
        $region13: #{tpu_custom_call.1} parent=11 // pred_check
          %p297 = pneg %p67
        $region14: #{tpu_custom_call.1} parent=11 // pred_check_branch
          %299 = sbr.rel (%p297) target = $region16
        $region15: #{tpu_custom_call.1} parent=11 // pred_region
          _
        $region16: #{tpu_custom_call.1} parent=11 // pred_fallthru
          _
        // Predicated region
        $region17: #{tpu_custom_call.1} parent=11 // pred_check
          %p300 = pneg %p88
        $region18: #{tpu_custom_call.1} parent=11 // pred_check_branch
          %302 = sbr.rel (%p300) target = $region20
        $region19: #{tpu_custom_call.1} parent=11 // pred_region
          _
        $region20: #{tpu_custom_call.1} parent=11 // pred_fallthru
          _
        // Predicated region
        $region21: #{tpu_custom_call.1} parent=11 // pred_check
          %p303 = pneg %p109
        $region22: #{tpu_custom_call.1} parent=11 // pred_check_branch
          %305 = sbr.rel (%p303) target = $region24
        $region23: #{tpu_custom_call.1} parent=11 // pred_region
          _
        $region24: #{tpu_custom_call.1} parent=11 // pred_fallthru
          _
        // Predicated region
        $region25: #{tpu_custom_call.1} parent=11 // pred_check
          %p306 = pneg %p130
        $region26: #{tpu_custom_call.1} parent=11 // pred_check_branch
          %308 = sbr.rel (%p306) target = $region28
        $region27: #{tpu_custom_call.1} parent=11 // pred_region
          _
        $region28: #{tpu_custom_call.1} parent=11 // pred_fallthru
          _
        // Predicated region
        $region29: #{tpu_custom_call.1} parent=11 // pred_check
          %p309 = pneg %p151
        $region30: #{tpu_custom_call.1} parent=11 // pred_check_branch
          %311 = sbr.rel (%p309) target = $region32
        $region31: #{tpu_custom_call.1} parent=11 // pred_region
          _
        $region32: #{tpu_custom_call.1} parent=11 // pred_fallthru
          _
        // Predicated region
        $region33: #{tpu_custom_call.1} parent=11 // pred_check
          %p312 = pneg %p172
        $region34: #{tpu_custom_call.1} parent=11 // pred_check_branch
          %314 = sbr.rel (%p312) target = $region36
        $region35: #{tpu_custom_call.1} parent=11 // pred_region
          _
        $region36: #{tpu_custom_call.1} parent=11 // pred_fallthru
          _
        // Predicated region
        $region37: #{tpu_custom_call.1} parent=11 // pred_check
          %p315 = pneg %p193
        $region38: #{tpu_custom_call.1} parent=11 // pred_check_branch
          %317 = sbr.rel (%p315) target = $region40
        $region39: #{tpu_custom_call.1} parent=11 // pred_region
          _
        $region40: #{tpu_custom_call.1} parent=11 // pred_fallthru
          _
        // Predicated region
        $region41: #{tpu_custom_call.1} parent=11 // pred_check
          %p318 = pneg %p214
        $region42: #{tpu_custom_call.1} parent=11 // pred_check_branch
          %320 = sbr.rel (%p318) target = $region44
        $region43: #{tpu_custom_call.1} parent=11 // pred_region
          _
        $region44: #{tpu_custom_call.1} parent=11 // pred_fallthru
          _
        // Predicated region
        $region45: #{tpu_custom_call.1} parent=11 // pred_check
          %p321 = pneg %p235
        $region46: #{tpu_custom_call.1} parent=11 // pred_check_branch
          %323 = sbr.rel (%p321) target = $region48
        $region47: #{tpu_custom_call.1} parent=11 // pred_region
          _
        $region48: #{tpu_custom_call.1} parent=11 // pred_fallthru
          _
        // Predicated region
        $region49: #{tpu_custom_call.1} parent=11 // pred_check
          %p324 = pneg %p256
        $region50: #{tpu_custom_call.1} parent=11 // pred_check_branch
          %326 = sbr.rel (%p324) target = $region52
        $region51: #{tpu_custom_call.1} parent=11 // pred_region
          _
        $region52: #{tpu_custom_call.1} parent=11 // pred_fallthru
          _
      $region12: #{tpu_custom_call.1} parent=5 // pred_fallthru
        _
      %p327 = scmp.lt.s32.totalorder %s20, 2
      // Predicated region
      $region53: #{tpu_custom_call.1} parent=5 // pred_check
        %p328 = pneg %p327
      $region54: #{tpu_custom_call.1} parent=5 // pred_check_branch
        %330 = sbr.rel (%p328) target = $region56
      $region55: #{tpu_custom_call.1} parent=5 // pred_region
        // Predicated region
        $region57: #{tpu_custom_call.1} parent=55 // pred_check
          %p331 = pneg %p40
        $region58: #{tpu_custom_call.1} parent=55 // pred_check_branch
          %333 = sbr.rel (%p331) target = $region60
        $region59: #{tpu_custom_call.1} parent=55 // pred_region
          %s334 = sand.u32 %s30, 1
          %s335 = sand.u32 %s30, 1
          %s336 = smul.addr %s335, 256
          %s337 = scalar_lea.vmem [#allocation2], %s336
          %s338 = smul.u32 4, %s20
          %s339 = smul.addr %s338, 8
          %s340 = scalar_lea.vmem %s0, %s339
          // Predicated region
          $region61: #{tpu_custom_call.1} parent=59 // pred_check
            _
          $region62: #{tpu_custom_call.1} parent=59 // pred_check_branch
            %342 = sbr.rel (0) target = $region64
          $region63: #{tpu_custom_call.1} parent=59 // pred_region
            // Predicated region
            $region65: #{tpu_custom_call.1} parent=63 // pred_check
              _
            $region66: #{tpu_custom_call.1} parent=63 // pred_check_branch
              %344 = sbr.rel (0) target = $region68
            $region67: #{tpu_custom_call.1} parent=63 // pred_region
              loop: start=0, step=1, limit=1
              $region69: #{tpu_custom_call.1} parent=67 // loop_pre_header
                _
              $region70: #{tpu_custom_call.1} parent=67 // loop_header
                %s346 = sphi 0, %s350
                %p347 = scmp.ge.s32.totalorder %s346, 1
                %s351 = sphi %s340, %s340
                %s352 = sphi %s337, %s337
              $region71: #{tpu_custom_call.1} parent=67 // loop_header_branch
                %349 = sbr.rel (%p347) target = $region75
              $region72: #{tpu_custom_call.1} parent=67 // loop_body
                %v353 = vld [vmem:[%s351] sm:$0xff]
                %354 = vst [vmem:[%s352] sm:$0xff] %v353
                %v355 = vld [vmem:[%s351 + $0x8] sm:$0xff]
                %356 = vst [vmem:[%s352 + $0x8] sm:$0xff] %v355
                %v357 = vld [vmem:[%s351 + $0x10] sm:$0xff]
                %358 = vst [vmem:[%s352 + $0x10] sm:$0xff] %v357
                %v359 = vld [vmem:[%s351 + $0x18] sm:$0xff]
                %360 = vst [vmem:[%s352 + $0x18] sm:$0xff] %v359
                %v361 = vld [vmem:[%s351 + $0x40] sm:$0xff]
                %362 = vst [vmem:[%s352 + $0x20] sm:$0xff] %v361
                %v363 = vld [vmem:[%s351 + $0x48] sm:$0xff]
                %364 = vst [vmem:[%s352 + $0x28] sm:$0xff] %v363
                %v365 = vld [vmem:[%s351 + $0x50] sm:$0xff]
                %366 = vst [vmem:[%s352 + $0x30] sm:$0xff] %v365
                %v367 = vld [vmem:[%s351 + $0x58] sm:$0xff]
                %368 = vst [vmem:[%s352 + $0x38] sm:$0xff] %v367
                %v369 = vld [vmem:[%s351 + $0x80] sm:$0xff]
                %370 = vst [vmem:[%s352 + $0x40] sm:$0xff] %v369
                %v371 = vld [vmem:[%s351 + $0x88] sm:$0xff]
                %372 = vst [vmem:[%s352 + $0x48] sm:$0xff] %v371
                %v373 = vld [vmem:[%s351 + $0x90] sm:$0xff]
                %374 = vst [vmem:[%s352 + $0x50] sm:$0xff] %v373
                %v375 = vld [vmem:[%s351 + $0x98] sm:$0xff]
                %376 = vst [vmem:[%s352 + $0x58] sm:$0xff] %v375
                %v377 = vld [vmem:[%s351 + $0xc0] sm:$0xff]
                %378 = vst [vmem:[%s352 + $0x60] sm:$0xff] %v377
                %v379 = vld [vmem:[%s351 + $0xc8] sm:$0xff]
                %380 = vst [vmem:[%s352 + $0x68] sm:$0xff] %v379
                %v381 = vld [vmem:[%s351 + $0xd0] sm:$0xff]
                %382 = vst [vmem:[%s352 + $0x70] sm:$0xff] %v381
                %v383 = vld [vmem:[%s351 + $0xd8] sm:$0xff]
                %384 = vst [vmem:[%s352 + $0x78] sm:$0xff] %v383
                %v385 = vld [vmem:[%s351 + $0x100] sm:$0xff]
                %386 = vst [vmem:[%s352 + $0x80] sm:$0xff] %v385
                %v387 = vld [vmem:[%s351 + $0x108] sm:$0xff]
                %388 = vst [vmem:[%s352 + $0x88] sm:$0xff] %v387
                %v389 = vld [vmem:[%s351 + $0x110] sm:$0xff]
                %390 = vst [vmem:[%s352 + $0x90] sm:$0xff] %v389
                %v391 = vld [vmem:[%s351 + $0x118] sm:$0xff]
                %392 = vst [vmem:[%s352 + $0x98] sm:$0xff] %v391
                %v393 = vld [vmem:[%s351 + $0x140] sm:$0xff]
                %394 = vst [vmem:[%s352 + $0xa0] sm:$0xff] %v393
                %v395 = vld [vmem:[%s351 + $0x148] sm:$0xff]
                %396 = vst [vmem:[%s352 + $0xa8] sm:$0xff] %v395
                %v397 = vld [vmem:[%s351 + $0x150] sm:$0xff]
                %398 = vst [vmem:[%s352 + $0xb0] sm:$0xff] %v397
                %v399 = vld [vmem:[%s351 + $0x158] sm:$0xff]
                %400 = vst [vmem:[%s352 + $0xb8] sm:$0xff] %v399
                %v401 = vld [vmem:[%s351 + $0x180] sm:$0xff]
                %402 = vst [vmem:[%s352 + $0xc0] sm:$0xff] %v401
                %v403 = vld [vmem:[%s351 + $0x188] sm:$0xff]
                %404 = vst [vmem:[%s352 + $0xc8] sm:$0xff] %v403
                %v405 = vld [vmem:[%s351 + $0x190] sm:$0xff]
                %406 = vst [vmem:[%s352 + $0xd0] sm:$0xff] %v405
                %v407 = vld [vmem:[%s351 + $0x198] sm:$0xff]
                %408 = vst [vmem:[%s352 + $0xd8] sm:$0xff] %v407
                %v409 = vld [vmem:[%s351 + $0x1c0] sm:$0xff]
                %410 = vst [vmem:[%s352 + $0xe0] sm:$0xff] %v409
                %v411 = vld [vmem:[%s351 + $0x1c8] sm:$0xff]
                %412 = vst [vmem:[%s352 + $0xe8] sm:$0xff] %v411
                %v413 = vld [vmem:[%s351 + $0x1d0] sm:$0xff]
                %414 = vst [vmem:[%s352 + $0xf0] sm:$0xff] %v413
                %v415 = vld [vmem:[%s351 + $0x1d8] sm:$0xff]
                %416 = vst [vmem:[%s352 + $0xf8] sm:$0xff] %v415
              $region73: #{tpu_custom_call.1} parent=67 // loop_footer
                %s350 = sadd.s32 1, %s346
              $region74: #{tpu_custom_call.1} parent=67 // loop_footer_branch
                %345 = sbr.rel target = $region70
              $region75: #{tpu_custom_call.1} parent=67 // loop_exit
                _
            $region68: #{tpu_custom_call.1} parent=63 // pred_fallthru
              _
            // Predicated region
            $region76: #{tpu_custom_call.1} parent=63 // pred_check
              _
            $region77: #{tpu_custom_call.1} parent=63 // pred_check_branch
              %418 = sbr.rel target = $region79
            $region78: #{tpu_custom_call.1} parent=63 // pred_region
              _
            $region79: #{tpu_custom_call.1} parent=63 // pred_fallthru
              _
          $region64: #{tpu_custom_call.1} parent=59 // pred_fallthru
            _
          %419 = vnop
        $region60: #{tpu_custom_call.1} parent=55 // pred_fallthru
          _
      $region56: #{tpu_custom_call.1} parent=5 // pred_fallthru
        _
      %p420 = scmp.le.s32.totalorder 1, %s20
      %p421 = scmp.lt.s32.totalorder %s20, 3
      %p422 = pnand %p420, %p421
      %p423 = pneg %p422
      // Predicated region
      $region80: #{tpu_custom_call.1} parent=5 // pred_check
        _
      $region81: #{tpu_custom_call.1} parent=5 // pred_check_branch
        %425 = sbr.rel (%p422) target = $region83
      $region82: #{tpu_custom_call.1} parent=5 // pred_region
        %s426 = ssub.s32 %s20, 1
        %s427 = sand.u32 %s33, 1
        %s428 = sand.u32 %s33, 1
        %s429 = smul.addr %s428, 256
        %s430 = scalar_lea.vmem [#allocation2], %s429
        // Predicated region
        $region84: #{tpu_custom_call.1} parent=82 // pred_check
          %p431 = pneg %p46
        $region85: #{tpu_custom_call.1} parent=82 // pred_check_branch
          %433 = sbr.rel (%p431) target = $region87
        $region86: #{tpu_custom_call.1} parent=82 // pred_region
          _
        $region87: #{tpu_custom_call.1} parent=82 // pred_fallthru
          _
        %s434 = sand.u32 %s33, 1
        %s435 = sand.u32 %s33, 1
        %s436 = smul.addr %s435, 256
        %s437 = scalar_lea.vmem [#allocation2], %s436
        %p438 = pneg %p46
        %p439 = pneg %p43
        %p440 = pneg %p67
        %p441 = pneg %p64
        %p442 = pneg %p88
        %p443 = pneg %p85
        %p444 = pneg %p109
        %p445 = pneg %p106
        %p446 = pneg %p130
        %p447 = pneg %p127
        %p448 = pneg %p151
        %p449 = pneg %p148
        %p450 = pneg %p172
        %p451 = pneg %p169
        %p452 = pneg %p193
        %p453 = pneg %p190
        %p454 = pneg %p214
        %p455 = pneg %p211
        %p456 = pneg %p235
        %p457 = pneg %p232
        %p458 = pneg %p256
        %p459 = pneg %p253
        %p460 = pneg %p282
        %p461 = pneg %p279
        %s462 = sand.u32 %s269, 1
        %s463 = scalar_lea.sflag [#allocation4], %s462
        %s464 = sand.u32 %s269, 1
        %s465 = smul.addr %s464, 256
        %s466 = scalar_lea.vmem [#allocation3], %s465
        %s467 = smul.u32 4, %s25
        %s468 = smul.u32 4, %s25
        %v470 = vld [vmem:[%s8] sm:$0xff]
        %v471 = vld [vmem:[%s8 + $0x8] sm:$0xff]
        %v472 = vld [vmem:[%s8 + $0x10] sm:$0xff]
        %v473 = vld [vmem:[%s8 + $0x18] sm:$0xff]
        %v474 = vld [vmem:[%s8 + $0x20] sm:$0xff]
        %v475 = vld [vmem:[%s8 + $0x28] sm:$0xff]
        %v476 = vld [vmem:[%s8 + $0x30] sm:$0xff]
        %v477 = vld [vmem:[%s8 + $0x38] sm:$0xff]
        %v478 = vlaneseq
        %v479 = vand.u32 %v478, 127
        %v480 = vadd.s32 %v479, 128
        %v481 = vadd.s32 %v479, 256
        %v482 = vadd.s32 %v479, 384
        %vm483 = vcmp.lt.s32.totalorder %v479, 0
        %v484 = vsub.s32 0, %v479
        %v485 = vsel %vm483, %v484, %v479
        %v486 = vshrl.u32 %v485, 6
        %v487 = vand.u32 %v485, 63
        %v488 = vsub.s32 0, %v487
        %v489 = vsel %vm483, %v488, %v487
        %vm490 = vcmp.lt.s32.totalorder %v480, 0
        %v491 = vsub.s32 0, %v480
        %v492 = vsel %vm490, %v491, %v480
        %v493 = vshrl.u32 %v492, 6
        %v494 = vand.u32 %v492, 63
        %v495 = vsub.s32 0, %v494
        %v496 = vsel %vm490, %v495, %v494
        %vm497 = vcmp.lt.s32.totalorder %v481, 0
        %v498 = vsub.s32 0, %v481
        %v499 = vsel %vm497, %v498, %v481
        %v500 = vshrl.u32 %v499, 6
        %v501 = vand.u32 %v499, 63
        %v502 = vsub.s32 0, %v501
        %v503 = vsel %vm497, %v502, %v501
        %vm504 = vcmp.lt.s32.totalorder %v482, 0
        %v505 = vsub.s32 0, %v482
        %v506 = vsel %vm504, %v505, %v482
        %v507 = vshrl.u32 %v506, 6
        %v508 = vand.u32 %v506, 63
        %v509 = vsub.s32 0, %v508
        %v510 = vsel %vm504, %v509, %v508
        %vm511 = vcmp.ne.s32.totalorder %v489, 0
        %vm512 = vcmp.ne.s32.totalorder %v496, 0
        %vm513 = vcmp.ne.s32.totalorder %v503, 0
        %vm514 = vcmp.ne.s32.totalorder %v510, 0
        %vm515 = vcmp.lt.s32.totalorder %v489, 0
        %vm516 = vcmp.lt.s32.totalorder %v496, 0
        %vm517 = vcmp.lt.s32.totalorder %v503, 0
        %vm518 = vcmp.lt.s32.totalorder %v510, 0
        %vm519 = vmand %vm515, %vm511
        %vm520 = vmand %vm516, %vm512
        %vm521 = vmand %vm517, %vm513
        %vm522 = vmand %vm518, %vm514
        %v523 = vadd.s32 %v489, 64
        %v524 = vadd.s32 %v496, 64
        %v525 = vadd.s32 %v503, 64
        %v526 = vadd.s32 %v510, 64
        %v527 = vsel %vm519, %v523, %v489
        %v528 = vsel %vm520, %v524, %v496
        %v529 = vsel %vm521, %v525, %v503
        %v530 = vsel %vm522, %v526, %v510
        %v531 = vld [vmem:[%s430] sm:$0xff]
        %v532 = vld [vmem:[%s430 + $0x8] sm:$0xff]
        %v533 = vld [vmem:[%s430 + $0x10] sm:$0xff]
        %v534 = vld [vmem:[%s430 + $0x18] sm:$0xff]
        %v535 = vld [vmem:[%s430 + $0x20] sm:$0xff]
        %v536 = vld [vmem:[%s430 + $0x28] sm:$0xff]
        %v537 = vld [vmem:[%s430 + $0x30] sm:$0xff]
        %v538 = vld [vmem:[%s430 + $0x38] sm:$0xff]
        %v539 = vld [vmem:[%s430 + $0x40] sm:$0xff]
        %v540 = vld [vmem:[%s430 + $0x48] sm:$0xff]
        %v541 = vld [vmem:[%s430 + $0x50] sm:$0xff]
        %v542 = vld [vmem:[%s430 + $0x58] sm:$0xff]
        %v543 = vld [vmem:[%s430 + $0x60] sm:$0xff]
        %v544 = vld [vmem:[%s430 + $0x68] sm:$0xff]
        %v545 = vld [vmem:[%s430 + $0x70] sm:$0xff]
        %v546 = vld [vmem:[%s430 + $0x78] sm:$0xff]
        %v547 = vld [vmem:[%s430 + $0x80] sm:$0xff]
        %v548 = vld [vmem:[%s430 + $0x88] sm:$0xff]
        %v549 = vld [vmem:[%s430 + $0x90] sm:$0xff]
        %v550 = vld [vmem:[%s430 + $0x98] sm:$0xff]
        %v551 = vld [vmem:[%s430 + $0xa0] sm:$0xff]
        %v552 = vld [vmem:[%s430 + $0xa8] sm:$0xff]
        %v553 = vld [vmem:[%s430 + $0xb0] sm:$0xff]
        %v554 = vld [vmem:[%s430 + $0xb8] sm:$0xff]
        %v555 = vld [vmem:[%s430 + $0xc0] sm:$0xff]
        %v556 = vld [vmem:[%s430 + $0xc8] sm:$0xff]
        %v557 = vld [vmem:[%s430 + $0xd0] sm:$0xff]
        %v558 = vld [vmem:[%s430 + $0xd8] sm:$0xff]
        %v559 = vld [vmem:[%s430 + $0xe0] sm:$0xff]
        %v560 = vld [vmem:[%s430 + $0xe8] sm:$0xff]
        %v561 = vld [vmem:[%s430 + $0xf0] sm:$0xff]
        %v562 = vld [vmem:[%s430 + $0xf8] sm:$0xff]
        %v563 = vpack.c.bf16 %v535, %v531
        %v564 = vpack.c.bf16 %v536, %v532
        %v565 = vpack.c.bf16 %v537, %v533
        %v566 = vpack.c.bf16 %v538, %v534
        %v567 = vpack.c.bf16 %v543, %v539
        %v568 = vpack.c.bf16 %v544, %v540
        %v569 = vpack.c.bf16 %v545, %v541
        %v570 = vpack.c.bf16 %v546, %v542
        %v571 = vpack.c.bf16 %v551, %v547
        %v572 = vpack.c.bf16 %v552, %v548
        %v573 = vpack.c.bf16 %v553, %v549
        %v574 = vpack.c.bf16 %v554, %v550
        %v575 = vpack.c.bf16 %v559, %v555
        %v576 = vpack.c.bf16 %v560, %v556
        %v577 = vpack.c.bf16 %v561, %v557
        %v578 = vpack.c.bf16 %v562, %v558
        %v579 = vld [vmem:[%s1] sm:$0xff]
        %v580 = vld [vmem:[%s1 + $0x8] sm:$0xff]
        %v581 = vld [vmem:[%s1 + $0x10] sm:$0xff]
        %v582 = vld [vmem:[%s1 + $0x18] sm:$0xff]
        %v583 = vld [vmem:[%s1 + $0x20] sm:$0xff]
        %v584 = vld [vmem:[%s1 + $0x28] sm:$0xff]
        %v585 = vld [vmem:[%s1 + $0x30] sm:$0xff]
        %v586 = vld [vmem:[%s1 + $0x38] sm:$0xff]
        %v587 = vpack.c.bf16 %v580, %v579
        %v588 = vpack.c.bf16 %v582, %v581
        %v589 = vpack.c.bf16 %v584, %v583
        %v590 = vpack.c.bf16 %v586, %v585
        %592 = vset.pattern.permute.xlu0 0
        %593 = vperm.xlu0 %592, %v470
        %v594 = vpop.permute.xlu0 %593
        %597 = vset.pattern.permute.xlu0 0
        %598 = vperm.xlu0 %597, %v471
        %v599 = vpop.permute.xlu0 %598
        %602 = vset.pattern.permute.xlu0 0
        %603 = vperm.xlu0 %602, %v472
        %v604 = vpop.permute.xlu0 %603
        %607 = vset.pattern.permute.xlu0 0
        %608 = vperm.xlu0 %607, %v473
        %v609 = vpop.permute.xlu0 %608
        %612 = vset.pattern.permute.xlu0 0
        %613 = vperm.xlu0 %612, %v474
        %v614 = vpop.permute.xlu0 %613
        %617 = vset.pattern.permute.xlu0 0
        %618 = vperm.xlu0 %617, %v475
        %v619 = vpop.permute.xlu0 %618
        %622 = vset.pattern.permute.xlu0 0
        %623 = vperm.xlu0 %622, %v476
        %v624 = vpop.permute.xlu0 %623
        %627 = vset.pattern.permute.xlu0 0
        %628 = vperm.xlu0 %627, %v477
        %v629 = vpop.permute.xlu0 %628
        %vm631 = vcmask 523264
        %v633 = vsel %vm631, %v587, 0
        %v636 = vsel %vm631, %v588, 0
        %v639 = vsel %vm631, %v589, 0
        %v642 = vsel %vm631, %v590, 0
        %644 = vmatpush.bf16.msra.mxu0 0
        %645 = vmatpush.bf16.msra.mxu0 0
        %646 = vmatpush.bf16.msra.mxu0 0
        %647 = vmatpush.bf16.msra.mxu0 0
        %648 = vmatpush.bf16.msra.mxu0 %v575
        %649 = vmatpush.bf16.msra.mxu0 %v571
        %650 = vmatpush.bf16.msra.mxu0 %v567
        %651 = vmatpush.bf16.msra.mxu0 %v563
        %652 = vmatmul.bf16.gmra.mxu0 %v633
        %v653 = vpop.f32.mrf.mxu0
        %v654 = vadd.f32 %v594, %v653
        %v655 = vpop.f32.mrf.mxu0
        %v656 = vadd.f32 %v599, %v655
        %657 = vmatmul.bf16.gmra.mxu0 %v636
        %v658 = vpop.f32.mrf.mxu0
        %v659 = vadd.f32 %v604, %v658
        %v660 = vpop.f32.mrf.mxu0
        %v661 = vadd.f32 %v609, %v660
        %662 = vmatmul.bf16.gmra.mxu0 %v639
        %v663 = vpop.f32.mrf.mxu0
        %v664 = vadd.f32 %v614, %v663
        %v665 = vpop.f32.mrf.mxu0
        %v666 = vadd.f32 %v619, %v665
        %667 = vmatmul.bf16.gmra.mxu0 %v642
        %v668 = vpop.f32.mrf.mxu0
        %v669 = vadd.f32 %v624, %v668
        %v670 = vpop.f32.mrf.mxu0
        %v671 = vadd.f32 %v629, %v670
        %672 = vdwg.mxu0
        %673 = vmatpush.bf16.msra.mxu0 0
        %674 = vmatpush.bf16.msra.mxu0 0
        %675 = vmatpush.bf16.msra.mxu0 0
        %676 = vmatpush.bf16.msra.mxu0 0
        %677 = vmatpush.bf16.msra.mxu0 %v576
        %678 = vmatpush.bf16.msra.mxu0 %v572
        %679 = vmatpush.bf16.msra.mxu0 %v568
        %680 = vmatpush.bf16.msra.mxu0 %v564
        %681 = vmatmul.bf16.gmra.mxu0 %v633
        %v682 = vpop.f32.mrf.mxu0
        %v683 = vadd.f32 %v594, %v682
        %v684 = vpop.f32.mrf.mxu0
        %v685 = vadd.f32 %v599, %v684
        %686 = vmatmul.bf16.gmra.mxu0 %v636
        %v687 = vpop.f32.mrf.mxu0
        %v688 = vadd.f32 %v604, %v687
        %v689 = vpop.f32.mrf.mxu0
        %v690 = vadd.f32 %v609, %v689
        %691 = vmatmul.bf16.gmra.mxu0 %v639
        %v692 = vpop.f32.mrf.mxu0
        %v693 = vadd.f32 %v614, %v692
        %v694 = vpop.f32.mrf.mxu0
        %v695 = vadd.f32 %v619, %v694
        %696 = vmatmul.bf16.gmra.mxu0 %v642
        %v697 = vpop.f32.mrf.mxu0
        %v698 = vadd.f32 %v624, %v697
        %v699 = vpop.f32.mrf.mxu0
        %v700 = vadd.f32 %v629, %v699
        %701 = vdwg.mxu0
        %702 = vmatpush.bf16.msra.mxu0 0
        %703 = vmatpush.bf16.msra.mxu0 0
        %704 = vmatpush.bf16.msra.mxu0 0
        %705 = vmatpush.bf16.msra.mxu0 0
        %706 = vmatpush.bf16.msra.mxu0 %v577
        %707 = vmatpush.bf16.msra.mxu0 %v573
        %708 = vmatpush.bf16.msra.mxu0 %v569
        %709 = vmatpush.bf16.msra.mxu0 %v565
        %710 = vmatmul.bf16.gmra.mxu0 %v633
        %v711 = vpop.f32.mrf.mxu0
        %v712 = vadd.f32 %v594, %v711
        %v713 = vpop.f32.mrf.mxu0
        %v714 = vadd.f32 %v599, %v713
        %715 = vmatmul.bf16.gmra.mxu0 %v636
        %v716 = vpop.f32.mrf.mxu0
        %v717 = vadd.f32 %v604, %v716
        %v718 = vpop.f32.mrf.mxu0
        %v719 = vadd.f32 %v609, %v718
        %720 = vmatmul.bf16.gmra.mxu0 %v639
        %v721 = vpop.f32.mrf.mxu0
        %v722 = vadd.f32 %v614, %v721
        %v723 = vpop.f32.mrf.mxu0
        %v724 = vadd.f32 %v619, %v723
        %725 = vmatmul.bf16.gmra.mxu0 %v642
        %v726 = vpop.f32.mrf.mxu0
        %v727 = vadd.f32 %v624, %v726
        %v728 = vpop.f32.mrf.mxu0
        %v729 = vadd.f32 %v629, %v728
        %730 = vdwg.mxu0
        %731 = vmatpush.bf16.msra.mxu0 0
        %732 = vmatpush.bf16.msra.mxu0 0
        %733 = vmatpush.bf16.msra.mxu0 0
        %734 = vmatpush.bf16.msra.mxu0 0
        %735 = vmatpush.bf16.msra.mxu0 %v578
        %736 = vmatpush.bf16.msra.mxu0 %v574
        %737 = vmatpush.bf16.msra.mxu0 %v570
        %738 = vmatpush.bf16.msra.mxu0 %v566
        %739 = vmatmul.bf16.gmra.mxu0 %v633
        %v740 = vpop.f32.mrf.mxu0
        %v741 = vadd.f32 %v594, %v740
        %v742 = vpop.f32.mrf.mxu0
        %v743 = vadd.f32 %v599, %v742
        %744 = vmatmul.bf16.gmra.mxu0 %v636
        %v745 = vpop.f32.mrf.mxu0
        %v746 = vadd.f32 %v604, %v745
        %v747 = vpop.f32.mrf.mxu0
        %v748 = vadd.f32 %v609, %v747
        %749 = vmatmul.bf16.gmra.mxu0 %v639
        %v750 = vpop.f32.mrf.mxu0
        %v751 = vadd.f32 %v614, %v750
        %v752 = vpop.f32.mrf.mxu0
        %v753 = vadd.f32 %v619, %v752
        %754 = vmatmul.bf16.gmra.mxu0 %v642
        %v755 = vpop.f32.mrf.mxu0
        %v756 = vadd.f32 %v624, %v755
        %v757 = vpop.f32.mrf.mxu0
        %v758 = vadd.f32 %v629, %v757
        %759 = vdwg.mxu0
        %v760 = vmax.f32 %v654, 0.0
        %v761 = vmax.f32 %v683, 0.0
        %v762 = vmax.f32 %v712, 0.0
        %v763 = vmax.f32 %v741, 0.0
        %v764 = vmax.f32 %v656, 0.0
        %v765 = vmax.f32 %v685, 0.0
        %v766 = vmax.f32 %v714, 0.0
        %v767 = vmax.f32 %v743, 0.0
        %v768 = vmax.f32 %v659, 0.0
        %v769 = vmax.f32 %v688, 0.0
        %v770 = vmax.f32 %v717, 0.0
        %v771 = vmax.f32 %v746, 0.0
        %v772 = vmax.f32 %v661, 0.0
        %v773 = vmax.f32 %v690, 0.0
        %v774 = vmax.f32 %v719, 0.0
        %v775 = vmax.f32 %v748, 0.0
        %v776 = vmax.f32 %v664, 0.0
        %v777 = vmax.f32 %v693, 0.0
        %v778 = vmax.f32 %v722, 0.0
        %v779 = vmax.f32 %v751, 0.0
        %v780 = vmax.f32 %v666, 0.0
        %v781 = vmax.f32 %v695, 0.0
        %v782 = vmax.f32 %v724, 0.0
        %v783 = vmax.f32 %v753, 0.0
        %v784 = vmax.f32 %v669, 0.0
        %v785 = vmax.f32 %v698, 0.0
        %v786 = vmax.f32 %v727, 0.0
        %v787 = vmax.f32 %v756, 0.0
        %v788 = vmax.f32 %v671, 0.0
        %v789 = vmax.f32 %v700, 0.0
        %v790 = vmax.f32 %v729, 0.0
        %v791 = vmax.f32 %v758, 0.0
        %792 = vset.pattern.permute.xlu0 1
        %793 = vperm.xlu0 %792, %v470
        %v794 = vpop.permute.xlu0 %793
        %796 = vset.pattern.permute.xlu0 1
        %797 = vperm.xlu0 %796, %v471
        %v798 = vpop.permute.xlu0 %797
        %800 = vset.pattern.permute.xlu0 1
        %801 = vperm.xlu0 %800, %v472
        %v802 = vpop.permute.xlu0 %801
        %804 = vset.pattern.permute.xlu0 1
        %805 = vperm.xlu0 %804, %v473
        %v806 = vpop.permute.xlu0 %805
        %808 = vset.pattern.permute.xlu0 1
        %809 = vperm.xlu0 %808, %v474
        %v810 = vpop.permute.xlu0 %809
        %812 = vset.pattern.permute.xlu0 1
        %813 = vperm.xlu0 %812, %v475
        %v814 = vpop.permute.xlu0 %813
        %816 = vset.pattern.permute.xlu0 1
        %817 = vperm.xlu0 %816, %v476
        %v818 = vpop.permute.xlu0 %817
        %820 = vset.pattern.permute.xlu0 1
        %821 = vperm.xlu0 %820, %v477
        %v822 = vpop.permute.xlu0 %821
        %v824 = vadd.f32 %v760, %v794
        %v825 = vadd.f32 %v761, %v794
        %v826 = vadd.f32 %v762, %v794
        %v827 = vadd.f32 %v763, %v794
        %v828 = vadd.f32 %v764, %v798
        %v829 = vadd.f32 %v765, %v798
        %v830 = vadd.f32 %v766, %v798
        %v831 = vadd.f32 %v767, %v798
        %v832 = vadd.f32 %v768, %v802
        %v833 = vadd.f32 %v769, %v802
        %v834 = vadd.f32 %v770, %v802
        %v835 = vadd.f32 %v771, %v802
        %v836 = vadd.f32 %v772, %v806
        %v837 = vadd.f32 %v773, %v806
        %v838 = vadd.f32 %v774, %v806
        %v839 = vadd.f32 %v775, %v806
        %v840 = vadd.f32 %v776, %v810
        %v841 = vadd.f32 %v777, %v810
        %v842 = vadd.f32 %v778, %v810
        %v843 = vadd.f32 %v779, %v810
        %v844 = vadd.f32 %v780, %v814
        %v845 = vadd.f32 %v781, %v814
        %v846 = vadd.f32 %v782, %v814
        %v847 = vadd.f32 %v783, %v814
        %v848 = vadd.f32 %v784, %v818
        %v849 = vadd.f32 %v785, %v818
        %v850 = vadd.f32 %v786, %v818
        %v851 = vadd.f32 %v787, %v818
        %v852 = vadd.f32 %v788, %v822
        %v853 = vadd.f32 %v789, %v822
        %v854 = vadd.f32 %v790, %v822
        %v855 = vadd.f32 %v791, %v822
        %v856 = vadd.s32 %v527, 4294967295
        %v857 = vadd.s32 %v528, 4294967295
        %v858 = vadd.s32 %v529, 4294967295
        %v859 = vadd.s32 %v530, 4294967295
        %vm860 = vcmp.ge.s32.totalorder %v856, 0
        %vm861 = vcmp.ge.s32.totalorder %v857, 0
        %vm862 = vcmp.ge.s32.totalorder %v858, 0
        %vm863 = vcmp.ge.s32.totalorder %v859, 0
        %vm864 = vcmp.lt.s32.totalorder %v856, 64
        %vm865 = vcmp.lt.s32.totalorder %v857, 64
        %vm866 = vcmp.lt.s32.totalorder %v858, 64
        %vm867 = vcmp.lt.s32.totalorder %v859, 64
        %vm868 = vmand %vm860, %vm864
        %vm869 = vmand %vm861, %vm865
        %vm870 = vmand %vm862, %vm866
        %vm871 = vmand %vm863, %vm867
        %v872 = vadd.s32 %v527, 1
        %v873 = vadd.s32 %v528, 1
        %v874 = vadd.s32 %v529, 1
        %v875 = vadd.s32 %v530, 1
        %vm876 = vcmp.ge.s32.totalorder %v872, 0
        %vm877 = vcmp.ge.s32.totalorder %v873, 0
        %vm878 = vcmp.ge.s32.totalorder %v874, 0
        %vm879 = vcmp.ge.s32.totalorder %v875, 0
        %vm880 = vcmp.lt.s32.totalorder %v872, 64
        %vm881 = vcmp.lt.s32.totalorder %v873, 64
        %vm882 = vcmp.lt.s32.totalorder %v874, 64
        %vm883 = vcmp.lt.s32.totalorder %v875, 64
        %vm884 = vmand %vm876, %vm880
        %vm885 = vmand %vm877, %vm881
        %vm886 = vmand %vm878, %vm882
        %vm887 = vmand %vm879, %vm883
        %s888 = scalar_lea.vmem %s3, 448
        %v889 = vld [vmem:[%s888] sm:$0xff]
        %v890 = vld [vmem:[%s888 + $0x8] sm:$0xff]
        %v891 = vld [vmem:[%s888 + $0x10] sm:$0xff]
        %v892 = vld [vmem:[%s888 + $0x18] sm:$0xff]
        %v893 = vld [vmem:[%s888 + $0x20] sm:$0xff]
        %v894 = vld [vmem:[%s888 + $0x28] sm:$0xff]
        %v895 = vld [vmem:[%s888 + $0x30] sm:$0xff]
        %v896 = vld [vmem:[%s888 + $0x38] sm:$0xff]
        %v897 = vpack.c.bf16 %v890, %v889
        %v898 = vpack.c.bf16 %v892, %v891
        %v899 = vpack.c.bf16 %v894, %v893
        %v900 = vpack.c.bf16 %v896, %v895
        %v901 = vpack.c.bf16 %v852, %v852
        %v902 = vpack.c.bf16 %v853, %v853
        %v903 = vpack.c.bf16 %v854, %v854
        %v904 = vpack.c.bf16 %v855, %v855
        %905 = vrot.lane.b32.xlu0 %v824, 1
        %v906 = vpop.permute.xlu0 %905
        %907 = vrot.lane.b32.xlu0 %v825, 1
        %v908 = vpop.permute.xlu0 %907
        %909 = vrot.lane.b32.xlu0 %v826, 1
        %v910 = vpop.permute.xlu0 %909
        %911 = vrot.lane.b32.xlu0 %v827, 1
        %v912 = vpop.permute.xlu0 %911
        %vm913 = vcmp.lt.s32.totalorder %v479, 1
        %v914 = vsel %vm913, %v910, %v912
        %v915 = vsel %vm913, %v908, %v910
        %v916 = vsel %vm913, %v906, %v908
        %v917 = vsel %vm913, %v912, %v906
        %v918 = vsel %vm868, 1, 0
        %v919 = vsel %vm869, 1, 0
        %v920 = vsel %vm870, 1, 0
        %v921 = vsel %vm871, 1, 0
        %vm922 = vcmp.eq.s32.totalorder %v918, 1
        %vm923 = vcmp.eq.s32.totalorder %v919, 1
        %vm924 = vcmp.eq.s32.totalorder %v920, 1
        %vm925 = vcmp.eq.s32.totalorder %v921, 1
        %v926 = vsel %vm922, %v917, 0.0
        %v927 = vsel %vm923, %v916, 0.0
        %v928 = vsel %vm924, %v915, 0.0
        %v929 = vsel %vm925, %v914, 0.0
        %930 = vrot.lane.b32.xlu0 %v824, 127
        %v931 = vpop.permute.xlu0 %930
        %932 = vrot.lane.b32.xlu0 %v825, 127
        %v933 = vpop.permute.xlu0 %932
        %934 = vrot.lane.b32.xlu0 %v826, 127
        %v935 = vpop.permute.xlu0 %934
        %936 = vrot.lane.b32.xlu0 %v827, 127
        %v937 = vpop.permute.xlu0 %936
        %vm938 = vcmp.lt.s32.totalorder %v479, 127
        %v939 = vsel %vm938, %v935, %v937
        %v940 = vsel %vm938, %v933, %v935
        %v941 = vsel %vm938, %v931, %v933
        %v942 = vsel %vm938, %v937, %v931
        %v943 = vsel %vm884, 1, 0
        %v944 = vsel %vm885, 1, 0
        %v945 = vsel %vm886, 1, 0
        %v946 = vsel %vm887, 1, 0
        %vm947 = vcmp.eq.s32.totalorder %v943, 1
        %vm948 = vcmp.eq.s32.totalorder %v944, 1
        %vm949 = vcmp.eq.s32.totalorder %v945, 1
        %vm950 = vcmp.eq.s32.totalorder %v946, 1
        %v951 = vsel %vm947, %v941, 0.0
        %v952 = vsel %vm948, %v940, 0.0
        %v953 = vsel %vm949, %v939, 0.0
        %v954 = vsel %vm950, %v942, 0.0
        %v955 = vpack.c.bf16 %v824, %v926
        %v956 = vpack.c.bf16 %v825, %v927
        %v957 = vpack.c.bf16 %v826, %v928
        %v958 = vpack.c.bf16 %v827, %v929
        %v959 = vpack.c.bf16 %v951, %v951
        %v960 = vpack.c.bf16 %v952, %v952
        %v961 = vpack.c.bf16 %v953, %v953
        %v962 = vpack.c.bf16 %v954, %v954
        %v963 = vld [vmem:[%s2] sm:$0xff]
        %v964 = vpack.c.bf16 %v963, %v963
        %v965 = vld [vmem:[%s9] sm:$0xff]
        %967 = vset.pattern.permute.xlu0 0
        %968 = vperm.xlu0 %967, %v965
        %v969 = vpop.permute.xlu0 %968
        %vm971 = vcmask 195584
        %v973 = vsel %vm971, %v964, 0
        %vm975 = vcmask 1043456
        %v977 = vsel %vm975, %v959, 0
        %v980 = vsel %vm975, %v960, 0
        %v983 = vsel %vm975, %v961, 0
        %v986 = vsel %vm975, %v962, 0
        %988 = vmatpush.bf16.msra.mxu0 0
        %989 = vmatpush.bf16.msra.mxu0 0
        %990 = vmatpush.bf16.msra.mxu0 0
        %991 = vmatpush.bf16.msra.mxu0 0
        %992 = vmatpush.bf16.msra.mxu0 0
        %993 = vmatpush.bf16.msra.mxu0 0
        %994 = vmatpush.bf16.msra.mxu0 %v977
        %995 = vmatpush.bf16.msra.mxu0 %v955
        %996 = vmatmul.bf16.gmra.mxu0 %v973
        %v997 = vpop.f32.mrf.mxu0
        %v998 = vadd.f32 %v969, %v997
        %v999 = vpop.f32.mrf.mxu0
        %1000 = vdwg.mxu0
        %1001 = vmatpush.bf16.msra.mxu0 0
        %1002 = vmatpush.bf16.msra.mxu0 0
        %1003 = vmatpush.bf16.msra.mxu0 0
        %1004 = vmatpush.bf16.msra.mxu0 0
        %1005 = vmatpush.bf16.msra.mxu0 0
        %1006 = vmatpush.bf16.msra.mxu0 0
        %1007 = vmatpush.bf16.msra.mxu0 %v980
        %1008 = vmatpush.bf16.msra.mxu0 %v956
        %1009 = vmatmul.bf16.gmra.mxu0 %v973
        %v1010 = vpop.f32.mrf.mxu0
        %v1011 = vadd.f32 %v969, %v1010
        %v1012 = vpop.f32.mrf.mxu0
        %1013 = vdwg.mxu0
        %1014 = vmatpush.bf16.msra.mxu0 0
        %1015 = vmatpush.bf16.msra.mxu0 0
        %1016 = vmatpush.bf16.msra.mxu0 0
        %1017 = vmatpush.bf16.msra.mxu0 0
        %1018 = vmatpush.bf16.msra.mxu0 0
        %1019 = vmatpush.bf16.msra.mxu0 0
        %1020 = vmatpush.bf16.msra.mxu0 %v983
        %1021 = vmatpush.bf16.msra.mxu0 %v957
        %1022 = vmatmul.bf16.gmra.mxu0 %v973
        %v1023 = vpop.f32.mrf.mxu0
        %v1024 = vadd.f32 %v969, %v1023
        %v1025 = vpop.f32.mrf.mxu0
        %1026 = vdwg.mxu0
        %1027 = vmatpush.bf16.msra.mxu0 0
        %1028 = vmatpush.bf16.msra.mxu0 0
        %1029 = vmatpush.bf16.msra.mxu0 0
        %1030 = vmatpush.bf16.msra.mxu0 0
        %1031 = vmatpush.bf16.msra.mxu0 0
        %1032 = vmatpush.bf16.msra.mxu0 0
        %1033 = vmatpush.bf16.msra.mxu0 %v986
        %1034 = vmatpush.bf16.msra.mxu0 %v958
        %1035 = vmatmul.bf16.gmra.mxu0 %v973
        %v1036 = vpop.f32.mrf.mxu0
        %v1037 = vadd.f32 %v969, %v1036
        %v1038 = vpop.f32.mrf.mxu0
        %1039 = vdwg.mxu0
        %v1040 = vmax.f32 %v998, 0.0
        %v1041 = vmax.f32 %v1011, 0.0
        %v1042 = vmax.f32 %v1024, 0.0
        %v1043 = vmax.f32 %v1037, 0.0
        %1044 = vset.pattern.permute.xlu0 1
        %1045 = vperm.xlu0 %1044, %v965
        %v1046 = vpop.permute.xlu0 %1045
        %v1048 = vadd.f32 %v1040, %v1046
        %v1049 = vadd.f32 %v1041, %v1046
        %v1050 = vadd.f32 %v1042, %v1046
        %v1051 = vadd.f32 %v1043, %v1046
        %v1052 = vld [vmem:[%s3] sm:$0xff]
        %v1053 = vld [vmem:[%s3 + $0x8] sm:$0xff]
        %v1054 = vld [vmem:[%s3 + $0x10] sm:$0xff]
        %v1055 = vld [vmem:[%s3 + $0x18] sm:$0xff]
        %v1056 = vld [vmem:[%s3 + $0x20] sm:$0xff]
        %v1057 = vld [vmem:[%s3 + $0x28] sm:$0xff]
        %v1058 = vld [vmem:[%s3 + $0x30] sm:$0xff]
        %v1059 = vld [vmem:[%s3 + $0x38] sm:$0xff]
        %v1060 = vpack.c.bf16 %v1053, %v1052
        %v1061 = vpack.c.bf16 %v1055, %v1054
        %v1062 = vpack.c.bf16 %v1057, %v1056
        %v1063 = vpack.c.bf16 %v1059, %v1058
        %v1064 = vpack.c.bf16 %v1048, %v1048
        %v1065 = vpack.c.bf16 %v1049, %v1049
        %v1066 = vpack.c.bf16 %v1050, %v1050
        %v1067 = vpack.c.bf16 %v1051, %v1051
        %vm1068 = vcmask 64512
        %v1070 = vsel %vm1068, %v1060, 0
        %v1073 = vsel %vm1068, %v1061, 0
        %v1076 = vsel %vm1068, %v1062, 0
        %v1079 = vsel %vm1068, %v1063, 0
        %v1082 = vsel %vm975, %v1064, 0
        %v1085 = vsel %vm975, %v1065, 0
        %v1088 = vsel %vm975, %v1066, 0
        %v1091 = vsel %vm975, %v1067, 0
        %1093 = vmatpush.bf16.msra.mxu0 0
        %1094 = vmatpush.bf16.msra.mxu0 0
        %1095 = vmatpush.bf16.msra.mxu0 0
        %1096 = vmatpush.bf16.msra.mxu0 0
        %1097 = vmatpush.bf16.msra.mxu0 0
        %1098 = vmatpush.bf16.msra.mxu0 0
        %1099 = vmatpush.bf16.msra.mxu0 0
        %1100 = vmatpush.bf16.msra.mxu0 %v1082
        %1101 = vmatmul.bf16.gmra.mxu0 %v1070
        %v1102 = vpop.f32.mrf.mxu0
        %v1103 = vadd.f32 0.0, %v1102
        %v1104 = vpop.f32.mrf.mxu0
        %v1105 = vadd.f32 0.0, %v1104
        %1106 = vmatmul.bf16.gmra.mxu0 %v1073
        %v1107 = vpop.f32.mrf.mxu0
        %v1108 = vadd.f32 0.0, %v1107
        %v1109 = vpop.f32.mrf.mxu0
        %v1110 = vadd.f32 0.0, %v1109
        %1111 = vmatmul.bf16.gmra.mxu0 %v1076
        %v1112 = vpop.f32.mrf.mxu0
        %v1113 = vadd.f32 0.0, %v1112
        %v1114 = vpop.f32.mrf.mxu0
        %v1115 = vadd.f32 0.0, %v1114
        %1116 = vmatmul.bf16.gmra.mxu0 %v1079
        %v1117 = vpop.f32.mrf.mxu0
        %v1118 = vadd.f32 0.0, %v1117
        %v1119 = vpop.f32.mrf.mxu0
        %v1120 = vadd.f32 0.0, %v1119
        %1121 = vdwg.mxu0
        %1122 = vmatpush.bf16.msra.mxu0 0
        %1123 = vmatpush.bf16.msra.mxu0 0
        %1124 = vmatpush.bf16.msra.mxu0 0
        %1125 = vmatpush.bf16.msra.mxu0 0
        %1126 = vmatpush.bf16.msra.mxu0 0
        %1127 = vmatpush.bf16.msra.mxu0 0
        %1128 = vmatpush.bf16.msra.mxu0 0
        %1129 = vmatpush.bf16.msra.mxu0 %v1085
        %1130 = vmatmul.bf16.gmra.mxu0 %v1070
        %v1131 = vpop.f32.mrf.mxu0
        %v1132 = vadd.f32 0.0, %v1131
        %v1133 = vpop.f32.mrf.mxu0
        %v1134 = vadd.f32 0.0, %v1133
        %1135 = vmatmul.bf16.gmra.mxu0 %v1073
        %v1136 = vpop.f32.mrf.mxu0
        %v1137 = vadd.f32 0.0, %v1136
        %v1138 = vpop.f32.mrf.mxu0
        %v1139 = vadd.f32 0.0, %v1138
        %1140 = vmatmul.bf16.gmra.mxu0 %v1076
        %v1141 = vpop.f32.mrf.mxu0
        %v1142 = vadd.f32 0.0, %v1141
        %v1143 = vpop.f32.mrf.mxu0
        %v1144 = vadd.f32 0.0, %v1143
        %1145 = vmatmul.bf16.gmra.mxu0 %v1079
        %v1146 = vpop.f32.mrf.mxu0
        %v1147 = vadd.f32 0.0, %v1146
        %v1148 = vpop.f32.mrf.mxu0
        %v1149 = vadd.f32 0.0, %v1148
        %1150 = vdwg.mxu0
        %1151 = vmatpush.bf16.msra.mxu0 0
        %1152 = vmatpush.bf16.msra.mxu0 0
        %1153 = vmatpush.bf16.msra.mxu0 0
        %1154 = vmatpush.bf16.msra.mxu0 0
        %1155 = vmatpush.bf16.msra.mxu0 0
        %1156 = vmatpush.bf16.msra.mxu0 0
        %1157 = vmatpush.bf16.msra.mxu0 0
        %1158 = vmatpush.bf16.msra.mxu0 %v1088
        %1159 = vmatmul.bf16.gmra.mxu0 %v1070
        %v1160 = vpop.f32.mrf.mxu0
        %v1161 = vadd.f32 0.0, %v1160
        %v1162 = vpop.f32.mrf.mxu0
        %v1163 = vadd.f32 0.0, %v1162
        %1164 = vmatmul.bf16.gmra.mxu0 %v1073
        %v1165 = vpop.f32.mrf.mxu0
        %v1166 = vadd.f32 0.0, %v1165
        %v1167 = vpop.f32.mrf.mxu0
        %v1168 = vadd.f32 0.0, %v1167
        %1169 = vmatmul.bf16.gmra.mxu0 %v1076
        %v1170 = vpop.f32.mrf.mxu0
        %v1171 = vadd.f32 0.0, %v1170
        %v1172 = vpop.f32.mrf.mxu0
        %v1173 = vadd.f32 0.0, %v1172
        %1174 = vmatmul.bf16.gmra.mxu0 %v1079
        %v1175 = vpop.f32.mrf.mxu0
        %v1176 = vadd.f32 0.0, %v1175
        %v1177 = vpop.f32.mrf.mxu0
        %v1178 = vadd.f32 0.0, %v1177
        %1179 = vdwg.mxu0
        %1180 = vmatpush.bf16.msra.mxu0 0
        %1181 = vmatpush.bf16.msra.mxu0 0
        %1182 = vmatpush.bf16.msra.mxu0 0
        %1183 = vmatpush.bf16.msra.mxu0 0
        %1184 = vmatpush.bf16.msra.mxu0 0
        %1185 = vmatpush.bf16.msra.mxu0 0
        %1186 = vmatpush.bf16.msra.mxu0 0
        %1187 = vmatpush.bf16.msra.mxu0 %v1091
        %1188 = vmatmul.bf16.gmra.mxu0 %v1070
        %v1189 = vpop.f32.mrf.mxu0
        %v1190 = vadd.f32 0.0, %v1189
        %v1191 = vpop.f32.mrf.mxu0
        %v1192 = vadd.f32 0.0, %v1191
        %1193 = vmatmul.bf16.gmra.mxu0 %v1073
        %v1194 = vpop.f32.mrf.mxu0
        %v1195 = vadd.f32 0.0, %v1194
        %v1196 = vpop.f32.mrf.mxu0
        %v1197 = vadd.f32 0.0, %v1196
        %1198 = vmatmul.bf16.gmra.mxu0 %v1076
        %v1199 = vpop.f32.mrf.mxu0
        %v1200 = vadd.f32 0.0, %v1199
        %v1201 = vpop.f32.mrf.mxu0
        %v1202 = vadd.f32 0.0, %v1201
        %1203 = vmatmul.bf16.gmra.mxu0 %v1079
        %v1204 = vpop.f32.mrf.mxu0
        %v1205 = vadd.f32 0.0, %v1204
        %v1206 = vpop.f32.mrf.mxu0
        %v1207 = vadd.f32 0.0, %v1206
        %1208 = vdwg.mxu0
        %v1210 = vsel %vm1068, %v897, 0
        %v1213 = vsel %vm1068, %v898, 0
        %v1216 = vsel %vm1068, %v899, 0
        %v1219 = vsel %vm1068, %v900, 0
        %v1222 = vsel %vm975, %v901, 0
        %v1225 = vsel %vm975, %v902, 0
        %v1228 = vsel %vm975, %v903, 0
        %v1231 = vsel %vm975, %v904, 0
        %1233 = vmatpush.bf16.msra.mxu0 0
        %1234 = vmatpush.bf16.msra.mxu0 0
        %1235 = vmatpush.bf16.msra.mxu0 0
        %1236 = vmatpush.bf16.msra.mxu0 0
        %1237 = vmatpush.bf16.msra.mxu0 0
        %1238 = vmatpush.bf16.msra.mxu0 0
        %1239 = vmatpush.bf16.msra.mxu0 0
        %1240 = vmatpush.bf16.msra.mxu0 %v1222
        %1241 = vmatmul.bf16.gmra.mxu0 %v1210
        %v1242 = vpop.f32.mrf.mxu0
        %v1243 = vadd.f32 %v1103, %v1242
        %v1244 = vpop.f32.mrf.mxu0
        %v1245 = vadd.f32 %v1105, %v1244
        %1246 = vmatmul.bf16.gmra.mxu0 %v1213
        %v1247 = vpop.f32.mrf.mxu0
        %v1248 = vadd.f32 %v1108, %v1247
        %v1249 = vpop.f32.mrf.mxu0
        %v1250 = vadd.f32 %v1110, %v1249
        %1251 = vmatmul.bf16.gmra.mxu0 %v1216
        %v1252 = vpop.f32.mrf.mxu0
        %v1253 = vadd.f32 %v1113, %v1252
        %v1254 = vpop.f32.mrf.mxu0
        %v1255 = vadd.f32 %v1115, %v1254
        %1256 = vmatmul.bf16.gmra.mxu0 %v1219
        %v1257 = vpop.f32.mrf.mxu0
        %v1258 = vadd.f32 %v1118, %v1257
        %v1259 = vpop.f32.mrf.mxu0
        %v1260 = vadd.f32 %v1120, %v1259
        %1261 = vdwg.mxu0
        %1262 = vmatpush.bf16.msra.mxu0 0
        %1263 = vmatpush.bf16.msra.mxu0 0
        %1264 = vmatpush.bf16.msra.mxu0 0
        %1265 = vmatpush.bf16.msra.mxu0 0
        %1266 = vmatpush.bf16.msra.mxu0 0
        %1267 = vmatpush.bf16.msra.mxu0 0
        %1268 = vmatpush.bf16.msra.mxu0 0
        %1269 = vmatpush.bf16.msra.mxu0 %v1225
        %1270 = vmatmul.bf16.gmra.mxu0 %v1210
        %v1271 = vpop.f32.mrf.mxu0
        %v1272 = vadd.f32 %v1132, %v1271
        %v1273 = vpop.f32.mrf.mxu0
        %v1274 = vadd.f32 %v1134, %v1273
        %1275 = vmatmul.bf16.gmra.mxu0 %v1213
        %v1276 = vpop.f32.mrf.mxu0
        %v1277 = vadd.f32 %v1137, %v1276
        %v1278 = vpop.f32.mrf.mxu0
        %v1279 = vadd.f32 %v1139, %v1278
        %1280 = vmatmul.bf16.gmra.mxu0 %v1216
        %v1281 = vpop.f32.mrf.mxu0
        %v1282 = vadd.f32 %v1142, %v1281
        %v1283 = vpop.f32.mrf.mxu0
        %v1284 = vadd.f32 %v1144, %v1283
        %1285 = vmatmul.bf16.gmra.mxu0 %v1219
        %v1286 = vpop.f32.mrf.mxu0
        %v1287 = vadd.f32 %v1147, %v1286
        %v1288 = vpop.f32.mrf.mxu0
        %v1289 = vadd.f32 %v1149, %v1288
        %1290 = vdwg.mxu0
        %1291 = vmatpush.bf16.msra.mxu0 0
        %1292 = vmatpush.bf16.msra.mxu0 0
        %1293 = vmatpush.bf16.msra.mxu0 0
        %1294 = vmatpush.bf16.msra.mxu0 0
        %1295 = vmatpush.bf16.msra.mxu0 0
        %1296 = vmatpush.bf16.msra.mxu0 0
        %1297 = vmatpush.bf16.msra.mxu0 0
        %1298 = vmatpush.bf16.msra.mxu0 %v1228
        %1299 = vmatmul.bf16.gmra.mxu0 %v1210
        %v1300 = vpop.f32.mrf.mxu0
        %v1301 = vadd.f32 %v1161, %v1300
        %v1302 = vpop.f32.mrf.mxu0
        %v1303 = vadd.f32 %v1163, %v1302
        %1304 = vmatmul.bf16.gmra.mxu0 %v1213
        %v1305 = vpop.f32.mrf.mxu0
        %v1306 = vadd.f32 %v1166, %v1305
        %v1307 = vpop.f32.mrf.mxu0
        %v1308 = vadd.f32 %v1168, %v1307
        %1309 = vmatmul.bf16.gmra.mxu0 %v1216
        %v1310 = vpop.f32.mrf.mxu0
        %v1311 = vadd.f32 %v1171, %v1310
        %v1312 = vpop.f32.mrf.mxu0
        %v1313 = vadd.f32 %v1173, %v1312
        %1314 = vmatmul.bf16.gmra.mxu0 %v1219
        %v1315 = vpop.f32.mrf.mxu0
        %v1316 = vadd.f32 %v1176, %v1315
        %v1317 = vpop.f32.mrf.mxu0
        %v1318 = vadd.f32 %v1178, %v1317
        %1319 = vdwg.mxu0
        %1320 = vmatpush.bf16.msra.mxu0 0
        %1321 = vmatpush.bf16.msra.mxu0 0
        %1322 = vmatpush.bf16.msra.mxu0 0
        %1323 = vmatpush.bf16.msra.mxu0 0
        %1324 = vmatpush.bf16.msra.mxu0 0
        %1325 = vmatpush.bf16.msra.mxu0 0
        %1326 = vmatpush.bf16.msra.mxu0 0
        %1327 = vmatpush.bf16.msra.mxu0 %v1231
        %1328 = vmatmul.bf16.gmra.mxu0 %v1210
        %v1329 = vpop.f32.mrf.mxu0
        %v1330 = vadd.f32 %v1190, %v1329
        %v1331 = vpop.f32.mrf.mxu0
        %v1332 = vadd.f32 %v1192, %v1331
        %1333 = vmatmul.bf16.gmra.mxu0 %v1213
        %v1334 = vpop.f32.mrf.mxu0
        %v1335 = vadd.f32 %v1195, %v1334
        %v1336 = vpop.f32.mrf.mxu0
        %v1337 = vadd.f32 %v1197, %v1336
        %1338 = vmatmul.bf16.gmra.mxu0 %v1216
        %v1339 = vpop.f32.mrf.mxu0
        %v1340 = vadd.f32 %v1200, %v1339
        %v1341 = vpop.f32.mrf.mxu0
        %v1342 = vadd.f32 %v1202, %v1341
        %1343 = vmatmul.bf16.gmra.mxu0 %v1219
        %v1344 = vpop.f32.mrf.mxu0
        %v1345 = vadd.f32 %v1205, %v1344
        %v1346 = vpop.f32.mrf.mxu0
        %v1347 = vadd.f32 %v1207, %v1346
        %1348 = vdwg.mxu0
        %v1349 = vadd.f32 %v1048, %v828
        %v1350 = vadd.f32 %v1049, %v829
        %v1351 = vadd.f32 %v1050, %v830
        %v1352 = vadd.f32 %v1051, %v831
        %1353 = vrot.lane.b32.xlu0 %v1349, 1
        %v1354 = vpop.permute.xlu0 %1353
        %1355 = vrot.lane.b32.xlu0 %v1350, 1
        %v1356 = vpop.permute.xlu0 %1355
        %1357 = vrot.lane.b32.xlu0 %v1351, 1
        %v1358 = vpop.permute.xlu0 %1357
        %1359 = vrot.lane.b32.xlu0 %v1352, 1
        %v1360 = vpop.permute.xlu0 %1359
        %v1361 = vsel %vm913, %v1358, %v1360
        %v1362 = vsel %vm913, %v1356, %v1358
        %v1363 = vsel %vm913, %v1354, %v1356
        %v1364 = vsel %vm913, %v1360, %v1354
        %v1365 = vsel %vm922, %v1364, 0.0
        %v1366 = vsel %vm923, %v1363, 0.0
        %v1367 = vsel %vm924, %v1362, 0.0
        %v1368 = vsel %vm925, %v1361, 0.0
        %1369 = vrot.lane.b32.xlu0 %v1349, 127
        %v1370 = vpop.permute.xlu0 %1369
        %1371 = vrot.lane.b32.xlu0 %v1350, 127
        %v1372 = vpop.permute.xlu0 %1371
        %1373 = vrot.lane.b32.xlu0 %v1351, 127
        %v1374 = vpop.permute.xlu0 %1373
        %1375 = vrot.lane.b32.xlu0 %v1352, 127
        %v1376 = vpop.permute.xlu0 %1375
        %v1377 = vsel %vm938, %v1374, %v1376
        %v1378 = vsel %vm938, %v1372, %v1374
        %v1379 = vsel %vm938, %v1370, %v1372
        %v1380 = vsel %vm938, %v1376, %v1370
        %v1381 = vsel %vm947, %v1379, 0.0
        %v1382 = vsel %vm948, %v1378, 0.0
        %v1383 = vsel %vm949, %v1377, 0.0
        %v1384 = vsel %vm950, %v1380, 0.0
        %v1385 = vpack.c.bf16 %v1349, %v1365
        %v1386 = vpack.c.bf16 %v1350, %v1366
        %v1387 = vpack.c.bf16 %v1351, %v1367
        %v1388 = vpack.c.bf16 %v1352, %v1368
        %v1389 = vpack.c.bf16 %v1381, %v1381
        %v1390 = vpack.c.bf16 %v1382, %v1382
        %v1391 = vpack.c.bf16 %v1383, %v1383
        %v1392 = vpack.c.bf16 %v1384, %v1384
        %s1393 = scalar_lea.vmem %s2, 8
        %v1394 = vld [vmem:[%s1393] sm:$0xff]
        %v1395 = vpack.c.bf16 %v1394, %v1394
        %s1396 = scalar_lea.vmem %s9, 8
        %v1397 = vld [vmem:[%s1396] sm:$0xff]
        %1399 = vset.pattern.permute.xlu0 0
        %1400 = vperm.xlu0 %1399, %v1397
        %v1401 = vpop.permute.xlu0 %1400
        %v1404 = vsel %vm971, %v1395, 0
        %v1407 = vsel %vm975, %v1389, 0
        %v1410 = vsel %vm975, %v1390, 0
        %v1413 = vsel %vm975, %v1391, 0
        %v1416 = vsel %vm975, %v1392, 0
        %1418 = vmatpush.bf16.msra.mxu0 0
        %1419 = vmatpush.bf16.msra.mxu0 0
        %1420 = vmatpush.bf16.msra.mxu0 0
        %1421 = vmatpush.bf16.msra.mxu0 0
        %1422 = vmatpush.bf16.msra.mxu0 0
        %1423 = vmatpush.bf16.msra.mxu0 0
        %1424 = vmatpush.bf16.msra.mxu0 %v1407
        %1425 = vmatpush.bf16.msra.mxu0 %v1385
        %1426 = vmatmul.bf16.gmra.mxu0 %v1404
        %v1427 = vpop.f32.mrf.mxu0
        %v1428 = vadd.f32 %v1401, %v1427
        %v1429 = vpop.f32.mrf.mxu0
        %1430 = vdwg.mxu0
        %1431 = vmatpush.bf16.msra.mxu0 0
        %1432 = vmatpush.bf16.msra.mxu0 0
        %1433 = vmatpush.bf16.msra.mxu0 0
        %1434 = vmatpush.bf16.msra.mxu0 0
        %1435 = vmatpush.bf16.msra.mxu0 0
        %1436 = vmatpush.bf16.msra.mxu0 0
        %1437 = vmatpush.bf16.msra.mxu0 %v1410
        %1438 = vmatpush.bf16.msra.mxu0 %v1386
        %1439 = vmatmul.bf16.gmra.mxu0 %v1404
        %v1440 = vpop.f32.mrf.mxu0
        %v1441 = vadd.f32 %v1401, %v1440
        %v1442 = vpop.f32.mrf.mxu0
        %1443 = vdwg.mxu0
        %1444 = vmatpush.bf16.msra.mxu0 0
        %1445 = vmatpush.bf16.msra.mxu0 0
        %1446 = vmatpush.bf16.msra.mxu0 0
        %1447 = vmatpush.bf16.msra.mxu0 0
        %1448 = vmatpush.bf16.msra.mxu0 0
        %1449 = vmatpush.bf16.msra.mxu0 0
        %1450 = vmatpush.bf16.msra.mxu0 %v1413
        %1451 = vmatpush.bf16.msra.mxu0 %v1387
        %1452 = vmatmul.bf16.gmra.mxu0 %v1404
        %v1453 = vpop.f32.mrf.mxu0
        %v1454 = vadd.f32 %v1401, %v1453
        %v1455 = vpop.f32.mrf.mxu0
        %1456 = vdwg.mxu0
        %1457 = vmatpush.bf16.msra.mxu0 0
        %1458 = vmatpush.bf16.msra.mxu0 0
        %1459 = vmatpush.bf16.msra.mxu0 0
        %1460 = vmatpush.bf16.msra.mxu0 0
        %1461 = vmatpush.bf16.msra.mxu0 0
        %1462 = vmatpush.bf16.msra.mxu0 0
        %1463 = vmatpush.bf16.msra.mxu0 %v1416
        %1464 = vmatpush.bf16.msra.mxu0 %v1388
        %1465 = vmatmul.bf16.gmra.mxu0 %v1404
        %v1466 = vpop.f32.mrf.mxu0
        %v1467 = vadd.f32 %v1401, %v1466
        %v1468 = vpop.f32.mrf.mxu0
        %1469 = vdwg.mxu0
        %v1470 = vmax.f32 %v1428, 0.0
        %v1471 = vmax.f32 %v1441, 0.0
        %v1472 = vmax.f32 %v1454, 0.0
        %v1473 = vmax.f32 %v1467, 0.0
        %1474 = vset.pattern.permute.xlu0 1
        %1475 = vperm.xlu0 %1474, %v1397
        %v1476 = vpop.permute.xlu0 %1475
        %v1478 = vadd.f32 %v1470, %v1476
        %v1479 = vadd.f32 %v1471, %v1476
        %v1480 = vadd.f32 %v1472, %v1476
        %v1481 = vadd.f32 %v1473, %v1476
        %s1482 = scalar_lea.vmem %s3, 64
        %v1483 = vld [vmem:[%s1482] sm:$0xff]
        %v1484 = vld [vmem:[%s1482 + $0x8] sm:$0xff]
        %v1485 = vld [vmem:[%s1482 + $0x10] sm:$0xff]
        %v1486 = vld [vmem:[%s1482 + $0x18] sm:$0xff]
        %v1487 = vld [vmem:[%s1482 + $0x20] sm:$0xff]
        %v1488 = vld [vmem:[%s1482 + $0x28] sm:$0xff]
        %v1489 = vld [vmem:[%s1482 + $0x30] sm:$0xff]
        %v1490 = vld [vmem:[%s1482 + $0x38] sm:$0xff]
        %v1491 = vpack.c.bf16 %v1484, %v1483
        %v1492 = vpack.c.bf16 %v1486, %v1485
        %v1493 = vpack.c.bf16 %v1488, %v1487
        %v1494 = vpack.c.bf16 %v1490, %v1489
        %v1495 = vpack.c.bf16 %v1478, %v1478
        %v1496 = vpack.c.bf16 %v1479, %v1479
        %v1497 = vpack.c.bf16 %v1480, %v1480
        %v1498 = vpack.c.bf16 %v1481, %v1481
        %v1500 = vsel %vm1068, %v1491, 0
        %v1503 = vsel %vm1068, %v1492, 0
        %v1506 = vsel %vm1068, %v1493, 0
        %v1509 = vsel %vm1068, %v1494, 0
        %v1512 = vsel %vm975, %v1495, 0
        %v1515 = vsel %vm975, %v1496, 0
        %v1518 = vsel %vm975, %v1497, 0
        %v1521 = vsel %vm975, %v1498, 0
        %1523 = vmatpush.bf16.msra.mxu0 0
        %1524 = vmatpush.bf16.msra.mxu0 0
        %1525 = vmatpush.bf16.msra.mxu0 0
        %1526 = vmatpush.bf16.msra.mxu0 0
        %1527 = vmatpush.bf16.msra.mxu0 0
        %1528 = vmatpush.bf16.msra.mxu0 0
        %1529 = vmatpush.bf16.msra.mxu0 0
        %1530 = vmatpush.bf16.msra.mxu0 %v1512
        %1531 = vmatmul.bf16.gmra.mxu0 %v1500
        %v1532 = vpop.f32.mrf.mxu0
        %v1533 = vadd.f32 0.0, %v1532
        %v1534 = vpop.f32.mrf.mxu0
        %v1535 = vadd.f32 0.0, %v1534
        %1536 = vmatmul.bf16.gmra.mxu0 %v1503
        %v1537 = vpop.f32.mrf.mxu0
        %v1538 = vadd.f32 0.0, %v1537
        %v1539 = vpop.f32.mrf.mxu0
        %v1540 = vadd.f32 0.0, %v1539
        %1541 = vmatmul.bf16.gmra.mxu0 %v1506
        %v1542 = vpop.f32.mrf.mxu0
        %v1543 = vadd.f32 0.0, %v1542
        %v1544 = vpop.f32.mrf.mxu0
        %v1545 = vadd.f32 0.0, %v1544
        %1546 = vmatmul.bf16.gmra.mxu0 %v1509
        %v1547 = vpop.f32.mrf.mxu0
        %v1548 = vadd.f32 0.0, %v1547
        %v1549 = vpop.f32.mrf.mxu0
        %v1550 = vadd.f32 0.0, %v1549
        %1551 = vdwg.mxu0
        %1552 = vmatpush.bf16.msra.mxu0 0
        %1553 = vmatpush.bf16.msra.mxu0 0
        %1554 = vmatpush.bf16.msra.mxu0 0
        %1555 = vmatpush.bf16.msra.mxu0 0
        %1556 = vmatpush.bf16.msra.mxu0 0
        %1557 = vmatpush.bf16.msra.mxu0 0
        %1558 = vmatpush.bf16.msra.mxu0 0
        %1559 = vmatpush.bf16.msra.mxu0 %v1515
        %1560 = vmatmul.bf16.gmra.mxu0 %v1500
        %v1561 = vpop.f32.mrf.mxu0
        %v1562 = vadd.f32 0.0, %v1561
        %v1563 = vpop.f32.mrf.mxu0
        %v1564 = vadd.f32 0.0, %v1563
        %1565 = vmatmul.bf16.gmra.mxu0 %v1503
        %v1566 = vpop.f32.mrf.mxu0
        %v1567 = vadd.f32 0.0, %v1566
        %v1568 = vpop.f32.mrf.mxu0
        %v1569 = vadd.f32 0.0, %v1568
        %1570 = vmatmul.bf16.gmra.mxu0 %v1506
        %v1571 = vpop.f32.mrf.mxu0
        %v1572 = vadd.f32 0.0, %v1571
        %v1573 = vpop.f32.mrf.mxu0
        %v1574 = vadd.f32 0.0, %v1573
        %1575 = vmatmul.bf16.gmra.mxu0 %v1509
        %v1576 = vpop.f32.mrf.mxu0
        %v1577 = vadd.f32 0.0, %v1576
        %v1578 = vpop.f32.mrf.mxu0
        %v1579 = vadd.f32 0.0, %v1578
        %1580 = vdwg.mxu0
        %1581 = vmatpush.bf16.msra.mxu0 0
        %1582 = vmatpush.bf16.msra.mxu0 0
        %1583 = vmatpush.bf16.msra.mxu0 0
        %1584 = vmatpush.bf16.msra.mxu0 0
        %1585 = vmatpush.bf16.msra.mxu0 0
        %1586 = vmatpush.bf16.msra.mxu0 0
        %1587 = vmatpush.bf16.msra.mxu0 0
        %1588 = vmatpush.bf16.msra.mxu0 %v1518
        %1589 = vmatmul.bf16.gmra.mxu0 %v1500
        %v1590 = vpop.f32.mrf.mxu0
        %v1591 = vadd.f32 0.0, %v1590
        %v1592 = vpop.f32.mrf.mxu0
        %v1593 = vadd.f32 0.0, %v1592
        %1594 = vmatmul.bf16.gmra.mxu0 %v1503
        %v1595 = vpop.f32.mrf.mxu0
        %v1596 = vadd.f32 0.0, %v1595
        %v1597 = vpop.f32.mrf.mxu0
        %v1598 = vadd.f32 0.0, %v1597
        %1599 = vmatmul.bf16.gmra.mxu0 %v1506
        %v1600 = vpop.f32.mrf.mxu0
        %v1601 = vadd.f32 0.0, %v1600
        %v1602 = vpop.f32.mrf.mxu0
        %v1603 = vadd.f32 0.0, %v1602
        %1604 = vmatmul.bf16.gmra.mxu0 %v1509
        %v1605 = vpop.f32.mrf.mxu0
        %v1606 = vadd.f32 0.0, %v1605
        %v1607 = vpop.f32.mrf.mxu0
        %v1608 = vadd.f32 0.0, %v1607
        %1609 = vdwg.mxu0
        %1610 = vmatpush.bf16.msra.mxu0 0
        %1611 = vmatpush.bf16.msra.mxu0 0
        %1612 = vmatpush.bf16.msra.mxu0 0
        %1613 = vmatpush.bf16.msra.mxu0 0
        %1614 = vmatpush.bf16.msra.mxu0 0
        %1615 = vmatpush.bf16.msra.mxu0 0
        %1616 = vmatpush.bf16.msra.mxu0 0
        %1617 = vmatpush.bf16.msra.mxu0 %v1521
        %1618 = vmatmul.bf16.gmra.mxu0 %v1500
        %v1619 = vpop.f32.mrf.mxu0
        %v1620 = vadd.f32 0.0, %v1619
        %v1621 = vpop.f32.mrf.mxu0
        %v1622 = vadd.f32 0.0, %v1621
        %1623 = vmatmul.bf16.gmra.mxu0 %v1503
        %v1624 = vpop.f32.mrf.mxu0
        %v1625 = vadd.f32 0.0, %v1624
        %v1626 = vpop.f32.mrf.mxu0
        %v1627 = vadd.f32 0.0, %v1626
        %1628 = vmatmul.bf16.gmra.mxu0 %v1506
        %v1629 = vpop.f32.mrf.mxu0
        %v1630 = vadd.f32 0.0, %v1629
        %v1631 = vpop.f32.mrf.mxu0
        %v1632 = vadd.f32 0.0, %v1631
        %1633 = vmatmul.bf16.gmra.mxu0 %v1509
        %v1634 = vpop.f32.mrf.mxu0
        %v1635 = vadd.f32 0.0, %v1634
        %v1636 = vpop.f32.mrf.mxu0
        %v1637 = vadd.f32 0.0, %v1636
        %1638 = vdwg.mxu0
        %v1639 = vadd.f32 %v1243, %v1533
        %v1640 = vadd.f32 %v1272, %v1562
        %v1641 = vadd.f32 %v1301, %v1591
        %v1642 = vadd.f32 %v1330, %v1620
        %v1643 = vadd.f32 %v1245, %v1535
        %v1644 = vadd.f32 %v1274, %v1564
        %v1645 = vadd.f32 %v1303, %v1593
        %v1646 = vadd.f32 %v1332, %v1622
        %v1647 = vadd.f32 %v1248, %v1538
        %v1648 = vadd.f32 %v1277, %v1567
        %v1649 = vadd.f32 %v1306, %v1596
        %v1650 = vadd.f32 %v1335, %v1625
        %v1651 = vadd.f32 %v1250, %v1540
        %v1652 = vadd.f32 %v1279, %v1569
        %v1653 = vadd.f32 %v1308, %v1598
        %v1654 = vadd.f32 %v1337, %v1627
        %v1655 = vadd.f32 %v1253, %v1543
        %v1656 = vadd.f32 %v1282, %v1572
        %v1657 = vadd.f32 %v1311, %v1601
        %v1658 = vadd.f32 %v1340, %v1630
        %v1659 = vadd.f32 %v1255, %v1545
        %v1660 = vadd.f32 %v1284, %v1574
        %v1661 = vadd.f32 %v1313, %v1603
        %v1662 = vadd.f32 %v1342, %v1632
        %v1663 = vadd.f32 %v1258, %v1548
        %v1664 = vadd.f32 %v1287, %v1577
        %v1665 = vadd.f32 %v1316, %v1606
        %v1666 = vadd.f32 %v1345, %v1635
        %v1667 = vadd.f32 %v1260, %v1550
        %v1668 = vadd.f32 %v1289, %v1579
        %v1669 = vadd.f32 %v1318, %v1608
        %v1670 = vadd.f32 %v1347, %v1637
        %v1671 = vadd.f32 %v1478, %v832
        %v1672 = vadd.f32 %v1479, %v833
        %v1673 = vadd.f32 %v1480, %v834
        %v1674 = vadd.f32 %v1481, %v835
        %1675 = vrot.lane.b32.xlu0 %v1671, 1
        %v1676 = vpop.permute.xlu0 %1675
        %1677 = vrot.lane.b32.xlu0 %v1672, 1
        %v1678 = vpop.permute.xlu0 %1677
        %1679 = vrot.lane.b32.xlu0 %v1673, 1
        %v1680 = vpop.permute.xlu0 %1679
        %1681 = vrot.lane.b32.xlu0 %v1674, 1
        %v1682 = vpop.permute.xlu0 %1681
        %v1683 = vsel %vm913, %v1680, %v1682
        %v1684 = vsel %vm913, %v1678, %v1680
        %v1685 = vsel %vm913, %v1676, %v1678
        %v1686 = vsel %vm913, %v1682, %v1676
        %v1687 = vsel %vm922, %v1686, 0.0
        %v1688 = vsel %vm923, %v1685, 0.0
        %v1689 = vsel %vm924, %v1684, 0.0
        %v1690 = vsel %vm925, %v1683, 0.0
        %1691 = vrot.lane.b32.xlu0 %v1671, 127
        %v1692 = vpop.permute.xlu0 %1691
        %1693 = vrot.lane.b32.xlu0 %v1672, 127
        %v1694 = vpop.permute.xlu0 %1693
        %1695 = vrot.lane.b32.xlu0 %v1673, 127
        %v1696 = vpop.permute.xlu0 %1695
        %1697 = vrot.lane.b32.xlu0 %v1674, 127
        %v1698 = vpop.permute.xlu0 %1697
        %v1699 = vsel %vm938, %v1696, %v1698
        %v1700 = vsel %vm938, %v1694, %v1696
        %v1701 = vsel %vm938, %v1692, %v1694
        %v1702 = vsel %vm938, %v1698, %v1692
        %v1703 = vsel %vm947, %v1701, 0.0
        %v1704 = vsel %vm948, %v1700, 0.0
        %v1705 = vsel %vm949, %v1699, 0.0
        %v1706 = vsel %vm950, %v1702, 0.0
        %v1707 = vpack.c.bf16 %v1671, %v1687
        %v1708 = vpack.c.bf16 %v1672, %v1688
        %v1709 = vpack.c.bf16 %v1673, %v1689
        %v1710 = vpack.c.bf16 %v1674, %v1690
        %v1711 = vpack.c.bf16 %v1703, %v1703
        %v1712 = vpack.c.bf16 %v1704, %v1704
        %v1713 = vpack.c.bf16 %v1705, %v1705
        %v1714 = vpack.c.bf16 %v1706, %v1706
        %s1715 = scalar_lea.vmem %s2, 16
        %v1716 = vld [vmem:[%s1715] sm:$0xff]
        %v1717 = vpack.c.bf16 %v1716, %v1716
        %s1718 = scalar_lea.vmem %s9, 16
        %v1719 = vld [vmem:[%s1718] sm:$0xff]
        %1721 = vset.pattern.permute.xlu0 0
        %1722 = vperm.xlu0 %1721, %v1719
        %v1723 = vpop.permute.xlu0 %1722
        %v1726 = vsel %vm971, %v1717, 0
        %v1729 = vsel %vm975, %v1711, 0
        %v1732 = vsel %vm975, %v1712, 0
        %v1735 = vsel %vm975, %v1713, 0
        %v1738 = vsel %vm975, %v1714, 0
        %1740 = vmatpush.bf16.msra.mxu0 0
        %1741 = vmatpush.bf16.msra.mxu0 0
        %1742 = vmatpush.bf16.msra.mxu0 0
        %1743 = vmatpush.bf16.msra.mxu0 0
        %1744 = vmatpush.bf16.msra.mxu0 0
        %1745 = vmatpush.bf16.msra.mxu0 0
        %1746 = vmatpush.bf16.msra.mxu0 %v1729
        %1747 = vmatpush.bf16.msra.mxu0 %v1707
        %1748 = vmatmul.bf16.gmra.mxu0 %v1726
        %v1749 = vpop.f32.mrf.mxu0
        %v1750 = vadd.f32 %v1723, %v1749
        %v1751 = vpop.f32.mrf.mxu0
        %1752 = vdwg.mxu0
        %1753 = vmatpush.bf16.msra.mxu0 0
        %1754 = vmatpush.bf16.msra.mxu0 0
        %1755 = vmatpush.bf16.msra.mxu0 0
        %1756 = vmatpush.bf16.msra.mxu0 0
        %1757 = vmatpush.bf16.msra.mxu0 0
        %1758 = vmatpush.bf16.msra.mxu0 0
        %1759 = vmatpush.bf16.msra.mxu0 %v1732
        %1760 = vmatpush.bf16.msra.mxu0 %v1708
        %1761 = vmatmul.bf16.gmra.mxu0 %v1726
        %v1762 = vpop.f32.mrf.mxu0
        %v1763 = vadd.f32 %v1723, %v1762
        %v1764 = vpop.f32.mrf.mxu0
        %1765 = vdwg.mxu0
        %1766 = vmatpush.bf16.msra.mxu0 0
        %1767 = vmatpush.bf16.msra.mxu0 0
        %1768 = vmatpush.bf16.msra.mxu0 0
        %1769 = vmatpush.bf16.msra.mxu0 0
        %1770 = vmatpush.bf16.msra.mxu0 0
        %1771 = vmatpush.bf16.msra.mxu0 0
        %1772 = vmatpush.bf16.msra.mxu0 %v1735
        %1773 = vmatpush.bf16.msra.mxu0 %v1709
        %1774 = vmatmul.bf16.gmra.mxu0 %v1726
        %v1775 = vpop.f32.mrf.mxu0
        %v1776 = vadd.f32 %v1723, %v1775
        %v1777 = vpop.f32.mrf.mxu0
        %1778 = vdwg.mxu0
        %1779 = vmatpush.bf16.msra.mxu0 0
        %1780 = vmatpush.bf16.msra.mxu0 0
        %1781 = vmatpush.bf16.msra.mxu0 0
        %1782 = vmatpush.bf16.msra.mxu0 0
        %1783 = vmatpush.bf16.msra.mxu0 0
        %1784 = vmatpush.bf16.msra.mxu0 0
        %1785 = vmatpush.bf16.msra.mxu0 %v1738
        %1786 = vmatpush.bf16.msra.mxu0 %v1710
        %1787 = vmatmul.bf16.gmra.mxu0 %v1726
        %v1788 = vpop.f32.mrf.mxu0
        %v1789 = vadd.f32 %v1723, %v1788
        %v1790 = vpop.f32.mrf.mxu0
        %1791 = vdwg.mxu0
        %v1792 = vmax.f32 %v1750, 0.0
        %v1793 = vmax.f32 %v1763, 0.0
        %v1794 = vmax.f32 %v1776, 0.0
        %v1795 = vmax.f32 %v1789, 0.0
        %1796 = vset.pattern.permute.xlu0 1
        %1797 = vperm.xlu0 %1796, %v1719
        %v1798 = vpop.permute.xlu0 %1797
        %v1800 = vadd.f32 %v1792, %v1798
        %v1801 = vadd.f32 %v1793, %v1798
        %v1802 = vadd.f32 %v1794, %v1798
        %v1803 = vadd.f32 %v1795, %v1798
        %s1804 = scalar_lea.vmem %s3, 128
        %v1805 = vld [vmem:[%s1804] sm:$0xff]
        %v1806 = vld [vmem:[%s1804 + $0x8] sm:$0xff]
        %v1807 = vld [vmem:[%s1804 + $0x10] sm:$0xff]
        %v1808 = vld [vmem:[%s1804 + $0x18] sm:$0xff]
        %v1809 = vld [vmem:[%s1804 + $0x20] sm:$0xff]
        %v1810 = vld [vmem:[%s1804 + $0x28] sm:$0xff]
        %v1811 = vld [vmem:[%s1804 + $0x30] sm:$0xff]
        %v1812 = vld [vmem:[%s1804 + $0x38] sm:$0xff]
        %v1813 = vpack.c.bf16 %v1806, %v1805
        %v1814 = vpack.c.bf16 %v1808, %v1807
        %v1815 = vpack.c.bf16 %v1810, %v1809
        %v1816 = vpack.c.bf16 %v1812, %v1811
        %v1817 = vpack.c.bf16 %v1800, %v1800
        %v1818 = vpack.c.bf16 %v1801, %v1801
        %v1819 = vpack.c.bf16 %v1802, %v1802
        %v1820 = vpack.c.bf16 %v1803, %v1803
        %v1822 = vsel %vm1068, %v1813, 0
        %v1825 = vsel %vm1068, %v1814, 0
        %v1828 = vsel %vm1068, %v1815, 0
        %v1831 = vsel %vm1068, %v1816, 0
        %v1834 = vsel %vm975, %v1817, 0
        %v1837 = vsel %vm975, %v1818, 0
        %v1840 = vsel %vm975, %v1819, 0
        %v1843 = vsel %vm975, %v1820, 0
        %1845 = vmatpush.bf16.msra.mxu0 0
        %1846 = vmatpush.bf16.msra.mxu0 0
        %1847 = vmatpush.bf16.msra.mxu0 0
        %1848 = vmatpush.bf16.msra.mxu0 0
        %1849 = vmatpush.bf16.msra.mxu0 0
        %1850 = vmatpush.bf16.msra.mxu0 0
        %1851 = vmatpush.bf16.msra.mxu0 0
        %1852 = vmatpush.bf16.msra.mxu0 %v1834
        %1853 = vmatmul.bf16.gmra.mxu0 %v1822
        %v1854 = vpop.f32.mrf.mxu0
        %v1855 = vadd.f32 0.0, %v1854
        %v1856 = vpop.f32.mrf.mxu0
        %v1857 = vadd.f32 0.0, %v1856
        %1858 = vmatmul.bf16.gmra.mxu0 %v1825
        %v1859 = vpop.f32.mrf.mxu0
        %v1860 = vadd.f32 0.0, %v1859
        %v1861 = vpop.f32.mrf.mxu0
        %v1862 = vadd.f32 0.0, %v1861
        %1863 = vmatmul.bf16.gmra.mxu0 %v1828
        %v1864 = vpop.f32.mrf.mxu0
        %v1865 = vadd.f32 0.0, %v1864
        %v1866 = vpop.f32.mrf.mxu0
        %v1867 = vadd.f32 0.0, %v1866
        %1868 = vmatmul.bf16.gmra.mxu0 %v1831
        %v1869 = vpop.f32.mrf.mxu0
        %v1870 = vadd.f32 0.0, %v1869
        %v1871 = vpop.f32.mrf.mxu0
        %v1872 = vadd.f32 0.0, %v1871
        %1873 = vdwg.mxu0
        %1874 = vmatpush.bf16.msra.mxu0 0
        %1875 = vmatpush.bf16.msra.mxu0 0
        %1876 = vmatpush.bf16.msra.mxu0 0
        %1877 = vmatpush.bf16.msra.mxu0 0
        %1878 = vmatpush.bf16.msra.mxu0 0
        %1879 = vmatpush.bf16.msra.mxu0 0
        %1880 = vmatpush.bf16.msra.mxu0 0
        %1881 = vmatpush.bf16.msra.mxu0 %v1837
        %1882 = vmatmul.bf16.gmra.mxu0 %v1822
        %v1883 = vpop.f32.mrf.mxu0
        %v1884 = vadd.f32 0.0, %v1883
        %v1885 = vpop.f32.mrf.mxu0
        %v1886 = vadd.f32 0.0, %v1885
        %1887 = vmatmul.bf16.gmra.mxu0 %v1825
        %v1888 = vpop.f32.mrf.mxu0
        %v1889 = vadd.f32 0.0, %v1888
        %v1890 = vpop.f32.mrf.mxu0
        %v1891 = vadd.f32 0.0, %v1890
        %1892 = vmatmul.bf16.gmra.mxu0 %v1828
        %v1893 = vpop.f32.mrf.mxu0
        %v1894 = vadd.f32 0.0, %v1893
        %v1895 = vpop.f32.mrf.mxu0
        %v1896 = vadd.f32 0.0, %v1895
        %1897 = vmatmul.bf16.gmra.mxu0 %v1831
        %v1898 = vpop.f32.mrf.mxu0
        %v1899 = vadd.f32 0.0, %v1898
        %v1900 = vpop.f32.mrf.mxu0
        %v1901 = vadd.f32 0.0, %v1900
        %1902 = vdwg.mxu0
        %1903 = vmatpush.bf16.msra.mxu0 0
        %1904 = vmatpush.bf16.msra.mxu0 0
        %1905 = vmatpush.bf16.msra.mxu0 0
        %1906 = vmatpush.bf16.msra.mxu0 0
        %1907 = vmatpush.bf16.msra.mxu0 0
        %1908 = vmatpush.bf16.msra.mxu0 0
        %1909 = vmatpush.bf16.msra.mxu0 0
        %1910 = vmatpush.bf16.msra.mxu0 %v1840
        %1911 = vmatmul.bf16.gmra.mxu0 %v1822
        %v1912 = vpop.f32.mrf.mxu0
        %v1913 = vadd.f32 0.0, %v1912
        %v1914 = vpop.f32.mrf.mxu0
        %v1915 = vadd.f32 0.0, %v1914
        %1916 = vmatmul.bf16.gmra.mxu0 %v1825
        %v1917 = vpop.f32.mrf.mxu0
        %v1918 = vadd.f32 0.0, %v1917
        %v1919 = vpop.f32.mrf.mxu0
        %v1920 = vadd.f32 0.0, %v1919
        %1921 = vmatmul.bf16.gmra.mxu0 %v1828
        %v1922 = vpop.f32.mrf.mxu0
        %v1923 = vadd.f32 0.0, %v1922
        %v1924 = vpop.f32.mrf.mxu0
        %v1925 = vadd.f32 0.0, %v1924
        %1926 = vmatmul.bf16.gmra.mxu0 %v1831
        %v1927 = vpop.f32.mrf.mxu0
        %v1928 = vadd.f32 0.0, %v1927
        %v1929 = vpop.f32.mrf.mxu0
        %v1930 = vadd.f32 0.0, %v1929
        %1931 = vdwg.mxu0
        %1932 = vmatpush.bf16.msra.mxu0 0
        %1933 = vmatpush.bf16.msra.mxu0 0
        %1934 = vmatpush.bf16.msra.mxu0 0
        %1935 = vmatpush.bf16.msra.mxu0 0
        %1936 = vmatpush.bf16.msra.mxu0 0
        %1937 = vmatpush.bf16.msra.mxu0 0
        %1938 = vmatpush.bf16.msra.mxu0 0
        %1939 = vmatpush.bf16.msra.mxu0 %v1843
        %1940 = vmatmul.bf16.gmra.mxu0 %v1822
        %v1941 = vpop.f32.mrf.mxu0
        %v1942 = vadd.f32 0.0, %v1941
        %v1943 = vpop.f32.mrf.mxu0
        %v1944 = vadd.f32 0.0, %v1943
        %1945 = vmatmul.bf16.gmra.mxu0 %v1825
        %v1946 = vpop.f32.mrf.mxu0
        %v1947 = vadd.f32 0.0, %v1946
        %v1948 = vpop.f32.mrf.mxu0
        %v1949 = vadd.f32 0.0, %v1948
        %1950 = vmatmul.bf16.gmra.mxu0 %v1828
        %v1951 = vpop.f32.mrf.mxu0
        %v1952 = vadd.f32 0.0, %v1951
        %v1953 = vpop.f32.mrf.mxu0
        %v1954 = vadd.f32 0.0, %v1953
        %1955 = vmatmul.bf16.gmra.mxu0 %v1831
        %v1956 = vpop.f32.mrf.mxu0
        %v1957 = vadd.f32 0.0, %v1956
        %v1958 = vpop.f32.mrf.mxu0
        %v1959 = vadd.f32 0.0, %v1958
        %1960 = vdwg.mxu0
        %v1961 = vadd.f32 %v1639, %v1855
        %v1962 = vadd.f32 %v1640, %v1884
        %v1963 = vadd.f32 %v1641, %v1913
        %v1964 = vadd.f32 %v1642, %v1942
        %v1965 = vadd.f32 %v1643, %v1857
        %v1966 = vadd.f32 %v1644, %v1886
        %v1967 = vadd.f32 %v1645, %v1915
        %v1968 = vadd.f32 %v1646, %v1944
        %v1969 = vadd.f32 %v1647, %v1860
        %v1970 = vadd.f32 %v1648, %v1889
        %v1971 = vadd.f32 %v1649, %v1918
        %v1972 = vadd.f32 %v1650, %v1947
        %v1973 = vadd.f32 %v1651, %v1862
        %v1974 = vadd.f32 %v1652, %v1891
        %v1975 = vadd.f32 %v1653, %v1920
        %v1976 = vadd.f32 %v1654, %v1949
        %v1977 = vadd.f32 %v1655, %v1865
        %v1978 = vadd.f32 %v1656, %v1894
        %v1979 = vadd.f32 %v1657, %v1923
        %v1980 = vadd.f32 %v1658, %v1952
        %v1981 = vadd.f32 %v1659, %v1867
        %v1982 = vadd.f32 %v1660, %v1896
        %v1983 = vadd.f32 %v1661, %v1925
        %v1984 = vadd.f32 %v1662, %v1954
        %v1985 = vadd.f32 %v1663, %v1870
        %v1986 = vadd.f32 %v1664, %v1899
        %v1987 = vadd.f32 %v1665, %v1928
        %v1988 = vadd.f32 %v1666, %v1957
        %v1989 = vadd.f32 %v1667, %v1872
        %v1990 = vadd.f32 %v1668, %v1901
        %v1991 = vadd.f32 %v1669, %v1930
        %v1992 = vadd.f32 %v1670, %v1959
        %v1993 = vadd.f32 %v1800, %v836
        %v1994 = vadd.f32 %v1801, %v837
        %v1995 = vadd.f32 %v1802, %v838
        %v1996 = vadd.f32 %v1803, %v839
        %1997 = vrot.lane.b32.xlu0 %v1993, 1
        %v1998 = vpop.permute.xlu0 %1997
        %1999 = vrot.lane.b32.xlu0 %v1994, 1
        %v2000 = vpop.permute.xlu0 %1999
        %2001 = vrot.lane.b32.xlu0 %v1995, 1
        %v2002 = vpop.permute.xlu0 %2001
        %2003 = vrot.lane.b32.xlu0 %v1996, 1
        %v2004 = vpop.permute.xlu0 %2003
        %v2005 = vsel %vm913, %v2002, %v2004
        %v2006 = vsel %vm913, %v2000, %v2002
        %v2007 = vsel %vm913, %v1998, %v2000
        %v2008 = vsel %vm913, %v2004, %v1998
        %v2009 = vsel %vm922, %v2008, 0.0
        %v2010 = vsel %vm923, %v2007, 0.0
        %v2011 = vsel %vm924, %v2006, 0.0
        %v2012 = vsel %vm925, %v2005, 0.0
        %2013 = vrot.lane.b32.xlu0 %v1993, 127
        %v2014 = vpop.permute.xlu0 %2013
        %2015 = vrot.lane.b32.xlu0 %v1994, 127
        %v2016 = vpop.permute.xlu0 %2015
        %2017 = vrot.lane.b32.xlu0 %v1995, 127
        %v2018 = vpop.permute.xlu0 %2017
        %2019 = vrot.lane.b32.xlu0 %v1996, 127
        %v2020 = vpop.permute.xlu0 %2019
        %v2021 = vsel %vm938, %v2018, %v2020
        %v2022 = vsel %vm938, %v2016, %v2018
        %v2023 = vsel %vm938, %v2014, %v2016
        %v2024 = vsel %vm938, %v2020, %v2014
        %v2025 = vsel %vm947, %v2023, 0.0
        %v2026 = vsel %vm948, %v2022, 0.0
        %v2027 = vsel %vm949, %v2021, 0.0
        %v2028 = vsel %vm950, %v2024, 0.0
        %v2029 = vpack.c.bf16 %v1993, %v2009
        %v2030 = vpack.c.bf16 %v1994, %v2010
        %v2031 = vpack.c.bf16 %v1995, %v2011
        %v2032 = vpack.c.bf16 %v1996, %v2012
        %v2033 = vpack.c.bf16 %v2025, %v2025
        %v2034 = vpack.c.bf16 %v2026, %v2026
        %v2035 = vpack.c.bf16 %v2027, %v2027
        %v2036 = vpack.c.bf16 %v2028, %v2028
        %s2037 = scalar_lea.vmem %s2, 24
        %v2038 = vld [vmem:[%s2037] sm:$0xff]
        %v2039 = vpack.c.bf16 %v2038, %v2038
        %s2040 = scalar_lea.vmem %s9, 24
        %v2041 = vld [vmem:[%s2040] sm:$0xff]
        %2043 = vset.pattern.permute.xlu0 0
        %2044 = vperm.xlu0 %2043, %v2041
        %v2045 = vpop.permute.xlu0 %2044
        %v2048 = vsel %vm971, %v2039, 0
        %v2051 = vsel %vm975, %v2033, 0
        %v2054 = vsel %vm975, %v2034, 0
        %v2057 = vsel %vm975, %v2035, 0
        %v2060 = vsel %vm975, %v2036, 0
        %2062 = vmatpush.bf16.msra.mxu0 0
        %2063 = vmatpush.bf16.msra.mxu0 0
        %2064 = vmatpush.bf16.msra.mxu0 0
        %2065 = vmatpush.bf16.msra.mxu0 0
        %2066 = vmatpush.bf16.msra.mxu0 0
        %2067 = vmatpush.bf16.msra.mxu0 0
        %2068 = vmatpush.bf16.msra.mxu0 %v2051
        %2069 = vmatpush.bf16.msra.mxu0 %v2029
        %2070 = vmatmul.bf16.gmra.mxu0 %v2048
        %v2071 = vpop.f32.mrf.mxu0
        %v2072 = vadd.f32 %v2045, %v2071
        %v2073 = vpop.f32.mrf.mxu0
        %2074 = vdwg.mxu0
        %2075 = vmatpush.bf16.msra.mxu0 0
        %2076 = vmatpush.bf16.msra.mxu0 0
        %2077 = vmatpush.bf16.msra.mxu0 0
        %2078 = vmatpush.bf16.msra.mxu0 0
        %2079 = vmatpush.bf16.msra.mxu0 0
        %2080 = vmatpush.bf16.msra.mxu0 0
        %2081 = vmatpush.bf16.msra.mxu0 %v2054
        %2082 = vmatpush.bf16.msra.mxu0 %v2030
        %2083 = vmatmul.bf16.gmra.mxu0 %v2048
        %v2084 = vpop.f32.mrf.mxu0
        %v2085 = vadd.f32 %v2045, %v2084
        %v2086 = vpop.f32.mrf.mxu0
        %2087 = vdwg.mxu0
        %2088 = vmatpush.bf16.msra.mxu0 0
        %2089 = vmatpush.bf16.msra.mxu0 0
        %2090 = vmatpush.bf16.msra.mxu0 0
        %2091 = vmatpush.bf16.msra.mxu0 0
        %2092 = vmatpush.bf16.msra.mxu0 0
        %2093 = vmatpush.bf16.msra.mxu0 0
        %2094 = vmatpush.bf16.msra.mxu0 %v2057
        %2095 = vmatpush.bf16.msra.mxu0 %v2031
        %2096 = vmatmul.bf16.gmra.mxu0 %v2048
        %v2097 = vpop.f32.mrf.mxu0
        %v2098 = vadd.f32 %v2045, %v2097
        %v2099 = vpop.f32.mrf.mxu0
        %2100 = vdwg.mxu0
        %2101 = vmatpush.bf16.msra.mxu0 0
        %2102 = vmatpush.bf16.msra.mxu0 0
        %2103 = vmatpush.bf16.msra.mxu0 0
        %2104 = vmatpush.bf16.msra.mxu0 0
        %2105 = vmatpush.bf16.msra.mxu0 0
        %2106 = vmatpush.bf16.msra.mxu0 0
        %2107 = vmatpush.bf16.msra.mxu0 %v2060
        %2108 = vmatpush.bf16.msra.mxu0 %v2032
        %2109 = vmatmul.bf16.gmra.mxu0 %v2048
        %v2110 = vpop.f32.mrf.mxu0
        %v2111 = vadd.f32 %v2045, %v2110
        %v2112 = vpop.f32.mrf.mxu0
        %2113 = vdwg.mxu0
        %v2114 = vmax.f32 %v2072, 0.0
        %v2115 = vmax.f32 %v2085, 0.0
        %v2116 = vmax.f32 %v2098, 0.0
        %v2117 = vmax.f32 %v2111, 0.0
        %2118 = vset.pattern.permute.xlu0 1
        %2119 = vperm.xlu0 %2118, %v2041
        %v2120 = vpop.permute.xlu0 %2119
        %v2122 = vadd.f32 %v2114, %v2120
        %v2123 = vadd.f32 %v2115, %v2120
        %v2124 = vadd.f32 %v2116, %v2120
        %v2125 = vadd.f32 %v2117, %v2120
        %s2126 = scalar_lea.vmem %s3, 192
        %v2127 = vld [vmem:[%s2126] sm:$0xff]
        %v2128 = vld [vmem:[%s2126 + $0x8] sm:$0xff]
        %v2129 = vld [vmem:[%s2126 + $0x10] sm:$0xff]
        %v2130 = vld [vmem:[%s2126 + $0x18] sm:$0xff]
        %v2131 = vld [vmem:[%s2126 + $0x20] sm:$0xff]
        %v2132 = vld [vmem:[%s2126 + $0x28] sm:$0xff]
        %v2133 = vld [vmem:[%s2126 + $0x30] sm:$0xff]
        %v2134 = vld [vmem:[%s2126 + $0x38] sm:$0xff]
        %v2135 = vpack.c.bf16 %v2128, %v2127
        %v2136 = vpack.c.bf16 %v2130, %v2129
        %v2137 = vpack.c.bf16 %v2132, %v2131
        %v2138 = vpack.c.bf16 %v2134, %v2133
        %v2139 = vpack.c.bf16 %v2122, %v2122
        %v2140 = vpack.c.bf16 %v2123, %v2123
        %v2141 = vpack.c.bf16 %v2124, %v2124
        %v2142 = vpack.c.bf16 %v2125, %v2125
        %v2144 = vsel %vm1068, %v2135, 0
        %v2147 = vsel %vm1068, %v2136, 0
        %v2150 = vsel %vm1068, %v2137, 0
        %v2153 = vsel %vm1068, %v2138, 0
        %v2156 = vsel %vm975, %v2139, 0
        %v2159 = vsel %vm975, %v2140, 0
        %v2162 = vsel %vm975, %v2141, 0
        %v2165 = vsel %vm975, %v2142, 0
        %2167 = vmatpush.bf16.msra.mxu0 0
        %2168 = vmatpush.bf16.msra.mxu0 0
        %2169 = vmatpush.bf16.msra.mxu0 0
        %2170 = vmatpush.bf16.msra.mxu0 0
        %2171 = vmatpush.bf16.msra.mxu0 0
        %2172 = vmatpush.bf16.msra.mxu0 0
        %2173 = vmatpush.bf16.msra.mxu0 0
        %2174 = vmatpush.bf16.msra.mxu0 %v2156
        %2175 = vmatmul.bf16.gmra.mxu0 %v2144
        %v2176 = vpop.f32.mrf.mxu0
        %v2177 = vadd.f32 0.0, %v2176
        %v2178 = vpop.f32.mrf.mxu0
        %v2179 = vadd.f32 0.0, %v2178
        %2180 = vmatmul.bf16.gmra.mxu0 %v2147
        %v2181 = vpop.f32.mrf.mxu0
        %v2182 = vadd.f32 0.0, %v2181
        %v2183 = vpop.f32.mrf.mxu0
        %v2184 = vadd.f32 0.0, %v2183
        %2185 = vmatmul.bf16.gmra.mxu0 %v2150
        %v2186 = vpop.f32.mrf.mxu0
        %v2187 = vadd.f32 0.0, %v2186
        %v2188 = vpop.f32.mrf.mxu0
        %v2189 = vadd.f32 0.0, %v2188
        %2190 = vmatmul.bf16.gmra.mxu0 %v2153
        %v2191 = vpop.f32.mrf.mxu0
        %v2192 = vadd.f32 0.0, %v2191
        %v2193 = vpop.f32.mrf.mxu0
        %v2194 = vadd.f32 0.0, %v2193
        %2195 = vdwg.mxu0
        %2196 = vmatpush.bf16.msra.mxu0 0
        %2197 = vmatpush.bf16.msra.mxu0 0
        %2198 = vmatpush.bf16.msra.mxu0 0
        %2199 = vmatpush.bf16.msra.mxu0 0
        %2200 = vmatpush.bf16.msra.mxu0 0
        %2201 = vmatpush.bf16.msra.mxu0 0
        %2202 = vmatpush.bf16.msra.mxu0 0
        %2203 = vmatpush.bf16.msra.mxu0 %v2159
        %2204 = vmatmul.bf16.gmra.mxu0 %v2144
        %v2205 = vpop.f32.mrf.mxu0
        %v2206 = vadd.f32 0.0, %v2205
        %v2207 = vpop.f32.mrf.mxu0
        %v2208 = vadd.f32 0.0, %v2207
        %2209 = vmatmul.bf16.gmra.mxu0 %v2147
        %v2210 = vpop.f32.mrf.mxu0
        %v2211 = vadd.f32 0.0, %v2210
        %v2212 = vpop.f32.mrf.mxu0
        %v2213 = vadd.f32 0.0, %v2212
        %2214 = vmatmul.bf16.gmra.mxu0 %v2150
        %v2215 = vpop.f32.mrf.mxu0
        %v2216 = vadd.f32 0.0, %v2215
        %v2217 = vpop.f32.mrf.mxu0
        %v2218 = vadd.f32 0.0, %v2217
        %2219 = vmatmul.bf16.gmra.mxu0 %v2153
        %v2220 = vpop.f32.mrf.mxu0
        %v2221 = vadd.f32 0.0, %v2220
        %v2222 = vpop.f32.mrf.mxu0
        %v2223 = vadd.f32 0.0, %v2222
        %2224 = vdwg.mxu0
        %2225 = vmatpush.bf16.msra.mxu0 0
        %2226 = vmatpush.bf16.msra.mxu0 0
        %2227 = vmatpush.bf16.msra.mxu0 0
        %2228 = vmatpush.bf16.msra.mxu0 0
        %2229 = vmatpush.bf16.msra.mxu0 0
        %2230 = vmatpush.bf16.msra.mxu0 0
        %2231 = vmatpush.bf16.msra.mxu0 0
        %2232 = vmatpush.bf16.msra.mxu0 %v2162
        %2233 = vmatmul.bf16.gmra.mxu0 %v2144
        %v2234 = vpop.f32.mrf.mxu0
        %v2235 = vadd.f32 0.0, %v2234
        %v2236 = vpop.f32.mrf.mxu0
        %v2237 = vadd.f32 0.0, %v2236
        %2238 = vmatmul.bf16.gmra.mxu0 %v2147
        %v2239 = vpop.f32.mrf.mxu0
        %v2240 = vadd.f32 0.0, %v2239
        %v2241 = vpop.f32.mrf.mxu0
        %v2242 = vadd.f32 0.0, %v2241
        %2243 = vmatmul.bf16.gmra.mxu0 %v2150
        %v2244 = vpop.f32.mrf.mxu0
        %v2245 = vadd.f32 0.0, %v2244
        %v2246 = vpop.f32.mrf.mxu0
        %v2247 = vadd.f32 0.0, %v2246
        %2248 = vmatmul.bf16.gmra.mxu0 %v2153
        %v2249 = vpop.f32.mrf.mxu0
        %v2250 = vadd.f32 0.0, %v2249
        %v2251 = vpop.f32.mrf.mxu0
        %v2252 = vadd.f32 0.0, %v2251
        %2253 = vdwg.mxu0
        %2254 = vmatpush.bf16.msra.mxu0 0
        %2255 = vmatpush.bf16.msra.mxu0 0
        %2256 = vmatpush.bf16.msra.mxu0 0
        %2257 = vmatpush.bf16.msra.mxu0 0
        %2258 = vmatpush.bf16.msra.mxu0 0
        %2259 = vmatpush.bf16.msra.mxu0 0
        %2260 = vmatpush.bf16.msra.mxu0 0
        %2261 = vmatpush.bf16.msra.mxu0 %v2165
        %2262 = vmatmul.bf16.gmra.mxu0 %v2144
        %v2263 = vpop.f32.mrf.mxu0
        %v2264 = vadd.f32 0.0, %v2263
        %v2265 = vpop.f32.mrf.mxu0
        %v2266 = vadd.f32 0.0, %v2265
        %2267 = vmatmul.bf16.gmra.mxu0 %v2147
        %v2268 = vpop.f32.mrf.mxu0
        %v2269 = vadd.f32 0.0, %v2268
        %v2270 = vpop.f32.mrf.mxu0
        %v2271 = vadd.f32 0.0, %v2270
        %2272 = vmatmul.bf16.gmra.mxu0 %v2150
        %v2273 = vpop.f32.mrf.mxu0
        %v2274 = vadd.f32 0.0, %v2273
        %v2275 = vpop.f32.mrf.mxu0
        %v2276 = vadd.f32 0.0, %v2275
        %2277 = vmatmul.bf16.gmra.mxu0 %v2153
        %v2278 = vpop.f32.mrf.mxu0
        %v2279 = vadd.f32 0.0, %v2278
        %v2280 = vpop.f32.mrf.mxu0
        %v2281 = vadd.f32 0.0, %v2280
        %2282 = vdwg.mxu0
        %v2283 = vadd.f32 %v1961, %v2177
        %v2284 = vadd.f32 %v1962, %v2206
        %v2285 = vadd.f32 %v1963, %v2235
        %v2286 = vadd.f32 %v1964, %v2264
        %v2287 = vadd.f32 %v1965, %v2179
        %v2288 = vadd.f32 %v1966, %v2208
        %v2289 = vadd.f32 %v1967, %v2237
        %v2290 = vadd.f32 %v1968, %v2266
        %v2291 = vadd.f32 %v1969, %v2182
        %v2292 = vadd.f32 %v1970, %v2211
        %v2293 = vadd.f32 %v1971, %v2240
        %v2294 = vadd.f32 %v1972, %v2269
        %v2295 = vadd.f32 %v1973, %v2184
        %v2296 = vadd.f32 %v1974, %v2213
        %v2297 = vadd.f32 %v1975, %v2242
        %v2298 = vadd.f32 %v1976, %v2271
        %v2299 = vadd.f32 %v1977, %v2187
        %v2300 = vadd.f32 %v1978, %v2216
        %v2301 = vadd.f32 %v1979, %v2245
        %v2302 = vadd.f32 %v1980, %v2274
        %v2303 = vadd.f32 %v1981, %v2189
        %v2304 = vadd.f32 %v1982, %v2218
        %v2305 = vadd.f32 %v1983, %v2247
        %v2306 = vadd.f32 %v1984, %v2276
        %v2307 = vadd.f32 %v1985, %v2192
        %v2308 = vadd.f32 %v1986, %v2221
        %v2309 = vadd.f32 %v1987, %v2250
        %v2310 = vadd.f32 %v1988, %v2279
        %v2311 = vadd.f32 %v1989, %v2194
        %v2312 = vadd.f32 %v1990, %v2223
        %v2313 = vadd.f32 %v1991, %v2252
        %v2314 = vadd.f32 %v1992, %v2281
        %v2315 = vadd.f32 %v2122, %v840
        %v2316 = vadd.f32 %v2123, %v841
        %v2317 = vadd.f32 %v2124, %v842
        %v2318 = vadd.f32 %v2125, %v843
        %2319 = vrot.lane.b32.xlu0 %v2315, 1
        %v2320 = vpop.permute.xlu0 %2319
        %2321 = vrot.lane.b32.xlu0 %v2316, 1
        %v2322 = vpop.permute.xlu0 %2321
        %2323 = vrot.lane.b32.xlu0 %v2317, 1
        %v2324 = vpop.permute.xlu0 %2323
        %2325 = vrot.lane.b32.xlu0 %v2318, 1
        %v2326 = vpop.permute.xlu0 %2325
        %v2327 = vsel %vm913, %v2324, %v2326
        %v2328 = vsel %vm913, %v2322, %v2324
        %v2329 = vsel %vm913, %v2320, %v2322
        %v2330 = vsel %vm913, %v2326, %v2320
        %v2331 = vsel %vm922, %v2330, 0.0
        %v2332 = vsel %vm923, %v2329, 0.0
        %v2333 = vsel %vm924, %v2328, 0.0
        %v2334 = vsel %vm925, %v2327, 0.0
        %2335 = vrot.lane.b32.xlu0 %v2315, 127
        %v2336 = vpop.permute.xlu0 %2335
        %2337 = vrot.lane.b32.xlu0 %v2316, 127
        %v2338 = vpop.permute.xlu0 %2337
        %2339 = vrot.lane.b32.xlu0 %v2317, 127
        %v2340 = vpop.permute.xlu0 %2339
        %2341 = vrot.lane.b32.xlu0 %v2318, 127
        %v2342 = vpop.permute.xlu0 %2341
        %v2343 = vsel %vm938, %v2340, %v2342
        %v2344 = vsel %vm938, %v2338, %v2340
        %v2345 = vsel %vm938, %v2336, %v2338
        %v2346 = vsel %vm938, %v2342, %v2336
        %v2347 = vsel %vm947, %v2345, 0.0
        %v2348 = vsel %vm948, %v2344, 0.0
        %v2349 = vsel %vm949, %v2343, 0.0
        %v2350 = vsel %vm950, %v2346, 0.0
        %v2351 = vpack.c.bf16 %v2315, %v2331
        %v2352 = vpack.c.bf16 %v2316, %v2332
        %v2353 = vpack.c.bf16 %v2317, %v2333
        %v2354 = vpack.c.bf16 %v2318, %v2334
        %v2355 = vpack.c.bf16 %v2347, %v2347
        %v2356 = vpack.c.bf16 %v2348, %v2348
        %v2357 = vpack.c.bf16 %v2349, %v2349
        %v2358 = vpack.c.bf16 %v2350, %v2350
        %s2359 = scalar_lea.vmem %s2, 32
        %v2360 = vld [vmem:[%s2359] sm:$0xff]
        %v2361 = vpack.c.bf16 %v2360, %v2360
        %s2362 = scalar_lea.vmem %s9, 32
        %v2363 = vld [vmem:[%s2362] sm:$0xff]
        %2365 = vset.pattern.permute.xlu0 0
        %2366 = vperm.xlu0 %2365, %v2363
        %v2367 = vpop.permute.xlu0 %2366
        %v2370 = vsel %vm971, %v2361, 0
        %v2373 = vsel %vm975, %v2355, 0
        %v2376 = vsel %vm975, %v2356, 0
        %v2379 = vsel %vm975, %v2357, 0
        %v2382 = vsel %vm975, %v2358, 0
        %2384 = vmatpush.bf16.msra.mxu0 0
        %2385 = vmatpush.bf16.msra.mxu0 0
        %2386 = vmatpush.bf16.msra.mxu0 0
        %2387 = vmatpush.bf16.msra.mxu0 0
        %2388 = vmatpush.bf16.msra.mxu0 0
        %2389 = vmatpush.bf16.msra.mxu0 0
        %2390 = vmatpush.bf16.msra.mxu0 %v2373
        %2391 = vmatpush.bf16.msra.mxu0 %v2351
        %2392 = vmatmul.bf16.gmra.mxu0 %v2370
        %v2393 = vpop.f32.mrf.mxu0
        %v2394 = vadd.f32 %v2367, %v2393
        %v2395 = vpop.f32.mrf.mxu0
        %2396 = vdwg.mxu0
        %2397 = vmatpush.bf16.msra.mxu0 0
        %2398 = vmatpush.bf16.msra.mxu0 0
        %2399 = vmatpush.bf16.msra.mxu0 0
        %2400 = vmatpush.bf16.msra.mxu0 0
        %2401 = vmatpush.bf16.msra.mxu0 0
        %2402 = vmatpush.bf16.msra.mxu0 0
        %2403 = vmatpush.bf16.msra.mxu0 %v2376
        %2404 = vmatpush.bf16.msra.mxu0 %v2352
        %2405 = vmatmul.bf16.gmra.mxu0 %v2370
        %v2406 = vpop.f32.mrf.mxu0
        %v2407 = vadd.f32 %v2367, %v2406
        %v2408 = vpop.f32.mrf.mxu0
        %2409 = vdwg.mxu0
        %2410 = vmatpush.bf16.msra.mxu0 0
        %2411 = vmatpush.bf16.msra.mxu0 0
        %2412 = vmatpush.bf16.msra.mxu0 0
        %2413 = vmatpush.bf16.msra.mxu0 0
        %2414 = vmatpush.bf16.msra.mxu0 0
        %2415 = vmatpush.bf16.msra.mxu0 0
        %2416 = vmatpush.bf16.msra.mxu0 %v2379
        %2417 = vmatpush.bf16.msra.mxu0 %v2353
        %2418 = vmatmul.bf16.gmra.mxu0 %v2370
        %v2419 = vpop.f32.mrf.mxu0
        %v2420 = vadd.f32 %v2367, %v2419
        %v2421 = vpop.f32.mrf.mxu0
        %2422 = vdwg.mxu0
        %2423 = vmatpush.bf16.msra.mxu0 0
        %2424 = vmatpush.bf16.msra.mxu0 0
        %2425 = vmatpush.bf16.msra.mxu0 0
        %2426 = vmatpush.bf16.msra.mxu0 0
        %2427 = vmatpush.bf16.msra.mxu0 0
        %2428 = vmatpush.bf16.msra.mxu0 0
        %2429 = vmatpush.bf16.msra.mxu0 %v2382
        %2430 = vmatpush.bf16.msra.mxu0 %v2354
        %2431 = vmatmul.bf16.gmra.mxu0 %v2370
        %v2432 = vpop.f32.mrf.mxu0
        %v2433 = vadd.f32 %v2367, %v2432
        %v2434 = vpop.f32.mrf.mxu0
        %2435 = vdwg.mxu0
        %v2436 = vmax.f32 %v2394, 0.0
        %v2437 = vmax.f32 %v2407, 0.0
        %v2438 = vmax.f32 %v2420, 0.0
        %v2439 = vmax.f32 %v2433, 0.0
        %2440 = vset.pattern.permute.xlu0 1
        %2441 = vperm.xlu0 %2440, %v2363
        %v2442 = vpop.permute.xlu0 %2441
        %v2444 = vadd.f32 %v2436, %v2442
        %v2445 = vadd.f32 %v2437, %v2442
        %v2446 = vadd.f32 %v2438, %v2442
        %v2447 = vadd.f32 %v2439, %v2442
        %s2448 = scalar_lea.vmem %s3, 256
        %v2449 = vld [vmem:[%s2448] sm:$0xff]
        %v2450 = vld [vmem:[%s2448 + $0x8] sm:$0xff]
        %v2451 = vld [vmem:[%s2448 + $0x10] sm:$0xff]
        %v2452 = vld [vmem:[%s2448 + $0x18] sm:$0xff]
        %v2453 = vld [vmem:[%s2448 + $0x20] sm:$0xff]
        %v2454 = vld [vmem:[%s2448 + $0x28] sm:$0xff]
        %v2455 = vld [vmem:[%s2448 + $0x30] sm:$0xff]
        %v2456 = vld [vmem:[%s2448 + $0x38] sm:$0xff]
        %v2457 = vpack.c.bf16 %v2450, %v2449
        %v2458 = vpack.c.bf16 %v2452, %v2451
        %v2459 = vpack.c.bf16 %v2454, %v2453
        %v2460 = vpack.c.bf16 %v2456, %v2455
        %v2461 = vpack.c.bf16 %v2444, %v2444
        %v2462 = vpack.c.bf16 %v2445, %v2445
        %v2463 = vpack.c.bf16 %v2446, %v2446
        %v2464 = vpack.c.bf16 %v2447, %v2447
        %v2466 = vsel %vm1068, %v2457, 0
        %v2469 = vsel %vm1068, %v2458, 0
        %v2472 = vsel %vm1068, %v2459, 0
        %v2475 = vsel %vm1068, %v2460, 0
        %v2478 = vsel %vm975, %v2461, 0
        %v2481 = vsel %vm975, %v2462, 0
        %v2484 = vsel %vm975, %v2463, 0
        %v2487 = vsel %vm975, %v2464, 0
        %2489 = vmatpush.bf16.msra.mxu0 0
        %2490 = vmatpush.bf16.msra.mxu0 0
        %2491 = vmatpush.bf16.msra.mxu0 0
        %2492 = vmatpush.bf16.msra.mxu0 0
        %2493 = vmatpush.bf16.msra.mxu0 0
        %2494 = vmatpush.bf16.msra.mxu0 0
        %2495 = vmatpush.bf16.msra.mxu0 0
        %2496 = vmatpush.bf16.msra.mxu0 %v2478
        %2497 = vmatmul.bf16.gmra.mxu0 %v2466
        %v2498 = vpop.f32.mrf.mxu0
        %v2499 = vadd.f32 0.0, %v2498
        %v2500 = vpop.f32.mrf.mxu0
        %v2501 = vadd.f32 0.0, %v2500
        %2502 = vmatmul.bf16.gmra.mxu0 %v2469
        %v2503 = vpop.f32.mrf.mxu0
        %v2504 = vadd.f32 0.0, %v2503
        %v2505 = vpop.f32.mrf.mxu0
        %v2506 = vadd.f32 0.0, %v2505
        %2507 = vmatmul.bf16.gmra.mxu0 %v2472
        %v2508 = vpop.f32.mrf.mxu0
        %v2509 = vadd.f32 0.0, %v2508
        %v2510 = vpop.f32.mrf.mxu0
        %v2511 = vadd.f32 0.0, %v2510
        %2512 = vmatmul.bf16.gmra.mxu0 %v2475
        %v2513 = vpop.f32.mrf.mxu0
        %v2514 = vadd.f32 0.0, %v2513
        %v2515 = vpop.f32.mrf.mxu0
        %v2516 = vadd.f32 0.0, %v2515
        %2517 = vdwg.mxu0
        %2518 = vmatpush.bf16.msra.mxu0 0
        %2519 = vmatpush.bf16.msra.mxu0 0
        %2520 = vmatpush.bf16.msra.mxu0 0
        %2521 = vmatpush.bf16.msra.mxu0 0
        %2522 = vmatpush.bf16.msra.mxu0 0
        %2523 = vmatpush.bf16.msra.mxu0 0
        %2524 = vmatpush.bf16.msra.mxu0 0
        %2525 = vmatpush.bf16.msra.mxu0 %v2481
        %2526 = vmatmul.bf16.gmra.mxu0 %v2466
        %v2527 = vpop.f32.mrf.mxu0
        %v2528 = vadd.f32 0.0, %v2527
        %v2529 = vpop.f32.mrf.mxu0
        %v2530 = vadd.f32 0.0, %v2529
        %2531 = vmatmul.bf16.gmra.mxu0 %v2469
        %v2532 = vpop.f32.mrf.mxu0
        %v2533 = vadd.f32 0.0, %v2532
        %v2534 = vpop.f32.mrf.mxu0
        %v2535 = vadd.f32 0.0, %v2534
        %2536 = vmatmul.bf16.gmra.mxu0 %v2472
        %v2537 = vpop.f32.mrf.mxu0
        %v2538 = vadd.f32 0.0, %v2537
        %v2539 = vpop.f32.mrf.mxu0
        %v2540 = vadd.f32 0.0, %v2539
        %2541 = vmatmul.bf16.gmra.mxu0 %v2475
        %v2542 = vpop.f32.mrf.mxu0
        %v2543 = vadd.f32 0.0, %v2542
        %v2544 = vpop.f32.mrf.mxu0
        %v2545 = vadd.f32 0.0, %v2544
        %2546 = vdwg.mxu0
        %2547 = vmatpush.bf16.msra.mxu0 0
        %2548 = vmatpush.bf16.msra.mxu0 0
        %2549 = vmatpush.bf16.msra.mxu0 0
        %2550 = vmatpush.bf16.msra.mxu0 0
        %2551 = vmatpush.bf16.msra.mxu0 0
        %2552 = vmatpush.bf16.msra.mxu0 0
        %2553 = vmatpush.bf16.msra.mxu0 0
        %2554 = vmatpush.bf16.msra.mxu0 %v2484
        %2555 = vmatmul.bf16.gmra.mxu0 %v2466
        %v2556 = vpop.f32.mrf.mxu0
        %v2557 = vadd.f32 0.0, %v2556
        %v2558 = vpop.f32.mrf.mxu0
        %v2559 = vadd.f32 0.0, %v2558
        %2560 = vmatmul.bf16.gmra.mxu0 %v2469
        %v2561 = vpop.f32.mrf.mxu0
        %v2562 = vadd.f32 0.0, %v2561
        %v2563 = vpop.f32.mrf.mxu0
        %v2564 = vadd.f32 0.0, %v2563
        %2565 = vmatmul.bf16.gmra.mxu0 %v2472
        %v2566 = vpop.f32.mrf.mxu0
        %v2567 = vadd.f32 0.0, %v2566
        %v2568 = vpop.f32.mrf.mxu0
        %v2569 = vadd.f32 0.0, %v2568
        %2570 = vmatmul.bf16.gmra.mxu0 %v2475
        %v2571 = vpop.f32.mrf.mxu0
        %v2572 = vadd.f32 0.0, %v2571
        %v2573 = vpop.f32.mrf.mxu0
        %v2574 = vadd.f32 0.0, %v2573
        %2575 = vdwg.mxu0
        %2576 = vmatpush.bf16.msra.mxu0 0
        %2577 = vmatpush.bf16.msra.mxu0 0
        %2578 = vmatpush.bf16.msra.mxu0 0
        %2579 = vmatpush.bf16.msra.mxu0 0
        %2580 = vmatpush.bf16.msra.mxu0 0
        %2581 = vmatpush.bf16.msra.mxu0 0
        %2582 = vmatpush.bf16.msra.mxu0 0
        %2583 = vmatpush.bf16.msra.mxu0 %v2487
        %2584 = vmatmul.bf16.gmra.mxu0 %v2466
        %v2585 = vpop.f32.mrf.mxu0
        %v2586 = vadd.f32 0.0, %v2585
        %v2587 = vpop.f32.mrf.mxu0
        %v2588 = vadd.f32 0.0, %v2587
        %2589 = vmatmul.bf16.gmra.mxu0 %v2469
        %v2590 = vpop.f32.mrf.mxu0
        %v2591 = vadd.f32 0.0, %v2590
        %v2592 = vpop.f32.mrf.mxu0
        %v2593 = vadd.f32 0.0, %v2592
        %2594 = vmatmul.bf16.gmra.mxu0 %v2472
        %v2595 = vpop.f32.mrf.mxu0
        %v2596 = vadd.f32 0.0, %v2595
        %v2597 = vpop.f32.mrf.mxu0
        %v2598 = vadd.f32 0.0, %v2597
        %2599 = vmatmul.bf16.gmra.mxu0 %v2475
        %v2600 = vpop.f32.mrf.mxu0
        %v2601 = vadd.f32 0.0, %v2600
        %v2602 = vpop.f32.mrf.mxu0
        %v2603 = vadd.f32 0.0, %v2602
        %2604 = vdwg.mxu0
        %v2605 = vadd.f32 %v2283, %v2499
        %v2606 = vadd.f32 %v2284, %v2528
        %v2607 = vadd.f32 %v2285, %v2557
        %v2608 = vadd.f32 %v2286, %v2586
        %v2609 = vadd.f32 %v2287, %v2501
        %v2610 = vadd.f32 %v2288, %v2530
        %v2611 = vadd.f32 %v2289, %v2559
        %v2612 = vadd.f32 %v2290, %v2588
        %v2613 = vadd.f32 %v2291, %v2504
        %v2614 = vadd.f32 %v2292, %v2533
        %v2615 = vadd.f32 %v2293, %v2562
        %v2616 = vadd.f32 %v2294, %v2591
        %v2617 = vadd.f32 %v2295, %v2506
        %v2618 = vadd.f32 %v2296, %v2535
        %v2619 = vadd.f32 %v2297, %v2564
        %v2620 = vadd.f32 %v2298, %v2593
        %v2621 = vadd.f32 %v2299, %v2509
        %v2622 = vadd.f32 %v2300, %v2538
        %v2623 = vadd.f32 %v2301, %v2567
        %v2624 = vadd.f32 %v2302, %v2596
        %v2625 = vadd.f32 %v2303, %v2511
        %v2626 = vadd.f32 %v2304, %v2540
        %v2627 = vadd.f32 %v2305, %v2569
        %v2628 = vadd.f32 %v2306, %v2598
        %v2629 = vadd.f32 %v2307, %v2514
        %v2630 = vadd.f32 %v2308, %v2543
        %v2631 = vadd.f32 %v2309, %v2572
        %v2632 = vadd.f32 %v2310, %v2601
        %v2633 = vadd.f32 %v2311, %v2516
        %v2634 = vadd.f32 %v2312, %v2545
        %v2635 = vadd.f32 %v2313, %v2574
        %v2636 = vadd.f32 %v2314, %v2603
        %v2637 = vadd.f32 %v2444, %v844
        %v2638 = vadd.f32 %v2445, %v845
        %v2639 = vadd.f32 %v2446, %v846
        %v2640 = vadd.f32 %v2447, %v847
        %2641 = vrot.lane.b32.xlu0 %v2637, 1
        %v2642 = vpop.permute.xlu0 %2641
        %2643 = vrot.lane.b32.xlu0 %v2638, 1
        %v2644 = vpop.permute.xlu0 %2643
        %2645 = vrot.lane.b32.xlu0 %v2639, 1
        %v2646 = vpop.permute.xlu0 %2645
        %2647 = vrot.lane.b32.xlu0 %v2640, 1
        %v2648 = vpop.permute.xlu0 %2647
        %v2649 = vsel %vm913, %v2646, %v2648
        %v2650 = vsel %vm913, %v2644, %v2646
        %v2651 = vsel %vm913, %v2642, %v2644
        %v2652 = vsel %vm913, %v2648, %v2642
        %v2653 = vsel %vm922, %v2652, 0.0
        %v2654 = vsel %vm923, %v2651, 0.0
        %v2655 = vsel %vm924, %v2650, 0.0
        %v2656 = vsel %vm925, %v2649, 0.0
        %2657 = vrot.lane.b32.xlu0 %v2637, 127
        %v2658 = vpop.permute.xlu0 %2657
        %2659 = vrot.lane.b32.xlu0 %v2638, 127
        %v2660 = vpop.permute.xlu0 %2659
        %2661 = vrot.lane.b32.xlu0 %v2639, 127
        %v2662 = vpop.permute.xlu0 %2661
        %2663 = vrot.lane.b32.xlu0 %v2640, 127
        %v2664 = vpop.permute.xlu0 %2663
        %v2665 = vsel %vm938, %v2662, %v2664
        %v2666 = vsel %vm938, %v2660, %v2662
        %v2667 = vsel %vm938, %v2658, %v2660
        %v2668 = vsel %vm938, %v2664, %v2658
        %v2669 = vsel %vm947, %v2667, 0.0
        %v2670 = vsel %vm948, %v2666, 0.0
        %v2671 = vsel %vm949, %v2665, 0.0
        %v2672 = vsel %vm950, %v2668, 0.0
        %v2673 = vpack.c.bf16 %v2637, %v2653
        %v2674 = vpack.c.bf16 %v2638, %v2654
        %v2675 = vpack.c.bf16 %v2639, %v2655
        %v2676 = vpack.c.bf16 %v2640, %v2656
        %v2677 = vpack.c.bf16 %v2669, %v2669
        %v2678 = vpack.c.bf16 %v2670, %v2670
        %v2679 = vpack.c.bf16 %v2671, %v2671
        %v2680 = vpack.c.bf16 %v2672, %v2672
        %s2681 = scalar_lea.vmem %s2, 40
        %v2682 = vld [vmem:[%s2681] sm:$0xff]
        %v2683 = vpack.c.bf16 %v2682, %v2682
        %s2684 = scalar_lea.vmem %s9, 40
        %v2685 = vld [vmem:[%s2684] sm:$0xff]
        %2687 = vset.pattern.permute.xlu0 0
        %2688 = vperm.xlu0 %2687, %v2685
        %v2689 = vpop.permute.xlu0 %2688
        %v2692 = vsel %vm971, %v2683, 0
        %v2695 = vsel %vm975, %v2677, 0
        %v2698 = vsel %vm975, %v2678, 0
        %v2701 = vsel %vm975, %v2679, 0
        %v2704 = vsel %vm975, %v2680, 0
        %2706 = vmatpush.bf16.msra.mxu0 0
        %2707 = vmatpush.bf16.msra.mxu0 0
        %2708 = vmatpush.bf16.msra.mxu0 0
        %2709 = vmatpush.bf16.msra.mxu0 0
        %2710 = vmatpush.bf16.msra.mxu0 0
        %2711 = vmatpush.bf16.msra.mxu0 0
        %2712 = vmatpush.bf16.msra.mxu0 %v2695
        %2713 = vmatpush.bf16.msra.mxu0 %v2673
        %2714 = vmatmul.bf16.gmra.mxu0 %v2692
        %v2715 = vpop.f32.mrf.mxu0
        %v2716 = vadd.f32 %v2689, %v2715
        %v2717 = vpop.f32.mrf.mxu0
        %2718 = vdwg.mxu0
        %2719 = vmatpush.bf16.msra.mxu0 0
        %2720 = vmatpush.bf16.msra.mxu0 0
        %2721 = vmatpush.bf16.msra.mxu0 0
        %2722 = vmatpush.bf16.msra.mxu0 0
        %2723 = vmatpush.bf16.msra.mxu0 0
        %2724 = vmatpush.bf16.msra.mxu0 0
        %2725 = vmatpush.bf16.msra.mxu0 %v2698
        %2726 = vmatpush.bf16.msra.mxu0 %v2674
        %2727 = vmatmul.bf16.gmra.mxu0 %v2692
        %v2728 = vpop.f32.mrf.mxu0
        %v2729 = vadd.f32 %v2689, %v2728
        %v2730 = vpop.f32.mrf.mxu0
        %2731 = vdwg.mxu0
        %2732 = vmatpush.bf16.msra.mxu0 0
        %2733 = vmatpush.bf16.msra.mxu0 0
        %2734 = vmatpush.bf16.msra.mxu0 0
        %2735 = vmatpush.bf16.msra.mxu0 0
        %2736 = vmatpush.bf16.msra.mxu0 0
        %2737 = vmatpush.bf16.msra.mxu0 0
        %2738 = vmatpush.bf16.msra.mxu0 %v2701
        %2739 = vmatpush.bf16.msra.mxu0 %v2675
        %2740 = vmatmul.bf16.gmra.mxu0 %v2692
        %v2741 = vpop.f32.mrf.mxu0
        %v2742 = vadd.f32 %v2689, %v2741
        %v2743 = vpop.f32.mrf.mxu0
        %2744 = vdwg.mxu0
        %2745 = vmatpush.bf16.msra.mxu0 0
        %2746 = vmatpush.bf16.msra.mxu0 0
        %2747 = vmatpush.bf16.msra.mxu0 0
        %2748 = vmatpush.bf16.msra.mxu0 0
        %2749 = vmatpush.bf16.msra.mxu0 0
        %2750 = vmatpush.bf16.msra.mxu0 0
        %2751 = vmatpush.bf16.msra.mxu0 %v2704
        %2752 = vmatpush.bf16.msra.mxu0 %v2676
        %2753 = vmatmul.bf16.gmra.mxu0 %v2692
        %v2754 = vpop.f32.mrf.mxu0
        %v2755 = vadd.f32 %v2689, %v2754
        %v2756 = vpop.f32.mrf.mxu0
        %2757 = vdwg.mxu0
        %v2758 = vmax.f32 %v2716, 0.0
        %v2759 = vmax.f32 %v2729, 0.0
        %v2760 = vmax.f32 %v2742, 0.0
        %v2761 = vmax.f32 %v2755, 0.0
        %2762 = vset.pattern.permute.xlu0 1
        %2763 = vperm.xlu0 %2762, %v2685
        %v2764 = vpop.permute.xlu0 %2763
        %v2766 = vadd.f32 %v2758, %v2764
        %v2767 = vadd.f32 %v2759, %v2764
        %v2768 = vadd.f32 %v2760, %v2764
        %v2769 = vadd.f32 %v2761, %v2764
        %s2770 = scalar_lea.vmem %s3, 320
        %v2771 = vld [vmem:[%s2770] sm:$0xff]
        %v2772 = vld [vmem:[%s2770 + $0x8] sm:$0xff]
        %v2773 = vld [vmem:[%s2770 + $0x10] sm:$0xff]
        %v2774 = vld [vmem:[%s2770 + $0x18] sm:$0xff]
        %v2775 = vld [vmem:[%s2770 + $0x20] sm:$0xff]
        %v2776 = vld [vmem:[%s2770 + $0x28] sm:$0xff]
        %v2777 = vld [vmem:[%s2770 + $0x30] sm:$0xff]
        %v2778 = vld [vmem:[%s2770 + $0x38] sm:$0xff]
        %v2779 = vpack.c.bf16 %v2772, %v2771
        %v2780 = vpack.c.bf16 %v2774, %v2773
        %v2781 = vpack.c.bf16 %v2776, %v2775
        %v2782 = vpack.c.bf16 %v2778, %v2777
        %v2783 = vpack.c.bf16 %v2766, %v2766
        %v2784 = vpack.c.bf16 %v2767, %v2767
        %v2785 = vpack.c.bf16 %v2768, %v2768
        %v2786 = vpack.c.bf16 %v2769, %v2769
        %v2788 = vsel %vm1068, %v2779, 0
        %v2791 = vsel %vm1068, %v2780, 0
        %v2794 = vsel %vm1068, %v2781, 0
        %v2797 = vsel %vm1068, %v2782, 0
        %v2800 = vsel %vm975, %v2783, 0
        %v2803 = vsel %vm975, %v2784, 0
        %v2806 = vsel %vm975, %v2785, 0
        %v2809 = vsel %vm975, %v2786, 0
        %2811 = vmatpush.bf16.msra.mxu0 0
        %2812 = vmatpush.bf16.msra.mxu0 0
        %2813 = vmatpush.bf16.msra.mxu0 0
        %2814 = vmatpush.bf16.msra.mxu0 0
        %2815 = vmatpush.bf16.msra.mxu0 0
        %2816 = vmatpush.bf16.msra.mxu0 0
        %2817 = vmatpush.bf16.msra.mxu0 0
        %2818 = vmatpush.bf16.msra.mxu0 %v2800
        %2819 = vmatmul.bf16.gmra.mxu0 %v2788
        %v2820 = vpop.f32.mrf.mxu0
        %v2821 = vadd.f32 0.0, %v2820
        %v2822 = vpop.f32.mrf.mxu0
        %v2823 = vadd.f32 0.0, %v2822
        %2824 = vmatmul.bf16.gmra.mxu0 %v2791
        %v2825 = vpop.f32.mrf.mxu0
        %v2826 = vadd.f32 0.0, %v2825
        %v2827 = vpop.f32.mrf.mxu0
        %v2828 = vadd.f32 0.0, %v2827
        %2829 = vmatmul.bf16.gmra.mxu0 %v2794
        %v2830 = vpop.f32.mrf.mxu0
        %v2831 = vadd.f32 0.0, %v2830
        %v2832 = vpop.f32.mrf.mxu0
        %v2833 = vadd.f32 0.0, %v2832
        %2834 = vmatmul.bf16.gmra.mxu0 %v2797
        %v2835 = vpop.f32.mrf.mxu0
        %v2836 = vadd.f32 0.0, %v2835
        %v2837 = vpop.f32.mrf.mxu0
        %v2838 = vadd.f32 0.0, %v2837
        %2839 = vdwg.mxu0
        %2840 = vmatpush.bf16.msra.mxu0 0
        %2841 = vmatpush.bf16.msra.mxu0 0
        %2842 = vmatpush.bf16.msra.mxu0 0
        %2843 = vmatpush.bf16.msra.mxu0 0
        %2844 = vmatpush.bf16.msra.mxu0 0
        %2845 = vmatpush.bf16.msra.mxu0 0
        %2846 = vmatpush.bf16.msra.mxu0 0
        %2847 = vmatpush.bf16.msra.mxu0 %v2803
        %2848 = vmatmul.bf16.gmra.mxu0 %v2788
        %v2849 = vpop.f32.mrf.mxu0
        %v2850 = vadd.f32 0.0, %v2849
        %v2851 = vpop.f32.mrf.mxu0
        %v2852 = vadd.f32 0.0, %v2851
        %2853 = vmatmul.bf16.gmra.mxu0 %v2791
        %v2854 = vpop.f32.mrf.mxu0
        %v2855 = vadd.f32 0.0, %v2854
        %v2856 = vpop.f32.mrf.mxu0
        %v2857 = vadd.f32 0.0, %v2856
        %2858 = vmatmul.bf16.gmra.mxu0 %v2794
        %v2859 = vpop.f32.mrf.mxu0
        %v2860 = vadd.f32 0.0, %v2859
        %v2861 = vpop.f32.mrf.mxu0
        %v2862 = vadd.f32 0.0, %v2861
        %2863 = vmatmul.bf16.gmra.mxu0 %v2797
        %v2864 = vpop.f32.mrf.mxu0
        %v2865 = vadd.f32 0.0, %v2864
        %v2866 = vpop.f32.mrf.mxu0
        %v2867 = vadd.f32 0.0, %v2866
        %2868 = vdwg.mxu0
        %2869 = vmatpush.bf16.msra.mxu0 0
        %2870 = vmatpush.bf16.msra.mxu0 0
        %2871 = vmatpush.bf16.msra.mxu0 0
        %2872 = vmatpush.bf16.msra.mxu0 0
        %2873 = vmatpush.bf16.msra.mxu0 0
        %2874 = vmatpush.bf16.msra.mxu0 0
        %2875 = vmatpush.bf16.msra.mxu0 0
        %2876 = vmatpush.bf16.msra.mxu0 %v2806
        %2877 = vmatmul.bf16.gmra.mxu0 %v2788
        %v2878 = vpop.f32.mrf.mxu0
        %v2879 = vadd.f32 0.0, %v2878
        %v2880 = vpop.f32.mrf.mxu0
        %v2881 = vadd.f32 0.0, %v2880
        %2882 = vmatmul.bf16.gmra.mxu0 %v2791
        %v2883 = vpop.f32.mrf.mxu0
        %v2884 = vadd.f32 0.0, %v2883
        %v2885 = vpop.f32.mrf.mxu0
        %v2886 = vadd.f32 0.0, %v2885
        %2887 = vmatmul.bf16.gmra.mxu0 %v2794
        %v2888 = vpop.f32.mrf.mxu0
        %v2889 = vadd.f32 0.0, %v2888
        %v2890 = vpop.f32.mrf.mxu0
        %v2891 = vadd.f32 0.0, %v2890
        %2892 = vmatmul.bf16.gmra.mxu0 %v2797
        %v2893 = vpop.f32.mrf.mxu0
        %v2894 = vadd.f32 0.0, %v2893
        %v2895 = vpop.f32.mrf.mxu0
        %v2896 = vadd.f32 0.0, %v2895
        %2897 = vdwg.mxu0
        %2898 = vmatpush.bf16.msra.mxu0 0
        %2899 = vmatpush.bf16.msra.mxu0 0
        %2900 = vmatpush.bf16.msra.mxu0 0
        %2901 = vmatpush.bf16.msra.mxu0 0
        %2902 = vmatpush.bf16.msra.mxu0 0
        %2903 = vmatpush.bf16.msra.mxu0 0
        %2904 = vmatpush.bf16.msra.mxu0 0
        %2905 = vmatpush.bf16.msra.mxu0 %v2809
        %2906 = vmatmul.bf16.gmra.mxu0 %v2788
        %v2907 = vpop.f32.mrf.mxu0
        %v2908 = vadd.f32 0.0, %v2907
        %v2909 = vpop.f32.mrf.mxu0
        %v2910 = vadd.f32 0.0, %v2909
        %2911 = vmatmul.bf16.gmra.mxu0 %v2791
        %v2912 = vpop.f32.mrf.mxu0
        %v2913 = vadd.f32 0.0, %v2912
        %v2914 = vpop.f32.mrf.mxu0
        %v2915 = vadd.f32 0.0, %v2914
        %2916 = vmatmul.bf16.gmra.mxu0 %v2794
        %v2917 = vpop.f32.mrf.mxu0
        %v2918 = vadd.f32 0.0, %v2917
        %v2919 = vpop.f32.mrf.mxu0
        %v2920 = vadd.f32 0.0, %v2919
        %2921 = vmatmul.bf16.gmra.mxu0 %v2797
        %v2922 = vpop.f32.mrf.mxu0
        %v2923 = vadd.f32 0.0, %v2922
        %v2924 = vpop.f32.mrf.mxu0
        %v2925 = vadd.f32 0.0, %v2924
        %2926 = vdwg.mxu0
        %v2927 = vadd.f32 %v2605, %v2821
        %v2928 = vadd.f32 %v2606, %v2850
        %v2929 = vadd.f32 %v2607, %v2879
        %v2930 = vadd.f32 %v2608, %v2908
        %v2931 = vadd.f32 %v2609, %v2823
        %v2932 = vadd.f32 %v2610, %v2852
        %v2933 = vadd.f32 %v2611, %v2881
        %v2934 = vadd.f32 %v2612, %v2910
        %v2935 = vadd.f32 %v2613, %v2826
        %v2936 = vadd.f32 %v2614, %v2855
        %v2937 = vadd.f32 %v2615, %v2884
        %v2938 = vadd.f32 %v2616, %v2913
        %v2939 = vadd.f32 %v2617, %v2828
        %v2940 = vadd.f32 %v2618, %v2857
        %v2941 = vadd.f32 %v2619, %v2886
        %v2942 = vadd.f32 %v2620, %v2915
        %v2943 = vadd.f32 %v2621, %v2831
        %v2944 = vadd.f32 %v2622, %v2860
        %v2945 = vadd.f32 %v2623, %v2889
        %v2946 = vadd.f32 %v2624, %v2918
        %v2947 = vadd.f32 %v2625, %v2833
        %v2948 = vadd.f32 %v2626, %v2862
        %v2949 = vadd.f32 %v2627, %v2891
        %v2950 = vadd.f32 %v2628, %v2920
        %v2951 = vadd.f32 %v2629, %v2836
        %v2952 = vadd.f32 %v2630, %v2865
        %v2953 = vadd.f32 %v2631, %v2894
        %v2954 = vadd.f32 %v2632, %v2923
        %v2955 = vadd.f32 %v2633, %v2838
        %v2956 = vadd.f32 %v2634, %v2867
        %v2957 = vadd.f32 %v2635, %v2896
        %v2958 = vadd.f32 %v2636, %v2925
        %v2959 = vadd.f32 %v2766, %v848
        %v2960 = vadd.f32 %v2767, %v849
        %v2961 = vadd.f32 %v2768, %v850
        %v2962 = vadd.f32 %v2769, %v851
        %2963 = vrot.lane.b32.xlu0 %v2959, 1
        %v2964 = vpop.permute.xlu0 %2963
        %2965 = vrot.lane.b32.xlu0 %v2960, 1
        %v2966 = vpop.permute.xlu0 %2965
        %2967 = vrot.lane.b32.xlu0 %v2961, 1
        %v2968 = vpop.permute.xlu0 %2967
        %2969 = vrot.lane.b32.xlu0 %v2962, 1
        %v2970 = vpop.permute.xlu0 %2969
        %v2971 = vsel %vm913, %v2968, %v2970
        %v2972 = vsel %vm913, %v2966, %v2968
        %v2973 = vsel %vm913, %v2964, %v2966
        %v2974 = vsel %vm913, %v2970, %v2964
        %v2975 = vsel %vm922, %v2974, 0.0
        %v2976 = vsel %vm923, %v2973, 0.0
        %v2977 = vsel %vm924, %v2972, 0.0
        %v2978 = vsel %vm925, %v2971, 0.0
        %2979 = vrot.lane.b32.xlu0 %v2959, 127
        %v2980 = vpop.permute.xlu0 %2979
        %2981 = vrot.lane.b32.xlu0 %v2960, 127
        %v2982 = vpop.permute.xlu0 %2981
        %2983 = vrot.lane.b32.xlu0 %v2961, 127
        %v2984 = vpop.permute.xlu0 %2983
        %2985 = vrot.lane.b32.xlu0 %v2962, 127
        %v2986 = vpop.permute.xlu0 %2985
        %v2987 = vsel %vm938, %v2984, %v2986
        %v2988 = vsel %vm938, %v2982, %v2984
        %v2989 = vsel %vm938, %v2980, %v2982
        %v2990 = vsel %vm938, %v2986, %v2980
        %v2991 = vsel %vm947, %v2989, 0.0
        %v2992 = vsel %vm948, %v2988, 0.0
        %v2993 = vsel %vm949, %v2987, 0.0
        %v2994 = vsel %vm950, %v2990, 0.0
        %v2995 = vpack.c.bf16 %v2959, %v2975
        %v2996 = vpack.c.bf16 %v2960, %v2976
        %v2997 = vpack.c.bf16 %v2961, %v2977
        %v2998 = vpack.c.bf16 %v2962, %v2978
        %v2999 = vpack.c.bf16 %v2991, %v2991
        %v3000 = vpack.c.bf16 %v2992, %v2992
        %v3001 = vpack.c.bf16 %v2993, %v2993
        %v3002 = vpack.c.bf16 %v2994, %v2994
        %s3003 = scalar_lea.vmem %s2, 48
        %v3004 = vld [vmem:[%s3003] sm:$0xff]
        %v3005 = vpack.c.bf16 %v3004, %v3004
        %s3006 = scalar_lea.vmem %s9, 48
        %v3007 = vld [vmem:[%s3006] sm:$0xff]
        %3009 = vset.pattern.permute.xlu0 0
        %3010 = vperm.xlu0 %3009, %v3007
        %v3011 = vpop.permute.xlu0 %3010
        %v3014 = vsel %vm971, %v3005, 0
        %v3017 = vsel %vm975, %v2999, 0
        %v3020 = vsel %vm975, %v3000, 0
        %v3023 = vsel %vm975, %v3001, 0
        %v3026 = vsel %vm975, %v3002, 0
        %3028 = vmatpush.bf16.msra.mxu0 0
        %3029 = vmatpush.bf16.msra.mxu0 0
        %3030 = vmatpush.bf16.msra.mxu0 0
        %3031 = vmatpush.bf16.msra.mxu0 0
        %3032 = vmatpush.bf16.msra.mxu0 0
        %3033 = vmatpush.bf16.msra.mxu0 0
        %3034 = vmatpush.bf16.msra.mxu0 %v3017
        %3035 = vmatpush.bf16.msra.mxu0 %v2995
        %3036 = vmatmul.bf16.gmra.mxu0 %v3014
        %v3037 = vpop.f32.mrf.mxu0
        %v3038 = vadd.f32 %v3011, %v3037
        %v3039 = vpop.f32.mrf.mxu0
        %3040 = vdwg.mxu0
        %3041 = vmatpush.bf16.msra.mxu0 0
        %3042 = vmatpush.bf16.msra.mxu0 0
        %3043 = vmatpush.bf16.msra.mxu0 0
        %3044 = vmatpush.bf16.msra.mxu0 0
        %3045 = vmatpush.bf16.msra.mxu0 0
        %3046 = vmatpush.bf16.msra.mxu0 0
        %3047 = vmatpush.bf16.msra.mxu0 %v3020
        %3048 = vmatpush.bf16.msra.mxu0 %v2996
        %3049 = vmatmul.bf16.gmra.mxu0 %v3014
        %v3050 = vpop.f32.mrf.mxu0
        %v3051 = vadd.f32 %v3011, %v3050
        %v3052 = vpop.f32.mrf.mxu0
        %3053 = vdwg.mxu0
        %3054 = vmatpush.bf16.msra.mxu0 0
        %3055 = vmatpush.bf16.msra.mxu0 0
        %3056 = vmatpush.bf16.msra.mxu0 0
        %3057 = vmatpush.bf16.msra.mxu0 0
        %3058 = vmatpush.bf16.msra.mxu0 0
        %3059 = vmatpush.bf16.msra.mxu0 0
        %3060 = vmatpush.bf16.msra.mxu0 %v3023
        %3061 = vmatpush.bf16.msra.mxu0 %v2997
        %3062 = vmatmul.bf16.gmra.mxu0 %v3014
        %v3063 = vpop.f32.mrf.mxu0
        %v3064 = vadd.f32 %v3011, %v3063
        %v3065 = vpop.f32.mrf.mxu0
        %3066 = vdwg.mxu0
        %3067 = vmatpush.bf16.msra.mxu0 0
        %3068 = vmatpush.bf16.msra.mxu0 0
        %3069 = vmatpush.bf16.msra.mxu0 0
        %3070 = vmatpush.bf16.msra.mxu0 0
        %3071 = vmatpush.bf16.msra.mxu0 0
        %3072 = vmatpush.bf16.msra.mxu0 0
        %3073 = vmatpush.bf16.msra.mxu0 %v3026
        %3074 = vmatpush.bf16.msra.mxu0 %v2998
        %3075 = vmatmul.bf16.gmra.mxu0 %v3014
        %v3076 = vpop.f32.mrf.mxu0
        %v3077 = vadd.f32 %v3011, %v3076
        %v3078 = vpop.f32.mrf.mxu0
        %3079 = vdwg.mxu0
        %v3080 = vmax.f32 %v3038, 0.0
        %v3081 = vmax.f32 %v3051, 0.0
        %v3082 = vmax.f32 %v3064, 0.0
        %v3083 = vmax.f32 %v3077, 0.0
        %3084 = vset.pattern.permute.xlu0 1
        %3085 = vperm.xlu0 %3084, %v3007
        %v3086 = vpop.permute.xlu0 %3085
        %v3088 = vadd.f32 %v3080, %v3086
        %v3089 = vadd.f32 %v3081, %v3086
        %v3090 = vadd.f32 %v3082, %v3086
        %v3091 = vadd.f32 %v3083, %v3086
        %s3092 = scalar_lea.vmem %s3, 384
        %v3093 = vld [vmem:[%s3092] sm:$0xff]
        %v3094 = vld [vmem:[%s3092 + $0x8] sm:$0xff]
        %v3095 = vld [vmem:[%s3092 + $0x10] sm:$0xff]
        %v3096 = vld [vmem:[%s3092 + $0x18] sm:$0xff]
        %v3097 = vld [vmem:[%s3092 + $0x20] sm:$0xff]
        %v3098 = vld [vmem:[%s3092 + $0x28] sm:$0xff]
        %v3099 = vld [vmem:[%s3092 + $0x30] sm:$0xff]
        %v3100 = vld [vmem:[%s3092 + $0x38] sm:$0xff]
        %v3101 = vpack.c.bf16 %v3094, %v3093
        %v3102 = vpack.c.bf16 %v3096, %v3095
        %v3103 = vpack.c.bf16 %v3098, %v3097
        %v3104 = vpack.c.bf16 %v3100, %v3099
        %v3105 = vpack.c.bf16 %v3088, %v3088
        %v3106 = vpack.c.bf16 %v3089, %v3089
        %v3107 = vpack.c.bf16 %v3090, %v3090
        %v3108 = vpack.c.bf16 %v3091, %v3091
        %v3110 = vsel %vm1068, %v3101, 0
        %v3113 = vsel %vm1068, %v3102, 0
        %v3116 = vsel %vm1068, %v3103, 0
        %v3119 = vsel %vm1068, %v3104, 0
        %v3122 = vsel %vm975, %v3105, 0
        %v3125 = vsel %vm975, %v3106, 0
        %v3128 = vsel %vm975, %v3107, 0
        %v3131 = vsel %vm975, %v3108, 0
        %3133 = vmatpush.bf16.msra.mxu0 0
        %3134 = vmatpush.bf16.msra.mxu0 0
        %3135 = vmatpush.bf16.msra.mxu0 0
        %3136 = vmatpush.bf16.msra.mxu0 0
        %3137 = vmatpush.bf16.msra.mxu0 0
        %3138 = vmatpush.bf16.msra.mxu0 0
        %3139 = vmatpush.bf16.msra.mxu0 0
        %3140 = vmatpush.bf16.msra.mxu0 %v3122
        %3141 = vmatmul.bf16.gmra.mxu0 %v3110
        %v3142 = vpop.f32.mrf.mxu0
        %v3143 = vadd.f32 0.0, %v3142
        %v3144 = vpop.f32.mrf.mxu0
        %v3145 = vadd.f32 0.0, %v3144
        %3146 = vmatmul.bf16.gmra.mxu0 %v3113
        %v3147 = vpop.f32.mrf.mxu0
        %v3148 = vadd.f32 0.0, %v3147
        %v3149 = vpop.f32.mrf.mxu0
        %v3150 = vadd.f32 0.0, %v3149
        %3151 = vmatmul.bf16.gmra.mxu0 %v3116
        %v3152 = vpop.f32.mrf.mxu0
        %v3153 = vadd.f32 0.0, %v3152
        %v3154 = vpop.f32.mrf.mxu0
        %v3155 = vadd.f32 0.0, %v3154
        %3156 = vmatmul.bf16.gmra.mxu0 %v3119
        %v3157 = vpop.f32.mrf.mxu0
        %v3158 = vadd.f32 0.0, %v3157
        %v3159 = vpop.f32.mrf.mxu0
        %v3160 = vadd.f32 0.0, %v3159
        %3161 = vdwg.mxu0
        %3162 = vmatpush.bf16.msra.mxu0 0
        %3163 = vmatpush.bf16.msra.mxu0 0
        %3164 = vmatpush.bf16.msra.mxu0 0
        %3165 = vmatpush.bf16.msra.mxu0 0
        %3166 = vmatpush.bf16.msra.mxu0 0
        %3167 = vmatpush.bf16.msra.mxu0 0
        %3168 = vmatpush.bf16.msra.mxu0 0
        %3169 = vmatpush.bf16.msra.mxu0 %v3125
        %3170 = vmatmul.bf16.gmra.mxu0 %v3110
        %v3171 = vpop.f32.mrf.mxu0
        %v3172 = vadd.f32 0.0, %v3171
        %v3173 = vpop.f32.mrf.mxu0
        %v3174 = vadd.f32 0.0, %v3173
        %3175 = vmatmul.bf16.gmra.mxu0 %v3113
        %v3176 = vpop.f32.mrf.mxu0
        %v3177 = vadd.f32 0.0, %v3176
        %v3178 = vpop.f32.mrf.mxu0
        %v3179 = vadd.f32 0.0, %v3178
        %3180 = vmatmul.bf16.gmra.mxu0 %v3116
        %v3181 = vpop.f32.mrf.mxu0
        %v3182 = vadd.f32 0.0, %v3181
        %v3183 = vpop.f32.mrf.mxu0
        %v3184 = vadd.f32 0.0, %v3183
        %3185 = vmatmul.bf16.gmra.mxu0 %v3119
        %v3186 = vpop.f32.mrf.mxu0
        %v3187 = vadd.f32 0.0, %v3186
        %v3188 = vpop.f32.mrf.mxu0
        %v3189 = vadd.f32 0.0, %v3188
        %3190 = vdwg.mxu0
        %3191 = vmatpush.bf16.msra.mxu0 0
        %3192 = vmatpush.bf16.msra.mxu0 0
        %3193 = vmatpush.bf16.msra.mxu0 0
        %3194 = vmatpush.bf16.msra.mxu0 0
        %3195 = vmatpush.bf16.msra.mxu0 0
        %3196 = vmatpush.bf16.msra.mxu0 0
        %3197 = vmatpush.bf16.msra.mxu0 0
        %3198 = vmatpush.bf16.msra.mxu0 %v3128
        %3199 = vmatmul.bf16.gmra.mxu0 %v3110
        %v3200 = vpop.f32.mrf.mxu0
        %v3201 = vadd.f32 0.0, %v3200
        %v3202 = vpop.f32.mrf.mxu0
        %v3203 = vadd.f32 0.0, %v3202
        %3204 = vmatmul.bf16.gmra.mxu0 %v3113
        %v3205 = vpop.f32.mrf.mxu0
        %v3206 = vadd.f32 0.0, %v3205
        %v3207 = vpop.f32.mrf.mxu0
        %v3208 = vadd.f32 0.0, %v3207
        %3209 = vmatmul.bf16.gmra.mxu0 %v3116
        %v3210 = vpop.f32.mrf.mxu0
        %v3211 = vadd.f32 0.0, %v3210
        %v3212 = vpop.f32.mrf.mxu0
        %v3213 = vadd.f32 0.0, %v3212
        %3214 = vmatmul.bf16.gmra.mxu0 %v3119
        %v3215 = vpop.f32.mrf.mxu0
        %v3216 = vadd.f32 0.0, %v3215
        %v3217 = vpop.f32.mrf.mxu0
        %v3218 = vadd.f32 0.0, %v3217
        %3219 = vdwg.mxu0
        %3220 = vmatpush.bf16.msra.mxu0 0
        %3221 = vmatpush.bf16.msra.mxu0 0
        %3222 = vmatpush.bf16.msra.mxu0 0
        %3223 = vmatpush.bf16.msra.mxu0 0
        %3224 = vmatpush.bf16.msra.mxu0 0
        %3225 = vmatpush.bf16.msra.mxu0 0
        %3226 = vmatpush.bf16.msra.mxu0 0
        %3227 = vmatpush.bf16.msra.mxu0 %v3131
        %3228 = vmatmul.bf16.gmra.mxu0 %v3110
        %v3229 = vpop.f32.mrf.mxu0
        %v3230 = vadd.f32 0.0, %v3229
        %v3231 = vpop.f32.mrf.mxu0
        %v3232 = vadd.f32 0.0, %v3231
        %3233 = vmatmul.bf16.gmra.mxu0 %v3113
        %v3234 = vpop.f32.mrf.mxu0
        %v3235 = vadd.f32 0.0, %v3234
        %v3236 = vpop.f32.mrf.mxu0
        %v3237 = vadd.f32 0.0, %v3236
        %3238 = vmatmul.bf16.gmra.mxu0 %v3116
        %v3239 = vpop.f32.mrf.mxu0
        %v3240 = vadd.f32 0.0, %v3239
        %v3241 = vpop.f32.mrf.mxu0
        %v3242 = vadd.f32 0.0, %v3241
        %3243 = vmatmul.bf16.gmra.mxu0 %v3119
        %v3244 = vpop.f32.mrf.mxu0
        %v3245 = vadd.f32 0.0, %v3244
        %v3246 = vpop.f32.mrf.mxu0
        %v3247 = vadd.f32 0.0, %v3246
        %3248 = vdwg.mxu0
        %v3249 = vadd.f32 %v2927, %v3143
        %v3250 = vadd.f32 %v2928, %v3172
        %v3251 = vadd.f32 %v2929, %v3201
        %v3252 = vadd.f32 %v2930, %v3230
        %v3253 = vadd.f32 %v2931, %v3145
        %v3254 = vadd.f32 %v2932, %v3174
        %v3255 = vadd.f32 %v2933, %v3203
        %v3256 = vadd.f32 %v2934, %v3232
        %v3257 = vadd.f32 %v2935, %v3148
        %v3258 = vadd.f32 %v2936, %v3177
        %v3259 = vadd.f32 %v2937, %v3206
        %v3260 = vadd.f32 %v2938, %v3235
        %v3261 = vadd.f32 %v2939, %v3150
        %v3262 = vadd.f32 %v2940, %v3179
        %v3263 = vadd.f32 %v2941, %v3208
        %v3264 = vadd.f32 %v2942, %v3237
        %v3265 = vadd.f32 %v2943, %v3153
        %v3266 = vadd.f32 %v2944, %v3182
        %v3267 = vadd.f32 %v2945, %v3211
        %v3268 = vadd.f32 %v2946, %v3240
        %v3269 = vadd.f32 %v2947, %v3155
        %v3270 = vadd.f32 %v2948, %v3184
        %v3271 = vadd.f32 %v2949, %v3213
        %v3272 = vadd.f32 %v2950, %v3242
        %v3273 = vadd.f32 %v2951, %v3158
        %v3274 = vadd.f32 %v2952, %v3187
        %v3275 = vadd.f32 %v2953, %v3216
        %v3276 = vadd.f32 %v2954, %v3245
        %v3277 = vadd.f32 %v2955, %v3160
        %v3278 = vadd.f32 %v2956, %v3189
        %v3279 = vadd.f32 %v2957, %v3218
        %v3280 = vadd.f32 %v2958, %v3247
        %3281 = vset.pattern.permute.xlu0 2
        %3282 = vperm.xlu0 %3281, %v470
        %v3283 = vpop.permute.xlu0 %3282
        %3285 = vset.pattern.permute.xlu0 2
        %3286 = vperm.xlu0 %3285, %v471
        %v3287 = vpop.permute.xlu0 %3286
        %3289 = vset.pattern.permute.xlu0 2
        %3290 = vperm.xlu0 %3289, %v472
        %v3291 = vpop.permute.xlu0 %3290
        %3293 = vset.pattern.permute.xlu0 2
        %3294 = vperm.xlu0 %3293, %v473
        %v3295 = vpop.permute.xlu0 %3294
        %3297 = vset.pattern.permute.xlu0 2
        %3298 = vperm.xlu0 %3297, %v474
        %v3299 = vpop.permute.xlu0 %3298
        %3301 = vset.pattern.permute.xlu0 2
        %3302 = vperm.xlu0 %3301, %v475
        %v3303 = vpop.permute.xlu0 %3302
        %3305 = vset.pattern.permute.xlu0 2
        %3306 = vperm.xlu0 %3305, %v476
        %v3307 = vpop.permute.xlu0 %3306
        %3309 = vset.pattern.permute.xlu0 2
        %3310 = vperm.xlu0 %3309, %v477
        %v3311 = vpop.permute.xlu0 %3310
        %v3313 = vadd.f32 %v3249, %v3283
        %v3314 = vadd.f32 %v3250, %v3283
        %v3315 = vadd.f32 %v3251, %v3283
        %v3316 = vadd.f32 %v3252, %v3283
        %v3317 = vadd.f32 %v3253, %v3287
        %v3318 = vadd.f32 %v3254, %v3287
        %v3319 = vadd.f32 %v3255, %v3287
        %v3320 = vadd.f32 %v3256, %v3287
        %v3321 = vadd.f32 %v3257, %v3291
        %v3322 = vadd.f32 %v3258, %v3291
        %v3323 = vadd.f32 %v3259, %v3291
        %v3324 = vadd.f32 %v3260, %v3291
        %v3325 = vadd.f32 %v3261, %v3295
        %v3326 = vadd.f32 %v3262, %v3295
        %v3327 = vadd.f32 %v3263, %v3295
        %v3328 = vadd.f32 %v3264, %v3295
        %v3329 = vadd.f32 %v3265, %v3299
        %v3330 = vadd.f32 %v3266, %v3299
        %v3331 = vadd.f32 %v3267, %v3299
        %v3332 = vadd.f32 %v3268, %v3299
        %v3333 = vadd.f32 %v3269, %v3303
        %v3334 = vadd.f32 %v3270, %v3303
        %v3335 = vadd.f32 %v3271, %v3303
        %v3336 = vadd.f32 %v3272, %v3303
        %v3337 = vadd.f32 %v3273, %v3307
        %v3338 = vadd.f32 %v3274, %v3307
        %v3339 = vadd.f32 %v3275, %v3307
        %v3340 = vadd.f32 %v3276, %v3307
        %v3341 = vadd.f32 %v3277, %v3311
        %v3342 = vadd.f32 %v3278, %v3311
        %v3343 = vadd.f32 %v3279, %v3311
        %v3344 = vadd.f32 %v3280, %v3311
        %v3345 = vmax.f32 %v3313, 0.0
        %v3346 = vmax.f32 %v3314, 0.0
        %v3347 = vmax.f32 %v3315, 0.0
        %v3348 = vmax.f32 %v3316, 0.0
        %v3349 = vmax.f32 %v3317, 0.0
        %v3350 = vmax.f32 %v3318, 0.0
        %v3351 = vmax.f32 %v3319, 0.0
        %v3352 = vmax.f32 %v3320, 0.0
        %v3353 = vmax.f32 %v3321, 0.0
        %v3354 = vmax.f32 %v3322, 0.0
        %v3355 = vmax.f32 %v3323, 0.0
        %v3356 = vmax.f32 %v3324, 0.0
        %v3357 = vmax.f32 %v3325, 0.0
        %v3358 = vmax.f32 %v3326, 0.0
        %v3359 = vmax.f32 %v3327, 0.0
        %v3360 = vmax.f32 %v3328, 0.0
        %v3361 = vmax.f32 %v3329, 0.0
        %v3362 = vmax.f32 %v3330, 0.0
        %v3363 = vmax.f32 %v3331, 0.0
        %v3364 = vmax.f32 %v3332, 0.0
        %v3365 = vmax.f32 %v3333, 0.0
        %v3366 = vmax.f32 %v3334, 0.0
        %v3367 = vmax.f32 %v3335, 0.0
        %v3368 = vmax.f32 %v3336, 0.0
        %v3369 = vmax.f32 %v3337, 0.0
        %v3370 = vmax.f32 %v3338, 0.0
        %v3371 = vmax.f32 %v3339, 0.0
        %v3372 = vmax.f32 %v3340, 0.0
        %v3373 = vmax.f32 %v3341, 0.0
        %v3374 = vmax.f32 %v3342, 0.0
        %v3375 = vmax.f32 %v3343, 0.0
        %v3376 = vmax.f32 %v3344, 0.0
        %3377 = vset.pattern.permute.xlu0 3
        %3378 = vperm.xlu0 %3377, %v470
        %v3379 = vpop.permute.xlu0 %3378
        %3381 = vset.pattern.permute.xlu0 3
        %3382 = vperm.xlu0 %3381, %v471
        %v3383 = vpop.permute.xlu0 %3382
        %3385 = vset.pattern.permute.xlu0 3
        %3386 = vperm.xlu0 %3385, %v472
        %v3387 = vpop.permute.xlu0 %3386
        %3389 = vset.pattern.permute.xlu0 3
        %3390 = vperm.xlu0 %3389, %v473
        %v3391 = vpop.permute.xlu0 %3390
        %3393 = vset.pattern.permute.xlu0 3
        %3394 = vperm.xlu0 %3393, %v474
        %v3395 = vpop.permute.xlu0 %3394
        %3397 = vset.pattern.permute.xlu0 3
        %3398 = vperm.xlu0 %3397, %v475
        %v3399 = vpop.permute.xlu0 %3398
        %3401 = vset.pattern.permute.xlu0 3
        %3402 = vperm.xlu0 %3401, %v476
        %v3403 = vpop.permute.xlu0 %3402
        %3405 = vset.pattern.permute.xlu0 3
        %3406 = vperm.xlu0 %3405, %v477
        %v3407 = vpop.permute.xlu0 %3406
        %v3409 = vadd.f32 %v3345, %v3379
        %v3410 = vadd.f32 %v3346, %v3379
        %v3411 = vadd.f32 %v3347, %v3379
        %v3412 = vadd.f32 %v3348, %v3379
        %v3413 = vadd.f32 %v3349, %v3383
        %v3414 = vadd.f32 %v3350, %v3383
        %v3415 = vadd.f32 %v3351, %v3383
        %v3416 = vadd.f32 %v3352, %v3383
        %v3417 = vadd.f32 %v3353, %v3387
        %v3418 = vadd.f32 %v3354, %v3387
        %v3419 = vadd.f32 %v3355, %v3387
        %v3420 = vadd.f32 %v3356, %v3387
        %v3421 = vadd.f32 %v3357, %v3391
        %v3422 = vadd.f32 %v3358, %v3391
        %v3423 = vadd.f32 %v3359, %v3391
        %v3424 = vadd.f32 %v3360, %v3391
        %v3425 = vadd.f32 %v3361, %v3395
        %v3426 = vadd.f32 %v3362, %v3395
        %v3427 = vadd.f32 %v3363, %v3395
        %v3428 = vadd.f32 %v3364, %v3395
        %v3429 = vadd.f32 %v3365, %v3399
        %v3430 = vadd.f32 %v3366, %v3399
        %v3431 = vadd.f32 %v3367, %v3399
        %v3432 = vadd.f32 %v3368, %v3399
        %v3433 = vadd.f32 %v3369, %v3403
        %v3434 = vadd.f32 %v3370, %v3403
        %v3435 = vadd.f32 %v3371, %v3403
        %v3436 = vadd.f32 %v3372, %v3403
        %v3437 = vadd.f32 %v3373, %v3407
        %v3438 = vadd.f32 %v3374, %v3407
        %v3439 = vadd.f32 %v3375, %v3407
        %v3440 = vadd.f32 %v3376, %v3407
        %v3441 = vpack.c.bf16 %v3413, %v3409
        %v3442 = vpack.c.bf16 %v3414, %v3410
        %v3443 = vpack.c.bf16 %v3415, %v3411
        %v3444 = vpack.c.bf16 %v3416, %v3412
        %v3445 = vpack.c.bf16 %v3421, %v3417
        %v3446 = vpack.c.bf16 %v3422, %v3418
        %v3447 = vpack.c.bf16 %v3423, %v3419
        %v3448 = vpack.c.bf16 %v3424, %v3420
        %v3449 = vpack.c.bf16 %v3429, %v3425
        %v3450 = vpack.c.bf16 %v3430, %v3426
        %v3451 = vpack.c.bf16 %v3431, %v3427
        %v3452 = vpack.c.bf16 %v3432, %v3428
        %v3453 = vpack.c.bf16 %v3437, %v3433
        %v3454 = vpack.c.bf16 %v3438, %v3434
        %v3455 = vpack.c.bf16 %v3439, %v3435
        %v3456 = vpack.c.bf16 %v3440, %v3436
        %v3457 = vld [vmem:[%s6] sm:$0xff]
        %v3458 = vld [vmem:[%s6 + $0x8] sm:$0xff]
        %v3459 = vld [vmem:[%s6 + $0x10] sm:$0xff]
        %v3460 = vld [vmem:[%s6 + $0x18] sm:$0xff]
        %v3461 = vld [vmem:[%s6 + $0x20] sm:$0xff]
        %v3462 = vld [vmem:[%s6 + $0x28] sm:$0xff]
        %v3463 = vld [vmem:[%s6 + $0x30] sm:$0xff]
        %v3464 = vld [vmem:[%s6 + $0x38] sm:$0xff]
        %v3465 = vld [vmem:[%s6 + $0x40] sm:$0xff]
        %v3466 = vld [vmem:[%s6 + $0x48] sm:$0xff]
        %v3467 = vld [vmem:[%s6 + $0x50] sm:$0xff]
        %v3468 = vld [vmem:[%s6 + $0x58] sm:$0xff]
        %v3469 = vld [vmem:[%s6 + $0x60] sm:$0xff]
        %v3470 = vld [vmem:[%s6 + $0x68] sm:$0xff]
        %v3471 = vld [vmem:[%s6 + $0x70] sm:$0xff]
        %v3472 = vld [vmem:[%s6 + $0x78] sm:$0xff]
        %v3473 = vld [vmem:[%s6 + $0x80] sm:$0xff]
        %v3474 = vld [vmem:[%s6 + $0x88] sm:$0xff]
        %v3475 = vld [vmem:[%s6 + $0x90] sm:$0xff]
        %v3476 = vld [vmem:[%s6 + $0x98] sm:$0xff]
        %v3477 = vld [vmem:[%s6 + $0xa0] sm:$0xff]
        %v3478 = vld [vmem:[%s6 + $0xa8] sm:$0xff]
        %v3479 = vld [vmem:[%s6 + $0xb0] sm:$0xff]
        %v3480 = vld [vmem:[%s6 + $0xb8] sm:$0xff]
        %v3481 = vld [vmem:[%s6 + $0xc0] sm:$0xff]
        %v3482 = vld [vmem:[%s6 + $0xc8] sm:$0xff]
        %v3483 = vld [vmem:[%s6 + $0xd0] sm:$0xff]
        %v3484 = vld [vmem:[%s6 + $0xd8] sm:$0xff]
        %v3485 = vld [vmem:[%s6 + $0xe0] sm:$0xff]
        %v3486 = vld [vmem:[%s6 + $0xe8] sm:$0xff]
        %v3487 = vld [vmem:[%s6 + $0xf0] sm:$0xff]
        %v3488 = vld [vmem:[%s6 + $0xf8] sm:$0xff]
        %v3489 = vld [vmem:[%s6 + $0x100] sm:$0xff]
        %v3490 = vld [vmem:[%s6 + $0x108] sm:$0xff]
        %v3491 = vld [vmem:[%s6 + $0x110] sm:$0xff]
        %v3492 = vld [vmem:[%s6 + $0x118] sm:$0xff]
        %v3493 = vld [vmem:[%s6 + $0x120] sm:$0xff]
        %v3494 = vld [vmem:[%s6 + $0x128] sm:$0xff]
        %v3495 = vld [vmem:[%s6 + $0x130] sm:$0xff]
        %v3496 = vld [vmem:[%s6 + $0x138] sm:$0xff]
        %v3497 = vld [vmem:[%s6 + $0x140] sm:$0xff]
        %v3498 = vld [vmem:[%s6 + $0x148] sm:$0xff]
        %v3499 = vld [vmem:[%s6 + $0x150] sm:$0xff]
        %v3500 = vld [vmem:[%s6 + $0x158] sm:$0xff]
        %v3501 = vld [vmem:[%s6 + $0x160] sm:$0xff]
        %v3502 = vld [vmem:[%s6 + $0x168] sm:$0xff]
        %v3503 = vld [vmem:[%s6 + $0x170] sm:$0xff]
        %v3504 = vld [vmem:[%s6 + $0x178] sm:$0xff]
        %v3505 = vld [vmem:[%s6 + $0x180] sm:$0xff]
        %v3506 = vld [vmem:[%s6 + $0x188] sm:$0xff]
        %v3507 = vld [vmem:[%s6 + $0x190] sm:$0xff]
        %v3508 = vld [vmem:[%s6 + $0x198] sm:$0xff]
        %v3509 = vld [vmem:[%s6 + $0x1a0] sm:$0xff]
        %v3510 = vld [vmem:[%s6 + $0x1a8] sm:$0xff]
        %v3511 = vld [vmem:[%s6 + $0x1b0] sm:$0xff]
        %v3512 = vld [vmem:[%s6 + $0x1b8] sm:$0xff]
        %v3513 = vld [vmem:[%s6 + $0x1c0] sm:$0xff]
        %v3514 = vld [vmem:[%s6 + $0x1c8] sm:$0xff]
        %v3515 = vld [vmem:[%s6 + $0x1d0] sm:$0xff]
        %v3516 = vld [vmem:[%s6 + $0x1d8] sm:$0xff]
        %v3517 = vld [vmem:[%s6 + $0x1e0] sm:$0xff]
        %v3518 = vld [vmem:[%s6 + $0x1e8] sm:$0xff]
        %v3519 = vld [vmem:[%s6 + $0x1f0] sm:$0xff]
        %v3520 = vld [vmem:[%s6 + $0x1f8] sm:$0xff]
        %v3521 = vpack.c.bf16 %v3458, %v3457
        %v3522 = vpack.c.bf16 %v3460, %v3459
        %v3523 = vpack.c.bf16 %v3462, %v3461
        %v3524 = vpack.c.bf16 %v3464, %v3463
        %v3525 = vpack.c.bf16 %v3466, %v3465
        %v3526 = vpack.c.bf16 %v3468, %v3467
        %v3527 = vpack.c.bf16 %v3470, %v3469
        %v3528 = vpack.c.bf16 %v3472, %v3471
        %v3529 = vpack.c.bf16 %v3474, %v3473
        %v3530 = vpack.c.bf16 %v3476, %v3475
        %v3531 = vpack.c.bf16 %v3478, %v3477
        %v3532 = vpack.c.bf16 %v3480, %v3479
        %v3533 = vpack.c.bf16 %v3482, %v3481
        %v3534 = vpack.c.bf16 %v3484, %v3483
        %v3535 = vpack.c.bf16 %v3486, %v3485
        %v3536 = vpack.c.bf16 %v3488, %v3487
        %v3537 = vpack.c.bf16 %v3490, %v3489
        %v3538 = vpack.c.bf16 %v3492, %v3491
        %v3539 = vpack.c.bf16 %v3494, %v3493
        %v3540 = vpack.c.bf16 %v3496, %v3495
        %v3541 = vpack.c.bf16 %v3498, %v3497
        %v3542 = vpack.c.bf16 %v3500, %v3499
        %v3543 = vpack.c.bf16 %v3502, %v3501
        %v3544 = vpack.c.bf16 %v3504, %v3503
        %v3545 = vpack.c.bf16 %v3506, %v3505
        %v3546 = vpack.c.bf16 %v3508, %v3507
        %v3547 = vpack.c.bf16 %v3510, %v3509
        %v3548 = vpack.c.bf16 %v3512, %v3511
        %v3549 = vpack.c.bf16 %v3514, %v3513
        %v3550 = vpack.c.bf16 %v3516, %v3515
        %v3551 = vpack.c.bf16 %v3518, %v3517
        %v3552 = vpack.c.bf16 %v3520, %v3519
        %3553 = vmatpush.bf16.msra.mxu0 %v3528
        %3554 = vmatpush.bf16.msra.mxu0 %v3527
        %3555 = vmatpush.bf16.msra.mxu0 %v3526
        %3556 = vmatpush.bf16.msra.mxu0 %v3525
        %3557 = vmatpush.bf16.msra.mxu0 %v3524
        %3558 = vmatpush.bf16.msra.mxu0 %v3523
        %3559 = vmatpush.bf16.msra.mxu0 %v3522
        %3560 = vmatpush.bf16.msra.mxu0 %v3521
        %3561 = vmatmul.bf16.gmra.mxu0 %v3441
        %v3562 = vpop.f32.mrf.mxu0
        %v3563 = vadd.f32 0.0, %v3562
        %v3564 = vpop.f32.mrf.mxu0
        %v3565 = vadd.f32 0.0, %v3564
        %3566 = vmatmul.bf16.gmra.mxu0 %v3445
        %v3567 = vpop.f32.mrf.mxu0
        %v3568 = vadd.f32 0.0, %v3567
        %v3569 = vpop.f32.mrf.mxu0
        %v3570 = vadd.f32 0.0, %v3569
        %3571 = vmatmul.bf16.gmra.mxu0 %v3449
        %v3572 = vpop.f32.mrf.mxu0
        %v3573 = vadd.f32 0.0, %v3572
        %v3574 = vpop.f32.mrf.mxu0
        %v3575 = vadd.f32 0.0, %v3574
        %3576 = vmatmul.bf16.gmra.mxu0 %v3453
        %v3577 = vpop.f32.mrf.mxu0
        %v3578 = vadd.f32 0.0, %v3577
        %v3579 = vpop.f32.mrf.mxu0
        %v3580 = vadd.f32 0.0, %v3579
        %3581 = vdwg.mxu0
        %3582 = vmatpush.bf16.msra.mxu0 %v3536
        %3583 = vmatpush.bf16.msra.mxu0 %v3535
        %3584 = vmatpush.bf16.msra.mxu0 %v3534
        %3585 = vmatpush.bf16.msra.mxu0 %v3533
        %3586 = vmatpush.bf16.msra.mxu0 %v3532
        %3587 = vmatpush.bf16.msra.mxu0 %v3531
        %3588 = vmatpush.bf16.msra.mxu0 %v3530
        %3589 = vmatpush.bf16.msra.mxu0 %v3529
        %3590 = vmatmul.bf16.gmra.mxu0 %v3442
        %v3591 = vpop.f32.mrf.mxu0
        %v3592 = vadd.f32 %v3563, %v3591
        %v3593 = vpop.f32.mrf.mxu0
        %v3594 = vadd.f32 %v3565, %v3593
        %3595 = vmatmul.bf16.gmra.mxu0 %v3446
        %v3596 = vpop.f32.mrf.mxu0
        %v3597 = vadd.f32 %v3568, %v3596
        %v3598 = vpop.f32.mrf.mxu0
        %v3599 = vadd.f32 %v3570, %v3598
        %3600 = vmatmul.bf16.gmra.mxu0 %v3450
        %v3601 = vpop.f32.mrf.mxu0
        %v3602 = vadd.f32 %v3573, %v3601
        %v3603 = vpop.f32.mrf.mxu0
        %v3604 = vadd.f32 %v3575, %v3603
        %3605 = vmatmul.bf16.gmra.mxu0 %v3454
        %v3606 = vpop.f32.mrf.mxu0
        %v3607 = vadd.f32 %v3578, %v3606
        %v3608 = vpop.f32.mrf.mxu0
        %v3609 = vadd.f32 %v3580, %v3608
        %3610 = vdwg.mxu0
        %3611 = vmatpush.bf16.msra.mxu0 %v3544
        %3612 = vmatpush.bf16.msra.mxu0 %v3543
        %3613 = vmatpush.bf16.msra.mxu0 %v3542
        %3614 = vmatpush.bf16.msra.mxu0 %v3541
        %3615 = vmatpush.bf16.msra.mxu0 %v3540
        %3616 = vmatpush.bf16.msra.mxu0 %v3539
        %3617 = vmatpush.bf16.msra.mxu0 %v3538
        %3618 = vmatpush.bf16.msra.mxu0 %v3537
        %3619 = vmatmul.bf16.gmra.mxu0 %v3443
        %v3620 = vpop.f32.mrf.mxu0
        %v3621 = vadd.f32 %v3592, %v3620
        %v3622 = vpop.f32.mrf.mxu0
        %v3623 = vadd.f32 %v3594, %v3622
        %3624 = vmatmul.bf16.gmra.mxu0 %v3447
        %v3625 = vpop.f32.mrf.mxu0
        %v3626 = vadd.f32 %v3597, %v3625
        %v3627 = vpop.f32.mrf.mxu0
        %v3628 = vadd.f32 %v3599, %v3627
        %3629 = vmatmul.bf16.gmra.mxu0 %v3451
        %v3630 = vpop.f32.mrf.mxu0
        %v3631 = vadd.f32 %v3602, %v3630
        %v3632 = vpop.f32.mrf.mxu0
        %v3633 = vadd.f32 %v3604, %v3632
        %3634 = vmatmul.bf16.gmra.mxu0 %v3455
        %v3635 = vpop.f32.mrf.mxu0
        %v3636 = vadd.f32 %v3607, %v3635
        %v3637 = vpop.f32.mrf.mxu0
        %v3638 = vadd.f32 %v3609, %v3637
        %3639 = vdwg.mxu0
        %3640 = vmatpush.bf16.msra.mxu0 %v3552
        %3641 = vmatpush.bf16.msra.mxu0 %v3551
        %3642 = vmatpush.bf16.msra.mxu0 %v3550
        %3643 = vmatpush.bf16.msra.mxu0 %v3549
        %3644 = vmatpush.bf16.msra.mxu0 %v3548
        %3645 = vmatpush.bf16.msra.mxu0 %v3547
        %3646 = vmatpush.bf16.msra.mxu0 %v3546
        %3647 = vmatpush.bf16.msra.mxu0 %v3545
        %3648 = vmatmul.bf16.gmra.mxu0 %v3444
        %v3649 = vpop.f32.mrf.mxu0
        %v3650 = vadd.f32 %v3621, %v3649
        %v3651 = vpop.f32.mrf.mxu0
        %v3652 = vadd.f32 %v3623, %v3651
        %3653 = vmatmul.bf16.gmra.mxu0 %v3448
        %v3654 = vpop.f32.mrf.mxu0
        %v3655 = vadd.f32 %v3626, %v3654
        %v3656 = vpop.f32.mrf.mxu0
        %v3657 = vadd.f32 %v3628, %v3656
        %3658 = vmatmul.bf16.gmra.mxu0 %v3452
        %v3659 = vpop.f32.mrf.mxu0
        %v3660 = vadd.f32 %v3631, %v3659
        %v3661 = vpop.f32.mrf.mxu0
        %v3662 = vadd.f32 %v3633, %v3661
        %3663 = vmatmul.bf16.gmra.mxu0 %v3456
        %v3664 = vpop.f32.mrf.mxu0
        %v3665 = vadd.f32 %v3636, %v3664
        %v3666 = vpop.f32.mrf.mxu0
        %v3667 = vadd.f32 %v3638, %v3666
        %3668 = vdwg.mxu0
        %v3669 = vmul.f32 %v3650, 0.015625
        %v3670 = vmul.f32 %v3652, 0.015625
        %v3671 = vmul.f32 %v3655, 0.015625
        %v3672 = vmul.f32 %v3657, 0.015625
        %v3673 = vmul.f32 %v3660, 0.015625
        %v3674 = vmul.f32 %v3662, 0.015625
        %v3675 = vmul.f32 %v3665, 0.015625
        %v3676 = vmul.f32 %v3667, 0.015625
        %v3677 = vld [vmem:[%s4] sm:$0xff]
        %v3678 = vld [vmem:[%s4 + $0x8] sm:$0xff]
        %v3679 = vpack.c.bf16 %v3678, %v3677
        %v3680 = vpack.c.bf16 %v3670, %v3669
        %v3681 = vpack.c.bf16 %v3672, %v3671
        %v3682 = vpack.c.bf16 %v3674, %v3673
        %v3683 = vpack.c.bf16 %v3676, %v3675
        %v3684 = vld [vmem:[%s10] sm:$0xff]
        %v3685 = vld [vmem:[%s10 + $0x8] sm:$0xff]
        %3687 = vset.pattern.permute.xlu0 0
        %3688 = vperm.xlu0 %3687, %v3684
        %v3689 = vpop.permute.xlu0 %3688
        %3692 = vset.pattern.permute.xlu0 0
        %3693 = vperm.xlu0 %3692, %v3685
        %v3694 = vpop.permute.xlu0 %3693
        %v3697 = vsel %vm631, %v3679, 0
        %3699 = vmatpush.bf16.msra.mxu0 0
        %3700 = vmatpush.bf16.msra.mxu0 0
        %3701 = vmatpush.bf16.msra.mxu0 0
        %3702 = vmatpush.bf16.msra.mxu0 0
        %3703 = vmatpush.bf16.msra.mxu0 %v3683
        %3704 = vmatpush.bf16.msra.mxu0 %v3682
        %3705 = vmatpush.bf16.msra.mxu0 %v3681
        %3706 = vmatpush.bf16.msra.mxu0 %v3680
        %3707 = vmatmul.bf16.gmra.mxu0 %v3697
        %v3708 = vpop.f32.mrf.mxu0
        %v3709 = vadd.f32 %v3689, %v3708
        %v3710 = vpop.f32.mrf.mxu0
        %v3711 = vadd.f32 %v3694, %v3710
        %3712 = vdwg.mxu0
        %v3713 = vmax.f32 %v3709, 0.0
        %v3714 = vmax.f32 %v3711, 0.0
        %v3715 = vld [vmem:[%s5] sm:$0xff]
        %v3716 = vld [vmem:[%s5 + $0x8] sm:$0xff]
        %v3717 = vld [vmem:[%s5 + $0x10] sm:$0xff]
        %v3718 = vld [vmem:[%s5 + $0x18] sm:$0xff]
        %v3719 = vld [vmem:[%s5 + $0x20] sm:$0xff]
        %v3720 = vld [vmem:[%s5 + $0x28] sm:$0xff]
        %v3721 = vld [vmem:[%s5 + $0x30] sm:$0xff]
        %v3722 = vld [vmem:[%s5 + $0x38] sm:$0xff]
        %v3723 = vpack.c.bf16 %v3716, %v3715
        %v3724 = vpack.c.bf16 %v3718, %v3717
        %v3725 = vpack.c.bf16 %v3720, %v3719
        %v3726 = vpack.c.bf16 %v3722, %v3721
        %v3727 = vpack.c.bf16 %v3714, %v3713
        %3728 = vset.pattern.permute.xlu0 4
        %3729 = vperm.xlu0 %3728, %v470
        %v3730 = vpop.permute.xlu0 %3729
        %3732 = vset.pattern.permute.xlu0 4
        %3733 = vperm.xlu0 %3732, %v471
        %v3734 = vpop.permute.xlu0 %3733
        %3736 = vset.pattern.permute.xlu0 4
        %3737 = vperm.xlu0 %3736, %v472
        %v3738 = vpop.permute.xlu0 %3737
        %3740 = vset.pattern.permute.xlu0 4
        %3741 = vperm.xlu0 %3740, %v473
        %v3742 = vpop.permute.xlu0 %3741
        %3744 = vset.pattern.permute.xlu0 4
        %3745 = vperm.xlu0 %3744, %v474
        %v3746 = vpop.permute.xlu0 %3745
        %3748 = vset.pattern.permute.xlu0 4
        %3749 = vperm.xlu0 %3748, %v475
        %v3750 = vpop.permute.xlu0 %3749
        %3752 = vset.pattern.permute.xlu0 4
        %3753 = vperm.xlu0 %3752, %v476
        %v3754 = vpop.permute.xlu0 %3753
        %3756 = vset.pattern.permute.xlu0 4
        %3757 = vperm.xlu0 %3756, %v477
        %v3758 = vpop.permute.xlu0 %3757
        %vm3760 = vcmask 130048
        %v3762 = vsel %vm3760, %v3723, 0
        %v3765 = vsel %vm3760, %v3724, 0
        %v3768 = vsel %vm3760, %v3725, 0
        %v3771 = vsel %vm3760, %v3726, 0
        %3773 = vmatpush.bf16.msra.mxu0 0
        %3774 = vmatpush.bf16.msra.mxu0 0
        %3775 = vmatpush.bf16.msra.mxu0 0
        %3776 = vmatpush.bf16.msra.mxu0 0
        %3777 = vmatpush.bf16.msra.mxu0 0
        %3778 = vmatpush.bf16.msra.mxu0 0
        %3779 = vmatpush.bf16.msra.mxu0 0
        %3780 = vmatpush.bf16.msra.mxu0 %v3727
        %3781 = vmatmul.bf16.gmra.mxu0 %v3762
        %v3782 = vpop.f32.mrf.mxu0
        %v3783 = vadd.f32 %v3730, %v3782
        %v3784 = vpop.f32.mrf.mxu0
        %v3785 = vadd.f32 %v3734, %v3784
        %3786 = vmatmul.bf16.gmra.mxu0 %v3765
        %v3787 = vpop.f32.mrf.mxu0
        %v3788 = vadd.f32 %v3738, %v3787
        %v3789 = vpop.f32.mrf.mxu0
        %v3790 = vadd.f32 %v3742, %v3789
        %3791 = vmatmul.bf16.gmra.mxu0 %v3768
        %v3792 = vpop.f32.mrf.mxu0
        %v3793 = vadd.f32 %v3746, %v3792
        %v3794 = vpop.f32.mrf.mxu0
        %v3795 = vadd.f32 %v3750, %v3794
        %3796 = vmatmul.bf16.gmra.mxu0 %v3771
        %v3797 = vpop.f32.mrf.mxu0
        %v3798 = vadd.f32 %v3754, %v3797
        %v3799 = vpop.f32.mrf.mxu0
        %v3800 = vadd.f32 %v3758, %v3799
        %3801 = vdwg.mxu0
        %v3802 = vxor.u32 %v3783, 2147483648
        %v3803 = vxor.u32 %v3785, 2147483648
        %v3804 = vxor.u32 %v3788, 2147483648
        %v3805 = vxor.u32 %v3790, 2147483648
        %v3806 = vxor.u32 %v3793, 2147483648
        %v3807 = vxor.u32 %v3795, 2147483648
        %v3808 = vxor.u32 %v3798, 2147483648
        %v3809 = vxor.u32 %v3800, 2147483648
        %v3810 = vmul.f32 %v3802, 1.442695
        %v3811 = vpow.pop %v3810
        %v3812 = vmul.f32 %v3803, 1.442695
        %v3813 = vpow.pop %v3812
        %v3814 = vmul.f32 %v3804, 1.442695
        %v3815 = vpow.pop %v3814
        %v3816 = vmul.f32 %v3805, 1.442695
        %v3817 = vpow.pop %v3816
        %v3818 = vmul.f32 %v3806, 1.442695
        %v3819 = vpow.pop %v3818
        %v3820 = vmul.f32 %v3807, 1.442695
        %v3821 = vpow.pop %v3820
        %v3822 = vmul.f32 %v3808, 1.442695
        %v3823 = vpow.pop %v3822
        %v3824 = vmul.f32 %v3809, 1.442695
        %v3825 = vpow.pop %v3824
        %v3826 = vadd.f32 %v3811, 1.0
        %v3827 = vadd.f32 %v3813, 1.0
        %v3828 = vadd.f32 %v3815, 1.0
        %v3829 = vadd.f32 %v3817, 1.0
        %v3830 = vadd.f32 %v3819, 1.0
        %v3831 = vadd.f32 %v3821, 1.0
        %v3832 = vadd.f32 %v3823, 1.0
        %v3833 = vadd.f32 %v3825, 1.0
        %v3834 = vrcp.pop %v3826
        %v3835 = vmul.f32 %v3826, %v3834
        %v3836 = vsub.f32 1.0, %v3835
        %v3837 = vmul.f32 %v3834, %v3836
        %v3838 = vadd.f32 %v3834, %v3837
        %vm3839 = vweird.f32 %v3826
        %vm3840 = vweird.f32 %v3834
        %vm3841 = vmor %vm3839, %vm3840
        %v3842 = vsel %vm3841, %v3834, %v3838
        %v3843 = vand.u32 2147483647, %v3826
        %vm3844 = vcmp.eq.f32.partialorder %v3843, 8.507059e+37
        %v3845 = vand.u32 %v3826, 2147483648
        %v3846 = vor.u32 1.1754944e-38, %v3845
        %v3847 = vsel %vm3844, %v3846, %v3842
        %v3848 = vmul.f32 1.0, %v3847
        %v3849 = vrcp.pop %v3827
        %v3850 = vmul.f32 %v3827, %v3849
        %v3851 = vsub.f32 1.0, %v3850
        %v3852 = vmul.f32 %v3849, %v3851
        %v3853 = vadd.f32 %v3849, %v3852
        %vm3854 = vweird.f32 %v3827
        %vm3855 = vweird.f32 %v3849
        %vm3856 = vmor %vm3854, %vm3855
        %v3857 = vsel %vm3856, %v3849, %v3853
        %v3858 = vand.u32 2147483647, %v3827
        %vm3859 = vcmp.eq.f32.partialorder %v3858, 8.507059e+37
        %v3860 = vand.u32 %v3827, 2147483648
        %v3861 = vor.u32 1.1754944e-38, %v3860
        %v3862 = vsel %vm3859, %v3861, %v3857
        %v3863 = vmul.f32 1.0, %v3862
        %v3864 = vrcp.pop %v3828
        %v3865 = vmul.f32 %v3828, %v3864
        %v3866 = vsub.f32 1.0, %v3865
        %v3867 = vmul.f32 %v3864, %v3866
        %v3868 = vadd.f32 %v3864, %v3867
        %vm3869 = vweird.f32 %v3828
        %vm3870 = vweird.f32 %v3864
        %vm3871 = vmor %vm3869, %vm3870
        %v3872 = vsel %vm3871, %v3864, %v3868
        %v3873 = vand.u32 2147483647, %v3828
        %vm3874 = vcmp.eq.f32.partialorder %v3873, 8.507059e+37
        %v3875 = vand.u32 %v3828, 2147483648
        %v3876 = vor.u32 1.1754944e-38, %v3875
        %v3877 = vsel %vm3874, %v3876, %v3872
        %v3878 = vmul.f32 1.0, %v3877
        %v3879 = vrcp.pop %v3829
        %v3880 = vmul.f32 %v3829, %v3879
        %v3881 = vsub.f32 1.0, %v3880
        %v3882 = vmul.f32 %v3879, %v3881
        %v3883 = vadd.f32 %v3879, %v3882
        %vm3884 = vweird.f32 %v3829
        %vm3885 = vweird.f32 %v3879
        %vm3886 = vmor %vm3884, %vm3885
        %v3887 = vsel %vm3886, %v3879, %v3883
        %v3888 = vand.u32 2147483647, %v3829
        %vm3889 = vcmp.eq.f32.partialorder %v3888, 8.507059e+37
        %v3890 = vand.u32 %v3829, 2147483648
        %v3891 = vor.u32 1.1754944e-38, %v3890
        %v3892 = vsel %vm3889, %v3891, %v3887
        %v3893 = vmul.f32 1.0, %v3892
        %v3894 = vrcp.pop %v3830
        %v3895 = vmul.f32 %v3830, %v3894
        %v3896 = vsub.f32 1.0, %v3895
        %v3897 = vmul.f32 %v3894, %v3896
        %v3898 = vadd.f32 %v3894, %v3897
        %vm3899 = vweird.f32 %v3830
        %vm3900 = vweird.f32 %v3894
        %vm3901 = vmor %vm3899, %vm3900
        %v3902 = vsel %vm3901, %v3894, %v3898
        %v3903 = vand.u32 2147483647, %v3830
        %vm3904 = vcmp.eq.f32.partialorder %v3903, 8.507059e+37
        %v3905 = vand.u32 %v3830, 2147483648
        %v3906 = vor.u32 1.1754944e-38, %v3905
        %v3907 = vsel %vm3904, %v3906, %v3902
        %v3908 = vmul.f32 1.0, %v3907
        %v3909 = vrcp.pop %v3831
        %v3910 = vmul.f32 %v3831, %v3909
        %v3911 = vsub.f32 1.0, %v3910
        %v3912 = vmul.f32 %v3909, %v3911
        %v3913 = vadd.f32 %v3909, %v3912
        %vm3914 = vweird.f32 %v3831
        %vm3915 = vweird.f32 %v3909
        %vm3916 = vmor %vm3914, %vm3915
        %v3917 = vsel %vm3916, %v3909, %v3913
        %v3918 = vand.u32 2147483647, %v3831
        %vm3919 = vcmp.eq.f32.partialorder %v3918, 8.507059e+37
        %v3920 = vand.u32 %v3831, 2147483648
        %v3921 = vor.u32 1.1754944e-38, %v3920
        %v3922 = vsel %vm3919, %v3921, %v3917
        %v3923 = vmul.f32 1.0, %v3922
        %v3924 = vrcp.pop %v3832
        %v3925 = vmul.f32 %v3832, %v3924
        %v3926 = vsub.f32 1.0, %v3925
        %v3927 = vmul.f32 %v3924, %v3926
        %v3928 = vadd.f32 %v3924, %v3927
        %vm3929 = vweird.f32 %v3832
        %vm3930 = vweird.f32 %v3924
        %vm3931 = vmor %vm3929, %vm3930
        %v3932 = vsel %vm3931, %v3924, %v3928
        %v3933 = vand.u32 2147483647, %v3832
        %vm3934 = vcmp.eq.f32.partialorder %v3933, 8.507059e+37
        %v3935 = vand.u32 %v3832, 2147483648
        %v3936 = vor.u32 1.1754944e-38, %v3935
        %v3937 = vsel %vm3934, %v3936, %v3932
        %v3938 = vmul.f32 1.0, %v3937
        %v3939 = vrcp.pop %v3833
        %v3940 = vmul.f32 %v3833, %v3939
        %v3941 = vsub.f32 1.0, %v3940
        %v3942 = vmul.f32 %v3939, %v3941
        %v3943 = vadd.f32 %v3939, %v3942
        %vm3944 = vweird.f32 %v3833
        %vm3945 = vweird.f32 %v3939
        %vm3946 = vmor %vm3944, %vm3945
        %v3947 = vsel %vm3946, %v3939, %v3943
        %v3948 = vand.u32 2147483647, %v3833
        %vm3949 = vcmp.eq.f32.partialorder %v3948, 8.507059e+37
        %v3950 = vand.u32 %v3833, 2147483648
        %v3951 = vor.u32 1.1754944e-38, %v3950
        %v3952 = vsel %vm3949, %v3951, %v3947
        %v3953 = vmul.f32 1.0, %v3952
        %v3954 = vpack.c.bf16 %v3863, %v3848
        %v3955 = vpack.c.bf16 %v3893, %v3878
        %v3956 = vpack.c.bf16 %v3923, %v3908
        %v3957 = vpack.c.bf16 %v3953, %v3938
        %v3958 = vld [vmem:[%s7] sm:$0xff]
        %v3959 = vld [vmem:[%s7 + $0x8] sm:$0xff]
        %v3960 = vld [vmem:[%s7 + $0x10] sm:$0xff]
        %v3961 = vld [vmem:[%s7 + $0x18] sm:$0xff]
        %v3962 = vpack.c.bf16 %v3958, %v3958
        %v3963 = vpack.c.bf16 %v3959, %v3959
        %v3964 = vpack.c.bf16 %v3960, %v3960
        %v3965 = vpack.c.bf16 %v3961, %v3961
        %v3967 = vsel %vm1068, %v3954, 0
        %v3970 = vsel %vm1068, %v3955, 0
        %v3973 = vsel %vm1068, %v3956, 0
        %v3976 = vsel %vm1068, %v3957, 0
        %v3979 = vsel %vm975, %v3962, 0
        %v3982 = vsel %vm975, %v3963, 0
        %v3985 = vsel %vm975, %v3964, 0
        %v3988 = vsel %vm975, %v3965, 0
        %3990 = vmatpush.bf16.msra.mxu0 0
        %3991 = vmatpush.bf16.msra.mxu0 0
        %3992 = vmatpush.bf16.msra.mxu0 0
        %3993 = vmatpush.bf16.msra.mxu0 0
        %3994 = vmatpush.bf16.msra.mxu0 0
        %3995 = vmatpush.bf16.msra.mxu0 0
        %3996 = vmatpush.bf16.msra.mxu0 0
        %3997 = vmatpush.bf16.msra.mxu0 %v3979
        %3998 = vmatmul.bf16.gmra.mxu0 %v3967
        %v3999 = vpop.f32.mrf.mxu0
        %v4000 = vadd.f32 0.0, %v3999
        %v4001 = vpop.f32.mrf.mxu0
        %v4002 = vadd.f32 0.0, %v4001
        %4003 = vmatmul.bf16.gmra.mxu0 %v3970
        %v4004 = vpop.f32.mrf.mxu0
        %v4005 = vadd.f32 0.0, %v4004
        %v4006 = vpop.f32.mrf.mxu0
        %v4007 = vadd.f32 0.0, %v4006
        %4008 = vmatmul.bf16.gmra.mxu0 %v3973
        %v4009 = vpop.f32.mrf.mxu0
        %v4010 = vadd.f32 0.0, %v4009
        %v4011 = vpop.f32.mrf.mxu0
        %v4012 = vadd.f32 0.0, %v4011
        %4013 = vmatmul.bf16.gmra.mxu0 %v3976
        %v4014 = vpop.f32.mrf.mxu0
        %v4015 = vadd.f32 0.0, %v4014
        %v4016 = vpop.f32.mrf.mxu0
        %v4017 = vadd.f32 0.0, %v4016
        %4018 = vdwg.mxu0
        %4019 = vmatpush.bf16.msra.mxu0 0
        %4020 = vmatpush.bf16.msra.mxu0 0
        %4021 = vmatpush.bf16.msra.mxu0 0
        %4022 = vmatpush.bf16.msra.mxu0 0
        %4023 = vmatpush.bf16.msra.mxu0 0
        %4024 = vmatpush.bf16.msra.mxu0 0
        %4025 = vmatpush.bf16.msra.mxu0 0
        %4026 = vmatpush.bf16.msra.mxu0 %v3982
        %4027 = vmatmul.bf16.gmra.mxu0 %v3967
        %v4028 = vpop.f32.mrf.mxu0
        %v4029 = vadd.f32 0.0, %v4028
        %v4030 = vpop.f32.mrf.mxu0
        %v4031 = vadd.f32 0.0, %v4030
        %4032 = vmatmul.bf16.gmra.mxu0 %v3970
        %v4033 = vpop.f32.mrf.mxu0
        %v4034 = vadd.f32 0.0, %v4033
        %v4035 = vpop.f32.mrf.mxu0
        %v4036 = vadd.f32 0.0, %v4035
        %4037 = vmatmul.bf16.gmra.mxu0 %v3973
        %v4038 = vpop.f32.mrf.mxu0
        %v4039 = vadd.f32 0.0, %v4038
        %v4040 = vpop.f32.mrf.mxu0
        %v4041 = vadd.f32 0.0, %v4040
        %4042 = vmatmul.bf16.gmra.mxu0 %v3976
        %v4043 = vpop.f32.mrf.mxu0
        %v4044 = vadd.f32 0.0, %v4043
        %v4045 = vpop.f32.mrf.mxu0
        %v4046 = vadd.f32 0.0, %v4045
        %4047 = vdwg.mxu0
        %4048 = vmatpush.bf16.msra.mxu0 0
        %4049 = vmatpush.bf16.msra.mxu0 0
        %4050 = vmatpush.bf16.msra.mxu0 0
        %4051 = vmatpush.bf16.msra.mxu0 0
        %4052 = vmatpush.bf16.msra.mxu0 0
        %4053 = vmatpush.bf16.msra.mxu0 0
        %4054 = vmatpush.bf16.msra.mxu0 0
        %4055 = vmatpush.bf16.msra.mxu0 %v3985
        %4056 = vmatmul.bf16.gmra.mxu0 %v3967
        %v4057 = vpop.f32.mrf.mxu0
        %v4058 = vadd.f32 0.0, %v4057
        %v4059 = vpop.f32.mrf.mxu0
        %v4060 = vadd.f32 0.0, %v4059
        %4061 = vmatmul.bf16.gmra.mxu0 %v3970
        %v4062 = vpop.f32.mrf.mxu0
        %v4063 = vadd.f32 0.0, %v4062
        %v4064 = vpop.f32.mrf.mxu0
        %v4065 = vadd.f32 0.0, %v4064
        %4066 = vmatmul.bf16.gmra.mxu0 %v3973
        %v4067 = vpop.f32.mrf.mxu0
        %v4068 = vadd.f32 0.0, %v4067
        %v4069 = vpop.f32.mrf.mxu0
        %v4070 = vadd.f32 0.0, %v4069
        %4071 = vmatmul.bf16.gmra.mxu0 %v3976
        %v4072 = vpop.f32.mrf.mxu0
        %v4073 = vadd.f32 0.0, %v4072
        %v4074 = vpop.f32.mrf.mxu0
        %v4075 = vadd.f32 0.0, %v4074
        %4076 = vdwg.mxu0
        %4077 = vmatpush.bf16.msra.mxu0 0
        %4078 = vmatpush.bf16.msra.mxu0 0
        %4079 = vmatpush.bf16.msra.mxu0 0
        %4080 = vmatpush.bf16.msra.mxu0 0
        %4081 = vmatpush.bf16.msra.mxu0 0
        %4082 = vmatpush.bf16.msra.mxu0 0
        %4083 = vmatpush.bf16.msra.mxu0 0
        %4084 = vmatpush.bf16.msra.mxu0 %v3988
        %4085 = vmatmul.bf16.gmra.mxu0 %v3967
        %v4086 = vpop.f32.mrf.mxu0
        %v4087 = vadd.f32 0.0, %v4086
        %v4088 = vpop.f32.mrf.mxu0
        %v4089 = vadd.f32 0.0, %v4088
        %4090 = vmatmul.bf16.gmra.mxu0 %v3970
        %v4091 = vpop.f32.mrf.mxu0
        %v4092 = vadd.f32 0.0, %v4091
        %v4093 = vpop.f32.mrf.mxu0
        %v4094 = vadd.f32 0.0, %v4093
        %4095 = vmatmul.bf16.gmra.mxu0 %v3973
        %v4096 = vpop.f32.mrf.mxu0
        %v4097 = vadd.f32 0.0, %v4096
        %v4098 = vpop.f32.mrf.mxu0
        %v4099 = vadd.f32 0.0, %v4098
        %4100 = vmatmul.bf16.gmra.mxu0 %v3976
        %v4101 = vpop.f32.mrf.mxu0
        %v4102 = vadd.f32 0.0, %v4101
        %v4103 = vpop.f32.mrf.mxu0
        %v4104 = vadd.f32 0.0, %v4103
        %4105 = vdwg.mxu0
        %v4106 = vmul.f32 %v3409, %v4000
        %v4107 = vmul.f32 %v3410, %v4029
        %v4108 = vmul.f32 %v3411, %v4058
        %v4109 = vmul.f32 %v3412, %v4087
        %v4110 = vmul.f32 %v3413, %v4002
        %v4111 = vmul.f32 %v3414, %v4031
        %v4112 = vmul.f32 %v3415, %v4060
        %v4113 = vmul.f32 %v3416, %v4089
        %v4114 = vmul.f32 %v3417, %v4005
        %v4115 = vmul.f32 %v3418, %v4034
        %v4116 = vmul.f32 %v3419, %v4063
        %v4117 = vmul.f32 %v3420, %v4092
        %v4118 = vmul.f32 %v3421, %v4007
        %v4119 = vmul.f32 %v3422, %v4036
        %v4120 = vmul.f32 %v3423, %v4065
        %v4121 = vmul.f32 %v3424, %v4094
        %v4122 = vmul.f32 %v3425, %v4010
        %v4123 = vmul.f32 %v3426, %v4039
        %v4124 = vmul.f32 %v3427, %v4068
        %v4125 = vmul.f32 %v3428, %v4097
        %v4126 = vmul.f32 %v3429, %v4012
        %v4127 = vmul.f32 %v3430, %v4041
        %v4128 = vmul.f32 %v3431, %v4070
        %v4129 = vmul.f32 %v3432, %v4099
        %v4130 = vmul.f32 %v3433, %v4015
        %v4131 = vmul.f32 %v3434, %v4044
        %v4132 = vmul.f32 %v3435, %v4073
        %v4133 = vmul.f32 %v3436, %v4102
        %v4134 = vmul.f32 %v3437, %v4017
        %v4135 = vmul.f32 %v3438, %v4046
        %v4136 = vmul.f32 %v3439, %v4075
        %v4137 = vmul.f32 %v3440, %v4104
        %v4138 = vadd.f32 %v531, %v4106
        %v4139 = vadd.f32 %v532, %v4107
        %v4140 = vadd.f32 %v533, %v4108
        %v4141 = vadd.f32 %v534, %v4109
        %v4142 = vadd.f32 %v535, %v4110
        %v4143 = vadd.f32 %v536, %v4111
        %v4144 = vadd.f32 %v537, %v4112
        %v4145 = vadd.f32 %v538, %v4113
        %v4146 = vadd.f32 %v539, %v4114
        %v4147 = vadd.f32 %v540, %v4115
        %v4148 = vadd.f32 %v541, %v4116
        %v4149 = vadd.f32 %v542, %v4117
        %v4150 = vadd.f32 %v543, %v4118
        %v4151 = vadd.f32 %v544, %v4119
        %v4152 = vadd.f32 %v545, %v4120
        %v4153 = vadd.f32 %v546, %v4121
        %v4154 = vadd.f32 %v547, %v4122
        %v4155 = vadd.f32 %v548, %v4123
        %v4156 = vadd.f32 %v549, %v4124
        %v4157 = vadd.f32 %v550, %v4125
        %v4158 = vadd.f32 %v551, %v4126
        %v4159 = vadd.f32 %v552, %v4127
        %v4160 = vadd.f32 %v553, %v4128
        %v4161 = vadd.f32 %v554, %v4129
        %v4162 = vadd.f32 %v555, %v4130
        %v4163 = vadd.f32 %v556, %v4131
        %v4164 = vadd.f32 %v557, %v4132
        %v4165 = vadd.f32 %v558, %v4133
        %v4166 = vadd.f32 %v559, %v4134
        %v4167 = vadd.f32 %v560, %v4135
        %v4168 = vadd.f32 %v561, %v4136
        %v4169 = vadd.f32 %v562, %v4137
        %4170 = vst [vmem:[%s466] sm:$0xff] %v4138
        %4171 = vst [vmem:[%s466 + $0x8] sm:$0xff] %v4139
        %4172 = vst [vmem:[%s466 + $0x10] sm:$0xff] %v4140
        %4173 = vst [vmem:[%s466 + $0x18] sm:$0xff] %v4141
        %4174 = vst [vmem:[%s466 + $0x20] sm:$0xff] %v4142
        %4175 = vst [vmem:[%s466 + $0x28] sm:$0xff] %v4143
        %4176 = vst [vmem:[%s466 + $0x30] sm:$0xff] %v4144
        %4177 = vst [vmem:[%s466 + $0x38] sm:$0xff] %v4145
        %4178 = vst [vmem:[%s466 + $0x40] sm:$0xff] %v4146
        %4179 = vst [vmem:[%s466 + $0x48] sm:$0xff] %v4147
        %4180 = vst [vmem:[%s466 + $0x50] sm:$0xff] %v4148
        %4181 = vst [vmem:[%s466 + $0x58] sm:$0xff] %v4149
        %4182 = vst [vmem:[%s466 + $0x60] sm:$0xff] %v4150
        %4183 = vst [vmem:[%s466 + $0x68] sm:$0xff] %v4151
        %4184 = vst [vmem:[%s466 + $0x70] sm:$0xff] %v4152
        %4185 = vst [vmem:[%s466 + $0x78] sm:$0xff] %v4153
        %4186 = vst [vmem:[%s466 + $0x80] sm:$0xff] %v4154
        %4187 = vst [vmem:[%s466 + $0x88] sm:$0xff] %v4155
        %4188 = vst [vmem:[%s466 + $0x90] sm:$0xff] %v4156
        %4189 = vst [vmem:[%s466 + $0x98] sm:$0xff] %v4157
        %4190 = vst [vmem:[%s466 + $0xa0] sm:$0xff] %v4158
        %4191 = vst [vmem:[%s466 + $0xa8] sm:$0xff] %v4159
        %4192 = vst [vmem:[%s466 + $0xb0] sm:$0xff] %v4160
        %4193 = vst [vmem:[%s466 + $0xb8] sm:$0xff] %v4161
        %4194 = vst [vmem:[%s466 + $0xc0] sm:$0xff] %v4162
        %4195 = vst [vmem:[%s466 + $0xc8] sm:$0xff] %v4163
        %4196 = vst [vmem:[%s466 + $0xd0] sm:$0xff] %v4164
        %4197 = vst [vmem:[%s466 + $0xd8] sm:$0xff] %v4165
        %4198 = vst [vmem:[%s466 + $0xe0] sm:$0xff] %v4166
        %4199 = vst [vmem:[%s466 + $0xe8] sm:$0xff] %v4167
        %4200 = vst [vmem:[%s466 + $0xf0] sm:$0xff] %v4168
        %4201 = vst [vmem:[%s466 + $0xf8] sm:$0xff] %v4169
        %s4202 = sand.u32 %s269, 1
        %s4203 = scalar_lea.sflag [#allocation4], %s4202
        %s4204 = sand.u32 %s269, 1
        %s4205 = smul.addr %s4204, 256
        %s4206 = scalar_lea.vmem [#allocation3], %s4205
        // Predicated region
        $region88: #{tpu_custom_call.1} parent=82 // pred_check
          %p4207 = pneg %p279
        $region89: #{tpu_custom_call.1} parent=82 // pred_check_branch
          %4209 = sbr.rel (%p4207) target = $region91
        $region90: #{tpu_custom_call.1} parent=82 // pred_region
          %s4210 = smul.u32 4, %s25
          %4212 = vsyncadd %s4203, 0
          %s4213 = smul.addr %s4210, 8
          %s4214 = scalar_lea.hbm %s11, %s4213
          %s4215 = sshll.u32 %s4206, 4
          %s4216 = int_to_ptr.vmem [resolvable:$true] %s4215
          %s4217 = sshll.u32 %s4214, 4
          %s4218 = int_to_ptr.hbm [resolvable:$true] %s4217
          %4223 = dma.vmem_to_hbm [thread:$0]  %s4216, 4096, %s4218, %s4203, 512, 1024, 32
        $region91: #{tpu_custom_call.1} parent=82 // pred_fallthru
          _
      $region83: #{tpu_custom_call.1} parent=5 // pred_fallthru
        _
      %p4224 = scmp.le.s32.totalorder 2, %s20
      // Predicated region
      $region92: #{tpu_custom_call.1} parent=5 // pred_check
        %p4225 = pneg %p4224
      $region93: #{tpu_custom_call.1} parent=5 // pred_check_branch
        %4227 = sbr.rel (%p4225) target = $region95
      $region94: #{tpu_custom_call.1} parent=5 // pred_region
        %s4228 = ssub.s32 %s20, 2
        // Predicated region
        $region96: #{tpu_custom_call.1} parent=94 // pred_check
          %p4229 = pneg %p285
        $region97: #{tpu_custom_call.1} parent=94 // pred_check_branch
          %4231 = sbr.rel (%p4229) target = $region99
        $region98: #{tpu_custom_call.1} parent=94 // pred_region
          %s4232 = sand.u32 %s270, 1
          %s4233 = scalar_lea.sflag [#allocation4], %s4232
          %s4234 = sand.u32 %s270, 1
          %s4235 = smul.addr %s4234, 256
          %s4236 = scalar_lea.vmem [#allocation3], %s4235
          %4238 = dma.done %s4233, 4096
        $region99: #{tpu_custom_call.1} parent=94 // pred_fallthru
          _
      $region95: #{tpu_custom_call.1} parent=5 // pred_fallthru
        _
    $region6: #{tpu_custom_call.1} parent=1 // loop_footer
      %s24 = sadd.s32 1, %s20
    $region7: #{tpu_custom_call.1} parent=1 // loop_footer_branch
      %19 = sbr.rel target = $region3
    $region8: #{tpu_custom_call.1} parent=1 // loop_exit
      _
    %4239 = vsyncpa [#allocation4], 1
    %s4240 = scalar_lea.sflag [#allocation4], 1
    %4241 = vsyncpa %s4240, 1

</llo_original>
